<compile_context>
chip_gen: v7x
topology: tpu7x:2x2x1
jax: 0.10.0
libtpu: 0.0.40
codegen_flags: <defaults>
</compile_context>

<pallas_src>
import jax
import jax.numpy as jnp
from jax import lax
from jax.experimental import pallas as pl
from jax.experimental.pallas import tpu as pltpu

NODE_DIM = 32
COORD_DIM = 3
EDGE_DIM = 4
NUM_LAYERS = 4


def _silu(v):
    # SiLU = v * sigmoid(v); reciprocal goes to the EUP slot (approx vrcp),
    # keeping VALU slots free.  ~1e-3 relative deviation vs exact sigmoid.
    return v * pl.reciprocal(1.0 + jnp.exp(-v), approx=True)


# ----------------------------- fused Pallas kernel --------------------------

def _egnn_fused_kernel(
        x_ref, pos_ref, tse_ref, invc_ref, noise_ref,
        emb_w_ref, emb_b_ref,
        w1x_ref, w1e_ref, w1d_ref, b1_ref,
        w2_ref, b2_ref, wc1_ref, bc1_ref, wc2_ref, bc2_ref,
        out_w1_ref, out_b1_ref, out_w2_ref, out_b2_ref,
        o_ref):
    x = x_ref[0]                       # [N, D]   f32
    pos = pos_ref[0]                   # [N, C]   f32
    tse = tse_ref[0]                   # [E, 2N+F] bf16 = [T | S | eattr]
    invc = invc_ref[0]                 # [N, 1]   f32 (1 / max(in_degree, 1))

    n = x.shape[0]
    # Layer-invariant bf16 slices (hoisted out of the layer loop).
    T = tse[:, :n]                     # [E, N]  one-hot of target i
    S = tse[:, n:2 * n]                # [E, N]  one-hot of source j
    Dm = S - T                         # [E, N]  values in {-1, 0, 1}, exact

    # --- embedding -----------------------------------------------------------
    h = (jnp.dot(x, emb_w_ref[...],
                 preferred_element_type=jnp.float32) + emb_b_ref[...])  # [N,D]

    # --- EGNN layers (statically unrolled; all weights resident in VMEM) ----
    for l in range(NUM_LAYERS):
        # Fused node projection: a = h @ [w1_xi | w1_xj]  ([N, 4D], lane-dense)
        a = jnp.dot(h, w1x_ref[l], preferred_element_type=jnp.float32)
        two_d = a.shape[-1] // 2

        # Fused message pre-activation:
        #   [T | S | eattr] @ [a_i; a_j; w1_e]   (single MXU push, K = 2N+F)
        rhs = jnp.concatenate(
            [a[:, :two_d], a[:, two_d:], w1e_ref[l]],
            axis=0).astype(jnp.bfloat16)                                # [2N+F,2D]
        pre = jnp.dot(tse, rhs, preferred_element_type=jnp.float32)    # [E, 2D]

        rel = jnp.dot(Dm, pos.astype(jnp.bfloat16),
                      preferred_element_type=jnp.float32)               # [E, C]
        dist = jnp.sqrt(jnp.sum(rel * rel, axis=-1, keepdims=True))     # [E, 1]

        hmsg = _silu(pre + dist * w1d_ref[l] + b1_ref[l])               # [E, 2D]
        msg = (jnp.dot(hmsg, w2_ref[l], preferred_element_type=jnp.float32)
               + b2_ref[l])                                             # [E, D]

        # scatter-mean onto target nodes: contract the edge axis of T directly.
        agg = lax.dot_general(
            T, msg.astype(jnp.bfloat16),
            dimension_numbers=(((0,), (0,)), ((), ())),
            preferred_element_type=jnp.float32) * invc                  # [N, D]

        # update()
        h = h + agg
        ch = _silu(jnp.dot(agg, wc1_ref[l],
                           preferred_element_type=jnp.float32) + bc1_ref[l])
        coord_update = (jnp.dot(ch, wc2_ref[l],
                                preferred_element_type=jnp.float32)
                        + bc2_ref[l])                                   # [N, 1]
        pos = pos + coord_update * noise_ref[0, l]

    # --- readout -------------------------------------------------------------
    g = jnp.mean(h, axis=0, keepdims=True)                              # [1, D]
    go = _silu(jnp.dot(g, out_w1_ref[...],
                       preferred_element_type=jnp.float32) + out_b1_ref[...])
    o_ref[0] = (jnp.dot(go, out_w2_ref[...],
                        preferred_element_type=jnp.float32) + out_b2_ref[...])


# ----------------------------- JAX glue / wrappers --------------------------

def egnn_forward(params, x, pos, edge_index, edge_attr, noises):
    """Batched forward: B independent graphs, one per grid step.

    x: [B, N, D], pos: [B, N, C], edge_index: [B, 2, E] (row0=src j, row1=tgt i),
    edge_attr: [B, E, F], noises: [B, L, N, C].  Returns [B, 1].
    """
    B, N, _ = x.shape
    src = edge_index[:, 0, :]                                # j (source)
    tgt = edge_index[:, 1, :]                                # i (target / aggr)

    # One-hots built directly in bf16 (exact for 0/1); concat the
    # layer-invariant message operand [T | S | eattr] once on the host side.
    T = jax.nn.one_hot(tgt, N, dtype=jnp.bfloat16)           # [B, E, N]
    S = jax.nn.one_hot(src, N, dtype=jnp.bfloat16)           # [B, E, N]
    tse = jnp.concatenate([T, S, edge_attr.astype(jnp.bfloat16)], axis=-1)

    # In-degree counts via scatter-add (no f32 one-hot sum).
    cnt = jax.vmap(
        lambda t: jnp.zeros((N,), jnp.float32).at[t].add(1.0))(tgt)
    inv_cnt = (1.0 / jnp.maximum(cnt, 1.0))[..., None]       # [B, N, 1]

    lp = params["layers"]
    batched = [x, pos, tse, inv_cnt, noises]
    weights = [params["emb_w"], params["emb_b"],
               lp["w1x"], lp["w1e"], lp["w1d"], lp["b1"],
               lp["w2"], lp["b2"], lp["wc1"], lp["bc1"], lp["wc2"], lp["bc2"],
               params["out_w1"], params["out_b1"],
               params["out_w2"], params["out_b2"]]

    def batched_spec(a):
        nd = a.ndim
        return pl.BlockSpec((1,) + a.shape[1:],
                            lambda b, nd=nd: (b,) + (0,) * (nd - 1))

    def weight_spec(a):
        nd = a.ndim
        return pl.BlockSpec(a.shape, lambda b, nd=nd: (0,) * nd)

    in_specs = ([batched_spec(a) for a in batched]
                + [weight_spec(a) for a in weights])

    out = pl.pallas_call(
        _egnn_fused_kernel,
        grid=(B,),
        out_shape=jax.ShapeDtypeStruct((B, 1, 1), jnp.float32),
        in_specs=in_specs,
        out_specs=pl.BlockSpec((1, 1, 1), lambda b: (b, 0, 0)),
        compiler_params=pltpu.CompilerParams(
            dimension_semantics=("parallel",)),
    )(*batched, *weights)
    return out.reshape(B, 1)


def _init_linear(key, fan_in, fan_out):
    kw, kb = jax.random.split(key)
    bound = 1.0 / float(fan_in) ** 0.5
    w = jax.random.uniform(kw, (fan_in, fan_out), jnp.float32, -bound, bound)
    b = jax.random.uniform(kb, (1, fan_out), jnp.float32, -bound, bound)
    return w, b


def init_params(key, node_dim=NODE_DIM, coord_dim=COORD_DIM,
                edge_dim=EDGE_DIM, num_layers=NUM_LAYERS):
    keys = jax.random.split(key, 3 + 4 * num_layers)
    params = {}
    params["emb_w"], params["emb_b"] = _init_linear(keys[0], node_dim, node_dim)
    params["out_w1"], params["out_b1"] = _init_linear(keys[1], node_dim,
                                                      node_dim // 2)
    params["out_w2"], params["out_b2"] = _init_linear(keys[2], node_dim // 2, 1)

    layers = []
    msg_in = 2 * node_dim + edge_dim + 1
    for l in range(num_layers):
        k0, k1, k2, k3 = keys[3 + 4 * l: 3 + 4 * (l + 1)]
        w1, b1 = _init_linear(k0, msg_in, 2 * node_dim)
        w2, b2 = _init_linear(k1, 2 * node_dim, node_dim)
        wc1, bc1 = _init_linear(k2, node_dim, node_dim)
        wc2, bc2 = _init_linear(k3, node_dim, 1)
        layers.append({
            # split of the concat-input weight: [x_i | x_j | edge_attr | dist];
            # the two node blocks are pre-fused along the output axis so the
            # kernel does one lane-dense [D, 4D] projection per layer.
            "w1x": jnp.concatenate(
                [w1[:node_dim], w1[node_dim:2 * node_dim]], axis=-1),
            "w1e": w1[2 * node_dim:2 * node_dim + edge_dim],
            "w1d": w1[2 * node_dim + edge_dim:],
            "b1": b1,
            "w2": w2, "b2": b2,
            "wc1": wc1, "bc1": bc1,
            "wc2": wc2, "bc2": bc2,
        })
    # Stack per-layer weights along a leading L axis so the fused kernel can
    # index them (statically here, dynamically if switched to fori_loop).
    params["layers"] = {k: jnp.stack([ly[k] for ly in layers])
                        for k in layers[0]}
    return params


if __name__ == "__main__":
    key = jax.random.PRNGKey(0)
    k1, k2, k3, k4, k5 = jax.random.split(key, 5)

    B, N, E = 2, 16, 32
    x = jax.random.normal(k1, (B, N, NODE_DIM), jnp.float32)
    pos = jax.random.normal(k2, (B, N, COORD_DIM), jnp.float32)
    edge_index = jax.random.randint(k3, (B, 2, E), 0, N)
    edge_attr = jax.random.normal(k4, (B, E, EDGE_DIM), jnp.float32)
    noises = jax.random.normal(k5, (B, NUM_LAYERS, N, COORD_DIM), jnp.float32)

    params = init_params(jax.random.PRNGKey(42))

    out = egnn_forward(params, x, pos, edge_index, edge_attr, noises)
    jax.block_until_ready(out)
    assert out.shape == (B, 1)
    print("KERNEL_OK")
</pallas_src>

<mosaic_0001>
module attributes {stable_mosaic.version = 11 : i64} {
  func.func @_egnn_fused_kernel(%arg0: i32, %arg1: memref<1x16x32xf32, #tpu.memory_space<vmem>>, %arg2: memref<1x16x3xf32, #tpu.memory_space<vmem>>, %arg3: memref<1x32x36xbf16, #tpu.memory_space<vmem>>, %arg4: memref<1x16x1xf32, #tpu.memory_space<vmem>>, %arg5: memref<1x4x16x3xf32, #tpu.memory_space<vmem>>, %arg6: memref<32x32xf32, #tpu.memory_space<vmem>>, %arg7: memref<1x32xf32, #tpu.memory_space<vmem>>, %arg8: memref<4x32x128xf32, #tpu.memory_space<vmem>>, %arg9: memref<4x4x64xf32, #tpu.memory_space<vmem>>, %arg10: memref<4x1x64xf32, #tpu.memory_space<vmem>>, %arg11: memref<4x1x64xf32, #tpu.memory_space<vmem>>, %arg12: memref<4x64x32xf32, #tpu.memory_space<vmem>>, %arg13: memref<4x1x32xf32, #tpu.memory_space<vmem>>, %arg14: memref<4x32x32xf32, #tpu.memory_space<vmem>>, %arg15: memref<4x1x32xf32, #tpu.memory_space<vmem>>, %arg16: memref<4x32x1xf32, #tpu.memory_space<vmem>>, %arg17: memref<4x1x1xf32, #tpu.memory_space<vmem>>, %arg18: memref<32x16xf32, #tpu.memory_space<vmem>>, %arg19: memref<1x16xf32, #tpu.memory_space<vmem>>, %arg20: memref<16x1xf32, #tpu.memory_space<vmem>>, %arg21: memref<1x1xf32, #tpu.memory_space<vmem>>, %arg22: memref<1x1x1xf32, #tpu.memory_space<vmem>>) attributes {dimension_semantics = [#tpu.dimension_semantics<parallel>], iteration_bounds = array<i64: 2>, scalar_prefetch = 0 : i64, scratch_operands = 0 : i64, tpu.core_type = #tpu.core_type<tc>, window_params = [{transform_indices = @transform_0, window_bounds = array<i64: 1, 16, 32>}, {transform_indices = @transform_1, window_bounds = array<i64: 1, 16, 3>}, {transform_indices = @transform_2, window_bounds = array<i64: 1, 32, 36>}, {transform_indices = @transform_3, window_bounds = array<i64: 1, 16, 1>}, {transform_indices = @transform_4, window_bounds = array<i64: 1, 4, 16, 3>}, {pipeline_mode = #tpu.pipeline_mode<synchronous>, transform_indices = @transform_5, window_bounds = array<i64: 32, 32>}, {pipeline_mode = #tpu.pipeline_mode<synchronous>, transform_indices = @transform_6, window_bounds = array<i64: 1, 32>}, {pipeline_mode = #tpu.pipeline_mode<synchronous>, transform_indices = @transform_7, window_bounds = array<i64: 4, 32, 128>}, {pipeline_mode = #tpu.pipeline_mode<synchronous>, transform_indices = @transform_8, window_bounds = array<i64: 4, 4, 64>}, {pipeline_mode = #tpu.pipeline_mode<synchronous>, transform_indices = @transform_9, window_bounds = array<i64: 4, 1, 64>}, {pipeline_mode = #tpu.pipeline_mode<synchronous>, transform_indices = @transform_10, window_bounds = array<i64: 4, 1, 64>}, {pipeline_mode = #tpu.pipeline_mode<synchronous>, transform_indices = @transform_11, window_bounds = array<i64: 4, 64, 32>}, {pipeline_mode = #tpu.pipeline_mode<synchronous>, transform_indices = @transform_12, window_bounds = array<i64: 4, 1, 32>}, {pipeline_mode = #tpu.pipeline_mode<synchronous>, transform_indices = @transform_13, window_bounds = array<i64: 4, 32, 32>}, {pipeline_mode = #tpu.pipeline_mode<synchronous>, transform_indices = @transform_14, window_bounds = array<i64: 4, 1, 32>}, {pipeline_mode = #tpu.pipeline_mode<synchronous>, transform_indices = @transform_15, window_bounds = array<i64: 4, 32, 1>}, {pipeline_mode = #tpu.pipeline_mode<synchronous>, transform_indices = @transform_16, window_bounds = array<i64: 4, 1, 1>}, {pipeline_mode = #tpu.pipeline_mode<synchronous>, transform_indices = @transform_17, window_bounds = array<i64: 32, 16>}, {pipeline_mode = #tpu.pipeline_mode<synchronous>, transform_indices = @transform_18, window_bounds = array<i64: 1, 16>}, {pipeline_mode = #tpu.pipeline_mode<synchronous>, transform_indices = @transform_19, window_bounds = array<i64: 16, 1>}, {pipeline_mode = #tpu.pipeline_mode<synchronous>, transform_indices = @transform_20, window_bounds = array<i64: 1, 1>}, {transform_indices = @transform_21, window_bounds = array<i64: 1, 1, 1>}]} {
    %c0 = arith.constant 0 : index
    %c0_0 = arith.constant 0 : index
    %c0_1 = arith.constant 0 : index
    %0 = vector.load %arg1[%c0, %c0_0, %c0_1] : memref<1x16x32xf32, #tpu.memory_space<vmem>>, vector<1x16x32xf32>
    %1 = vector.shape_cast %0 : vector<1x16x32xf32> to vector<16x32xf32>
    %c0_2 = arith.constant 0 : index
    %c0_3 = arith.constant 0 : index
    %c0_4 = arith.constant 0 : index
    %2 = vector.load %arg2[%c0_2, %c0_3, %c0_4] : memref<1x16x3xf32, #tpu.memory_space<vmem>>, vector<1x16x3xf32>
    %3 = vector.shape_cast %2 : vector<1x16x3xf32> to vector<16x3xf32>
    %c0_5 = arith.constant 0 : index
    %c0_6 = arith.constant 0 : index
    %c0_7 = arith.constant 0 : index
    %4 = vector.load %arg3[%c0_5, %c0_6, %c0_7] : memref<1x32x36xbf16, #tpu.memory_space<vmem>>, vector<1x32x36xbf16>
    %5 = vector.shape_cast %4 : vector<1x32x36xbf16> to vector<32x36xbf16>
    %c0_8 = arith.constant 0 : index
    %c0_9 = arith.constant 0 : index
    %c0_10 = arith.constant 0 : index
    %6 = vector.load %arg4[%c0_8, %c0_9, %c0_10] : memref<1x16x1xf32, #tpu.memory_space<vmem>>, vector<1x16x1xf32>
    %7 = vector.shape_cast %6 : vector<1x16x1xf32> to vector<16x1xf32>
    %8 = vector.extract_strided_slice %5 {offsets = [0, 0], sizes = [32, 16], strides = [1, 1]} : vector<32x36xbf16> to vector<32x16xbf16>
    %9 = vector.extract_strided_slice %5 {offsets = [0, 16], sizes = [32, 16], strides = [1, 1]} : vector<32x36xbf16> to vector<32x16xbf16>
    %10 = arith.subf %9, %8 : vector<32x16xbf16>
    %c0_11 = arith.constant 0 : index
    %c0_12 = arith.constant 0 : index
    %11 = vector.load %arg6[%c0_11, %c0_12] : memref<32x32xf32, #tpu.memory_space<vmem>>, vector<32x32xf32>
    %cst = arith.constant dense<0.000000e+00> : vector<16x32xf32>
    %12 = tpu.matmul %1, %11, %cst {dimension_numbers = #tpu.dot_dimension_numbers<[1], [0], [0], [1], [0, 0, 1, 1], [], []>} : vector<16x32xf32>, vector<32x32xf32>, vector<16x32xf32> -> vector<16x32xf32>
    %c0_13 = arith.constant 0 : index
    %c0_14 = arith.constant 0 : index
    %13 = vector.load %arg7[%c0_13, %c0_14] : memref<1x32xf32, #tpu.memory_space<vmem>>, vector<1x32xf32>
    %14 = vector.broadcast %13 : vector<1x32xf32> to vector<16x32xf32>
    %15 = arith.addf %12, %14 : vector<16x32xf32>
    %c0_15 = arith.constant 0 : index
    %c0_16 = arith.constant 0 : index
    %c0_17 = arith.constant 0 : index
    %16 = vector.load %arg8[%c0_15, %c0_16, %c0_17] : memref<4x32x128xf32, #tpu.memory_space<vmem>>, vector<1x32x128xf32>
    %17 = vector.shape_cast %16 : vector<1x32x128xf32> to vector<32x128xf32>
    %cst_18 = arith.constant dense<0.000000e+00> : vector<16x128xf32>
    %18 = tpu.matmul %15, %17, %cst_18 {dimension_numbers = #tpu.dot_dimension_numbers<[1], [0], [0], [1], [0, 0, 1, 1], [], []>} : vector<16x32xf32>, vector<32x128xf32>, vector<16x128xf32> -> vector<16x128xf32>
    %19 = vector.extract_strided_slice %18 {offsets = [0, 0], sizes = [16, 64], strides = [1, 1]} : vector<16x128xf32> to vector<16x64xf32>
    %20 = vector.extract_strided_slice %18 {offsets = [0, 64], sizes = [16, 64], strides = [1, 1]} : vector<16x128xf32> to vector<16x64xf32>
    %c0_19 = arith.constant 0 : index
    %c0_20 = arith.constant 0 : index
    %c0_21 = arith.constant 0 : index
    %21 = vector.load %arg9[%c0_19, %c0_20, %c0_21] : memref<4x4x64xf32, #tpu.memory_space<vmem>>, vector<1x4x64xf32>
    %22 = vector.shape_cast %21 : vector<1x4x64xf32> to vector<4x64xf32>
    %23 = tpu.concatenate %19, %20, %22 in 0 : vector<16x64xf32>, vector<16x64xf32>, vector<4x64xf32> -> vector<36x64xf32>
    %24 = arith.truncf %23 : vector<36x64xf32> to vector<36x64xbf16>
    %cst_22 = arith.constant dense<0.000000e+00> : vector<32x64xf32>
    %25 = tpu.matmul %5, %24, %cst_22 {dimension_numbers = #tpu.dot_dimension_numbers<[1], [0], [0], [1], [0, 0, 1, 1], [], []>} : vector<32x36xbf16>, vector<36x64xbf16>, vector<32x64xf32> -> vector<32x64xf32>
    %26 = arith.truncf %3 : vector<16x3xf32> to vector<16x3xbf16>
    %cst_23 = arith.constant dense<0.000000e+00> : vector<32x3xf32>
    %27 = tpu.matmul %10, %26, %cst_23 {dimension_numbers = #tpu.dot_dimension_numbers<[1], [0], [0], [1], [0, 0, 1, 1], [], []>} : vector<32x16xbf16>, vector<16x3xbf16>, vector<32x3xf32> -> vector<32x3xf32>
    %28 = arith.mulf %27, %27 : vector<32x3xf32>
    %cst_24 = arith.constant dense<0.000000e+00> : vector<32xf32>
    %29 = vector.multi_reduction <add>, %28, %cst_24 [1] : vector<32x3xf32> to vector<32xf32>
    %30 = vector.shape_cast %29 : vector<32xf32> to vector<32x1xf32>
    %31 = math.sqrt %30 : vector<32x1xf32>
    %c0_25 = arith.constant 0 : index
    %c0_26 = arith.constant 0 : index
    %c0_27 = arith.constant 0 : index
    %32 = vector.load %arg10[%c0_25, %c0_26, %c0_27] : memref<4x1x64xf32, #tpu.memory_space<vmem>>, vector<1x1x64xf32>
    %33 = vector.shape_cast %32 : vector<1x1x64xf32> to vector<1x64xf32>
    %34 = vector.broadcast %31 : vector<32x1xf32> to vector<32x64xf32>
    %35 = vector.broadcast %33 : vector<1x64xf32> to vector<32x64xf32>
    %36 = arith.mulf %34, %35 : vector<32x64xf32>
    %37 = arith.addf %25, %36 : vector<32x64xf32>
    %c0_28 = arith.constant 0 : index
    %c0_29 = arith.constant 0 : index
    %c0_30 = arith.constant 0 : index
    %38 = vector.load %arg11[%c0_28, %c0_29, %c0_30] : memref<4x1x64xf32, #tpu.memory_space<vmem>>, vector<1x1x64xf32>
    %39 = vector.shape_cast %38 : vector<1x1x64xf32> to vector<1x64xf32>
    %40 = vector.broadcast %39 : vector<1x64xf32> to vector<32x64xf32>
    %41 = arith.addf %37, %40 : vector<32x64xf32>
    %cst_31 = arith.constant 0.000000e+00 : f32
    %42 = vector.broadcast %cst_31 : f32 to vector<32x64xf32>
    %43 = arith.subf %42, %41 : vector<32x64xf32>
    %44 = math.exp %43 : vector<32x64xf32>
    %cst_32 = arith.constant 1.000000e+00 : f32
    %45 = vector.broadcast %cst_32 : f32 to vector<32x64xf32>
    %46 = arith.addf %45, %44 : vector<32x64xf32>
    %47 = tpu.reciprocal %46 {approx = true} : vector<32x64xf32> -> vector<32x64xf32>
    %48 = arith.mulf %41, %47 : vector<32x64xf32>
    %c0_33 = arith.constant 0 : index
    %c0_34 = arith.constant 0 : index
    %c0_35 = arith.constant 0 : index
    %49 = vector.load %arg12[%c0_33, %c0_34, %c0_35] : memref<4x64x32xf32, #tpu.memory_space<vmem>>, vector<1x64x32xf32>
    %50 = vector.shape_cast %49 : vector<1x64x32xf32> to vector<64x32xf32>
    %cst_36 = arith.constant dense<0.000000e+00> : vector<32x32xf32>
    %51 = tpu.matmul %48, %50, %cst_36 {dimension_numbers = #tpu.dot_dimension_numbers<[1], [0], [0], [1], [0, 0, 1, 1], [], []>} : vector<32x64xf32>, vector<64x32xf32>, vector<32x32xf32> -> vector<32x32xf32>
    %c0_37 = arith.constant 0 : index
    %c0_38 = arith.constant 0 : index
    %c0_39 = arith.constant 0 : index
    %52 = vector.load %arg13[%c0_37, %c0_38, %c0_39] : memref<4x1x32xf32, #tpu.memory_space<vmem>>, vector<1x1x32xf32>
    %53 = vector.shape_cast %52 : vector<1x1x32xf32> to vector<1x32xf32>
    %54 = vector.broadcast %53 : vector<1x32xf32> to vector<32x32xf32>
    %55 = arith.addf %51, %54 : vector<32x32xf32>
    %56 = arith.truncf %55 : vector<32x32xf32> to vector<32x32xbf16>
    %cst_40 = arith.constant dense<0.000000e+00> : vector<16x32xf32>
    %57 = tpu.matmul %8, %56, %cst_40 {dimension_numbers = #tpu.dot_dimension_numbers<[0], [0], [1], [1], [0, 1, 1, 1], [], []>} : vector<32x16xbf16>, vector<32x32xbf16>, vector<16x32xf32> -> vector<16x32xf32>
    %58 = vector.broadcast %7 : vector<16x1xf32> to vector<16x32xf32>
    %59 = arith.mulf %57, %58 : vector<16x32xf32>
    %60 = arith.addf %15, %59 : vector<16x32xf32>
    %c0_41 = arith.constant 0 : index
    %c0_42 = arith.constant 0 : index
    %c0_43 = arith.constant 0 : index
    %61 = vector.load %arg14[%c0_41, %c0_42, %c0_43] : memref<4x32x32xf32, #tpu.memory_space<vmem>>, vector<1x32x32xf32>
    %62 = vector.shape_cast %61 : vector<1x32x32xf32> to vector<32x32xf32>
    %cst_44 = arith.constant dense<0.000000e+00> : vector<16x32xf32>
    %63 = tpu.matmul %59, %62, %cst_44 {dimension_numbers = #tpu.dot_dimension_numbers<[1], [0], [0], [1], [0, 0, 1, 1], [], []>} : vector<16x32xf32>, vector<32x32xf32>, vector<16x32xf32> -> vector<16x32xf32>
    %c0_45 = arith.constant 0 : index
    %c0_46 = arith.constant 0 : index
    %c0_47 = arith.constant 0 : index
    %64 = vector.load %arg15[%c0_45, %c0_46, %c0_47] : memref<4x1x32xf32, #tpu.memory_space<vmem>>, vector<1x1x32xf32>
    %65 = vector.shape_cast %64 : vector<1x1x32xf32> to vector<1x32xf32>
    %66 = vector.broadcast %65 : vector<1x32xf32> to vector<16x32xf32>
    %67 = arith.addf %63, %66 : vector<16x32xf32>
    %cst_48 = arith.constant 0.000000e+00 : f32
    %68 = vector.broadcast %cst_48 : f32 to vector<16x32xf32>
    %69 = arith.subf %68, %67 : vector<16x32xf32>
    %70 = math.exp %69 : vector<16x32xf32>
    %cst_49 = arith.constant 1.000000e+00 : f32
    %71 = vector.broadcast %cst_49 : f32 to vector<16x32xf32>
    %72 = arith.addf %71, %70 : vector<16x32xf32>
    %73 = tpu.reciprocal %72 {approx = true} : vector<16x32xf32> -> vector<16x32xf32>
    %74 = arith.mulf %67, %73 : vector<16x32xf32>
    %c0_50 = arith.constant 0 : index
    %c0_51 = arith.constant 0 : index
    %c0_52 = arith.constant 0 : index
    %75 = vector.load %arg16[%c0_50, %c0_51, %c0_52] : memref<4x32x1xf32, #tpu.memory_space<vmem>>, vector<1x32x1xf32>
    %76 = vector.shape_cast %75 : vector<1x32x1xf32> to vector<32x1xf32>
    %cst_53 = arith.constant dense<0.000000e+00> : vector<16x1xf32>
    %77 = tpu.matmul %74, %76, %cst_53 {dimension_numbers = #tpu.dot_dimension_numbers<[1], [0], [0], [1], [0, 0, 1, 1], [], []>} : vector<16x32xf32>, vector<32x1xf32>, vector<16x1xf32> -> vector<16x1xf32>
    %c0_54 = arith.constant 0 : index
    %c0_55 = arith.constant 0 : index
    %c0_56 = arith.constant 0 : index
    %78 = vector.load %arg17[%c0_54, %c0_55, %c0_56] : memref<4x1x1xf32, #tpu.memory_space<vmem>>, vector<1x1x1xf32>
    %79 = vector.shape_cast %78 : vector<1x1x1xf32> to vector<1x1xf32>
    %80 = vector.broadcast %79 : vector<1x1xf32> to vector<16x1xf32>
    %81 = arith.addf %77, %80 : vector<16x1xf32>
    %c0_57 = arith.constant 0 : index
    %c0_58 = arith.constant 0 : index
    %c0_59 = arith.constant 0 : index
    %c0_60 = arith.constant 0 : index
    %82 = vector.load %arg5[%c0_57, %c0_58, %c0_59, %c0_60] : memref<1x4x16x3xf32, #tpu.memory_space<vmem>>, vector<1x1x16x3xf32>
    %83 = vector.shape_cast %82 : vector<1x1x16x3xf32> to vector<16x3xf32>
    %84 = vector.broadcast %81 : vector<16x1xf32> to vector<16x3xf32>
    %85 = arith.mulf %84, %83 : vector<16x3xf32>
    %86 = arith.addf %3, %85 : vector<16x3xf32>
    %c1 = arith.constant 1 : index
    %c0_61 = arith.constant 0 : index
    %c0_62 = arith.constant 0 : index
    %87 = vector.load %arg8[%c1, %c0_61, %c0_62] : memref<4x32x128xf32, #tpu.memory_space<vmem>>, vector<1x32x128xf32>
    %88 = vector.shape_cast %87 : vector<1x32x128xf32> to vector<32x128xf32>
    %cst_63 = arith.constant dense<0.000000e+00> : vector<16x128xf32>
    %89 = tpu.matmul %60, %88, %cst_63 {dimension_numbers = #tpu.dot_dimension_numbers<[1], [0], [0], [1], [0, 0, 1, 1], [], []>} : vector<16x32xf32>, vector<32x128xf32>, vector<16x128xf32> -> vector<16x128xf32>
    %90 = vector.extract_strided_slice %89 {offsets = [0, 0], sizes = [16, 64], strides = [1, 1]} : vector<16x128xf32> to vector<16x64xf32>
    %91 = vector.extract_strided_slice %89 {offsets = [0, 64], sizes = [16, 64], strides = [1, 1]} : vector<16x128xf32> to vector<16x64xf32>
    %c1_64 = arith.constant 1 : index
    %c0_65 = arith.constant 0 : index
    %c0_66 = arith.constant 0 : index
    %92 = vector.load %arg9[%c1_64, %c0_65, %c0_66] : memref<4x4x64xf32, #tpu.memory_space<vmem>>, vector<1x4x64xf32>
    %93 = vector.shape_cast %92 : vector<1x4x64xf32> to vector<4x64xf32>
    %94 = tpu.concatenate %90, %91, %93 in 0 : vector<16x64xf32>, vector<16x64xf32>, vector<4x64xf32> -> vector<36x64xf32>
    %95 = arith.truncf %94 : vector<36x64xf32> to vector<36x64xbf16>
    %cst_67 = arith.constant dense<0.000000e+00> : vector<32x64xf32>
    %96 = tpu.matmul %5, %95, %cst_67 {dimension_numbers = #tpu.dot_dimension_numbers<[1], [0], [0], [1], [0, 0, 1, 1], [], []>} : vector<32x36xbf16>, vector<36x64xbf16>, vector<32x64xf32> -> vector<32x64xf32>
    %97 = arith.truncf %86 : vector<16x3xf32> to vector<16x3xbf16>
    %cst_68 = arith.constant dense<0.000000e+00> : vector<32x3xf32>
    %98 = tpu.matmul %10, %97, %cst_68 {dimension_numbers = #tpu.dot_dimension_numbers<[1], [0], [0], [1], [0, 0, 1, 1], [], []>} : vector<32x16xbf16>, vector<16x3xbf16>, vector<32x3xf32> -> vector<32x3xf32>
    %99 = arith.mulf %98, %98 : vector<32x3xf32>
    %cst_69 = arith.constant dense<0.000000e+00> : vector<32xf32>
    %100 = vector.multi_reduction <add>, %99, %cst_69 [1] : vector<32x3xf32> to vector<32xf32>
    %101 = vector.shape_cast %100 : vector<32xf32> to vector<32x1xf32>
    %102 = math.sqrt %101 : vector<32x1xf32>
    %c1_70 = arith.constant 1 : index
    %c0_71 = arith.constant 0 : index
    %c0_72 = arith.constant 0 : index
    %103 = vector.load %arg10[%c1_70, %c0_71, %c0_72] : memref<4x1x64xf32, #tpu.memory_space<vmem>>, vector<1x1x64xf32>
    %104 = vector.shape_cast %103 : vector<1x1x64xf32> to vector<1x64xf32>
    %105 = vector.broadcast %102 : vector<32x1xf32> to vector<32x64xf32>
    %106 = vector.broadcast %104 : vector<1x64xf32> to vector<32x64xf32>
    %107 = arith.mulf %105, %106 : vector<32x64xf32>
    %108 = arith.addf %96, %107 : vector<32x64xf32>
    %c1_73 = arith.constant 1 : index
    %c0_74 = arith.constant 0 : index
    %c0_75 = arith.constant 0 : index
    %109 = vector.load %arg11[%c1_73, %c0_74, %c0_75] : memref<4x1x64xf32, #tpu.memory_space<vmem>>, vector<1x1x64xf32>
    %110 = vector.shape_cast %109 : vector<1x1x64xf32> to vector<1x64xf32>
    %111 = vector.broadcast %110 : vector<1x64xf32> to vector<32x64xf32>
    %112 = arith.addf %108, %111 : vector<32x64xf32>
    %cst_76 = arith.constant 0.000000e+00 : f32
    %113 = vector.broadcast %cst_76 : f32 to vector<32x64xf32>
    %114 = arith.subf %113, %112 : vector<32x64xf32>
    %115 = math.exp %114 : vector<32x64xf32>
    %cst_77 = arith.constant 1.000000e+00 : f32
    %116 = vector.broadcast %cst_77 : f32 to vector<32x64xf32>
    %117 = arith.addf %116, %115 : vector<32x64xf32>
    %118 = tpu.reciprocal %117 {approx = true} : vector<32x64xf32> -> vector<32x64xf32>
    %119 = arith.mulf %112, %118 : vector<32x64xf32>
    %c1_78 = arith.constant 1 : index
    %c0_79 = arith.constant 0 : index
    %c0_80 = arith.constant 0 : index
    %120 = vector.load %arg12[%c1_78, %c0_79, %c0_80] : memref<4x64x32xf32, #tpu.memory_space<vmem>>, vector<1x64x32xf32>
    %121 = vector.shape_cast %120 : vector<1x64x32xf32> to vector<64x32xf32>
    %cst_81 = arith.constant dense<0.000000e+00> : vector<32x32xf32>
    %122 = tpu.matmul %119, %121, %cst_81 {dimension_numbers = #tpu.dot_dimension_numbers<[1], [0], [0], [1], [0, 0, 1, 1], [], []>} : vector<32x64xf32>, vector<64x32xf32>, vector<32x32xf32> -> vector<32x32xf32>
    %c1_82 = arith.constant 1 : index
    %c0_83 = arith.constant 0 : index
    %c0_84 = arith.constant 0 : index
    %123 = vector.load %arg13[%c1_82, %c0_83, %c0_84] : memref<4x1x32xf32, #tpu.memory_space<vmem>>, vector<1x1x32xf32>
    %124 = vector.shape_cast %123 : vector<1x1x32xf32> to vector<1x32xf32>
    %125 = vector.broadcast %124 : vector<1x32xf32> to vector<32x32xf32>
    %126 = arith.addf %122, %125 : vector<32x32xf32>
    %127 = arith.truncf %126 : vector<32x32xf32> to vector<32x32xbf16>
    %cst_85 = arith.constant dense<0.000000e+00> : vector<16x32xf32>
    %128 = tpu.matmul %8, %127, %cst_85 {dimension_numbers = #tpu.dot_dimension_numbers<[0], [0], [1], [1], [0, 1, 1, 1], [], []>} : vector<32x16xbf16>, vector<32x32xbf16>, vector<16x32xf32> -> vector<16x32xf32>
    %129 = vector.broadcast %7 : vector<16x1xf32> to vector<16x32xf32>
    %130 = arith.mulf %128, %129 : vector<16x32xf32>
    %131 = arith.addf %60, %130 : vector<16x32xf32>
    %c1_86 = arith.constant 1 : index
    %c0_87 = arith.constant 0 : index
    %c0_88 = arith.constant 0 : index
    %132 = vector.load %arg14[%c1_86, %c0_87, %c0_88] : memref<4x32x32xf32, #tpu.memory_space<vmem>>, vector<1x32x32xf32>
    %133 = vector.shape_cast %132 : vector<1x32x32xf32> to vector<32x32xf32>
    %cst_89 = arith.constant dense<0.000000e+00> : vector<16x32xf32>
    %134 = tpu.matmul %130, %133, %cst_89 {dimension_numbers = #tpu.dot_dimension_numbers<[1], [0], [0], [1], [0, 0, 1, 1], [], []>} : vector<16x32xf32>, vector<32x32xf32>, vector<16x32xf32> -> vector<16x32xf32>
    %c1_90 = arith.constant 1 : index
    %c0_91 = arith.constant 0 : index
    %c0_92 = arith.constant 0 : index
    %135 = vector.load %arg15[%c1_90, %c0_91, %c0_92] : memref<4x1x32xf32, #tpu.memory_space<vmem>>, vector<1x1x32xf32>
    %136 = vector.shape_cast %135 : vector<1x1x32xf32> to vector<1x32xf32>
    %137 = vector.broadcast %136 : vector<1x32xf32> to vector<16x32xf32>
    %138 = arith.addf %134, %137 : vector<16x32xf32>
    %cst_93 = arith.constant 0.000000e+00 : f32
    %139 = vector.broadcast %cst_93 : f32 to vector<16x32xf32>
    %140 = arith.subf %139, %138 : vector<16x32xf32>
    %141 = math.exp %140 : vector<16x32xf32>
    %cst_94 = arith.constant 1.000000e+00 : f32
    %142 = vector.broadcast %cst_94 : f32 to vector<16x32xf32>
    %143 = arith.addf %142, %141 : vector<16x32xf32>
    %144 = tpu.reciprocal %143 {approx = true} : vector<16x32xf32> -> vector<16x32xf32>
    %145 = arith.mulf %138, %144 : vector<16x32xf32>
    %c1_95 = arith.constant 1 : index
    %c0_96 = arith.constant 0 : index
    %c0_97 = arith.constant 0 : index
    %146 = vector.load %arg16[%c1_95, %c0_96, %c0_97] : memref<4x32x1xf32, #tpu.memory_space<vmem>>, vector<1x32x1xf32>
    %147 = vector.shape_cast %146 : vector<1x32x1xf32> to vector<32x1xf32>
    %cst_98 = arith.constant dense<0.000000e+00> : vector<16x1xf32>
    %148 = tpu.matmul %145, %147, %cst_98 {dimension_numbers = #tpu.dot_dimension_numbers<[1], [0], [0], [1], [0, 0, 1, 1], [], []>} : vector<16x32xf32>, vector<32x1xf32>, vector<16x1xf32> -> vector<16x1xf32>
    %c1_99 = arith.constant 1 : index
    %c0_100 = arith.constant 0 : index
    %c0_101 = arith.constant 0 : index
    %149 = vector.load %arg17[%c1_99, %c0_100, %c0_101] : memref<4x1x1xf32, #tpu.memory_space<vmem>>, vector<1x1x1xf32>
    %150 = vector.shape_cast %149 : vector<1x1x1xf32> to vector<1x1xf32>
    %151 = vector.broadcast %150 : vector<1x1xf32> to vector<16x1xf32>
    %152 = arith.addf %148, %151 : vector<16x1xf32>
    %c0_102 = arith.constant 0 : index
    %c1_103 = arith.constant 1 : index
    %c0_104 = arith.constant 0 : index
    %c0_105 = arith.constant 0 : index
    %153 = vector.load %arg5[%c0_102, %c1_103, %c0_104, %c0_105] : memref<1x4x16x3xf32, #tpu.memory_space<vmem>>, vector<1x1x16x3xf32>
    %154 = vector.shape_cast %153 : vector<1x1x16x3xf32> to vector<16x3xf32>
    %155 = vector.broadcast %152 : vector<16x1xf32> to vector<16x3xf32>
    %156 = arith.mulf %155, %154 : vector<16x3xf32>
    %157 = arith.addf %86, %156 : vector<16x3xf32>
    %c2 = arith.constant 2 : index
    %c0_106 = arith.constant 0 : index
    %c0_107 = arith.constant 0 : index
    %158 = vector.load %arg8[%c2, %c0_106, %c0_107] : memref<4x32x128xf32, #tpu.memory_space<vmem>>, vector<1x32x128xf32>
    %159 = vector.shape_cast %158 : vector<1x32x128xf32> to vector<32x128xf32>
    %cst_108 = arith.constant dense<0.000000e+00> : vector<16x128xf32>
    %160 = tpu.matmul %131, %159, %cst_108 {dimension_numbers = #tpu.dot_dimension_numbers<[1], [0], [0], [1], [0, 0, 1, 1], [], []>} : vector<16x32xf32>, vector<32x128xf32>, vector<16x128xf32> -> vector<16x128xf32>
    %161 = vector.extract_strided_slice %160 {offsets = [0, 0], sizes = [16, 64], strides = [1, 1]} : vector<16x128xf32> to vector<16x64xf32>
    %162 = vector.extract_strided_slice %160 {offsets = [0, 64], sizes = [16, 64], strides = [1, 1]} : vector<16x128xf32> to vector<16x64xf32>
    %c2_109 = arith.constant 2 : index
    %c0_110 = arith.constant 0 : index
    %c0_111 = arith.constant 0 : index
    %163 = vector.load %arg9[%c2_109, %c0_110, %c0_111] : memref<4x4x64xf32, #tpu.memory_space<vmem>>, vector<1x4x64xf32>
    %164 = vector.shape_cast %163 : vector<1x4x64xf32> to vector<4x64xf32>
    %165 = tpu.concatenate %161, %162, %164 in 0 : vector<16x64xf32>, vector<16x64xf32>, vector<4x64xf32> -> vector<36x64xf32>
    %166 = arith.truncf %165 : vector<36x64xf32> to vector<36x64xbf16>
    %cst_112 = arith.constant dense<0.000000e+00> : vector<32x64xf32>
    %167 = tpu.matmul %5, %166, %cst_112 {dimension_numbers = #tpu.dot_dimension_numbers<[1], [0], [0], [1], [0, 0, 1, 1], [], []>} : vector<32x36xbf16>, vector<36x64xbf16>, vector<32x64xf32> -> vector<32x64xf32>
    %168 = arith.truncf %157 : vector<16x3xf32> to vector<16x3xbf16>
    %cst_113 = arith.constant dense<0.000000e+00> : vector<32x3xf32>
    %169 = tpu.matmul %10, %168, %cst_113 {dimension_numbers = #tpu.dot_dimension_numbers<[1], [0], [0], [1], [0, 0, 1, 1], [], []>} : vector<32x16xbf16>, vector<16x3xbf16>, vector<32x3xf32> -> vector<32x3xf32>
    %170 = arith.mulf %169, %169 : vector<32x3xf32>
    %cst_114 = arith.constant dense<0.000000e+00> : vector<32xf32>
    %171 = vector.multi_reduction <add>, %170, %cst_114 [1] : vector<32x3xf32> to vector<32xf32>
    %172 = vector.shape_cast %171 : vector<32xf32> to vector<32x1xf32>
    %173 = math.sqrt %172 : vector<32x1xf32>
    %c2_115 = arith.constant 2 : index
    %c0_116 = arith.constant 0 : index
    %c0_117 = arith.constant 0 : index
    %174 = vector.load %arg10[%c2_115, %c0_116, %c0_117] : memref<4x1x64xf32, #tpu.memory_space<vmem>>, vector<1x1x64xf32>
    %175 = vector.shape_cast %174 : vector<1x1x64xf32> to vector<1x64xf32>
    %176 = vector.broadcast %173 : vector<32x1xf32> to vector<32x64xf32>
    %177 = vector.broadcast %175 : vector<1x64xf32> to vector<32x64xf32>
    %178 = arith.mulf %176, %177 : vector<32x64xf32>
    %179 = arith.addf %167, %178 : vector<32x64xf32>
    %c2_118 = arith.constant 2 : index
    %c0_119 = arith.constant 0 : index
    %c0_120 = arith.constant 0 : index
    %180 = vector.load %arg11[%c2_118, %c0_119, %c0_120] : memref<4x1x64xf32, #tpu.memory_space<vmem>>, vector<1x1x64xf32>
    %181 = vector.shape_cast %180 : vector<1x1x64xf32> to vector<1x64xf32>
    %182 = vector.broadcast %181 : vector<1x64xf32> to vector<32x64xf32>
    %183 = arith.addf %179, %182 : vector<32x64xf32>
    %cst_121 = arith.constant 0.000000e+00 : f32
    %184 = vector.broadcast %cst_121 : f32 to vector<32x64xf32>
    %185 = arith.subf %184, %183 : vector<32x64xf32>
    %186 = math.exp %185 : vector<32x64xf32>
    %cst_122 = arith.constant 1.000000e+00 : f32
    %187 = vector.broadcast %cst_122 : f32 to vector<32x64xf32>
    %188 = arith.addf %187, %186 : vector<32x64xf32>
    %189 = tpu.reciprocal %188 {approx = true} : vector<32x64xf32> -> vector<32x64xf32>
    %190 = arith.mulf %183, %189 : vector<32x64xf32>
    %c2_123 = arith.constant 2 : index
    %c0_124 = arith.constant 0 : index
    %c0_125 = arith.constant 0 : index
    %191 = vector.load %arg12[%c2_123, %c0_124, %c0_125] : memref<4x64x32xf32, #tpu.memory_space<vmem>>, vector<1x64x32xf32>
    %192 = vector.shape_cast %191 : vector<1x64x32xf32> to vector<64x32xf32>
    %cst_126 = arith.constant dense<0.000000e+00> : vector<32x32xf32>
    %193 = tpu.matmul %190, %192, %cst_126 {dimension_numbers = #tpu.dot_dimension_numbers<[1], [0], [0], [1], [0, 0, 1, 1], [], []>} : vector<32x64xf32>, vector<64x32xf32>, vector<32x32xf32> -> vector<32x32xf32>
    %c2_127 = arith.constant 2 : index
    %c0_128 = arith.constant 0 : index
    %c0_129 = arith.constant 0 : index
    %194 = vector.load %arg13[%c2_127, %c0_128, %c0_129] : memref<4x1x32xf32, #tpu.memory_space<vmem>>, vector<1x1x32xf32>
    %195 = vector.shape_cast %194 : vector<1x1x32xf32> to vector<1x32xf32>
    %196 = vector.broadcast %195 : vector<1x32xf32> to vector<32x32xf32>
    %197 = arith.addf %193, %196 : vector<32x32xf32>
    %198 = arith.truncf %197 : vector<32x32xf32> to vector<32x32xbf16>
    %cst_130 = arith.constant dense<0.000000e+00> : vector<16x32xf32>
    %199 = tpu.matmul %8, %198, %cst_130 {dimension_numbers = #tpu.dot_dimension_numbers<[0], [0], [1], [1], [0, 1, 1, 1], [], []>} : vector<32x16xbf16>, vector<32x32xbf16>, vector<16x32xf32> -> vector<16x32xf32>
    %200 = vector.broadcast %7 : vector<16x1xf32> to vector<16x32xf32>
    %201 = arith.mulf %199, %200 : vector<16x32xf32>
    %202 = arith.addf %131, %201 : vector<16x32xf32>
    %c2_131 = arith.constant 2 : index
    %c0_132 = arith.constant 0 : index
    %c0_133 = arith.constant 0 : index
    %203 = vector.load %arg14[%c2_131, %c0_132, %c0_133] : memref<4x32x32xf32, #tpu.memory_space<vmem>>, vector<1x32x32xf32>
    %204 = vector.shape_cast %203 : vector<1x32x32xf32> to vector<32x32xf32>
    %cst_134 = arith.constant dense<0.000000e+00> : vector<16x32xf32>
    %205 = tpu.matmul %201, %204, %cst_134 {dimension_numbers = #tpu.dot_dimension_numbers<[1], [0], [0], [1], [0, 0, 1, 1], [], []>} : vector<16x32xf32>, vector<32x32xf32>, vector<16x32xf32> -> vector<16x32xf32>
    %c2_135 = arith.constant 2 : index
    %c0_136 = arith.constant 0 : index
    %c0_137 = arith.constant 0 : index
    %206 = vector.load %arg15[%c2_135, %c0_136, %c0_137] : memref<4x1x32xf32, #tpu.memory_space<vmem>>, vector<1x1x32xf32>
    %207 = vector.shape_cast %206 : vector<1x1x32xf32> to vector<1x32xf32>
    %208 = vector.broadcast %207 : vector<1x32xf32> to vector<16x32xf32>
    %209 = arith.addf %205, %208 : vector<16x32xf32>
    %cst_138 = arith.constant 0.000000e+00 : f32
    %210 = vector.broadcast %cst_138 : f32 to vector<16x32xf32>
    %211 = arith.subf %210, %209 : vector<16x32xf32>
    %212 = math.exp %211 : vector<16x32xf32>
    %cst_139 = arith.constant 1.000000e+00 : f32
    %213 = vector.broadcast %cst_139 : f32 to vector<16x32xf32>
    %214 = arith.addf %213, %212 : vector<16x32xf32>
    %215 = tpu.reciprocal %214 {approx = true} : vector<16x32xf32> -> vector<16x32xf32>
    %216 = arith.mulf %209, %215 : vector<16x32xf32>
    %c2_140 = arith.constant 2 : index
    %c0_141 = arith.constant 0 : index
    %c0_142 = arith.constant 0 : index
    %217 = vector.load %arg16[%c2_140, %c0_141, %c0_142] : memref<4x32x1xf32, #tpu.memory_space<vmem>>, vector<1x32x1xf32>
    %218 = vector.shape_cast %217 : vector<1x32x1xf32> to vector<32x1xf32>
    %cst_143 = arith.constant dense<0.000000e+00> : vector<16x1xf32>
    %219 = tpu.matmul %216, %218, %cst_143 {dimension_numbers = #tpu.dot_dimension_numbers<[1], [0], [0], [1], [0, 0, 1, 1], [], []>} : vector<16x32xf32>, vector<32x1xf32>, vector<16x1xf32> -> vector<16x1xf32>
    %c2_144 = arith.constant 2 : index
    %c0_145 = arith.constant 0 : index
    %c0_146 = arith.constant 0 : index
    %220 = vector.load %arg17[%c2_144, %c0_145, %c0_146] : memref<4x1x1xf32, #tpu.memory_space<vmem>>, vector<1x1x1xf32>
    %221 = vector.shape_cast %220 : vector<1x1x1xf32> to vector<1x1xf32>
    %222 = vector.broadcast %221 : vector<1x1xf32> to vector<16x1xf32>
    %223 = arith.addf %219, %222 : vector<16x1xf32>
    %c0_147 = arith.constant 0 : index
    %c2_148 = arith.constant 2 : index
    %c0_149 = arith.constant 0 : index
    %c0_150 = arith.constant 0 : index
    %224 = vector.load %arg5[%c0_147, %c2_148, %c0_149, %c0_150] : memref<1x4x16x3xf32, #tpu.memory_space<vmem>>, vector<1x1x16x3xf32>
    %225 = vector.shape_cast %224 : vector<1x1x16x3xf32> to vector<16x3xf32>
    %226 = vector.broadcast %223 : vector<16x1xf32> to vector<16x3xf32>
    %227 = arith.mulf %226, %225 : vector<16x3xf32>
    %228 = arith.addf %157, %227 : vector<16x3xf32>
    %c3 = arith.constant 3 : index
    %c0_151 = arith.constant 0 : index
    %c0_152 = arith.constant 0 : index
    %229 = vector.load %arg8[%c3, %c0_151, %c0_152] : memref<4x32x128xf32, #tpu.memory_space<vmem>>, vector<1x32x128xf32>
    %230 = vector.shape_cast %229 : vector<1x32x128xf32> to vector<32x128xf32>
    %cst_153 = arith.constant dense<0.000000e+00> : vector<16x128xf32>
    %231 = tpu.matmul %202, %230, %cst_153 {dimension_numbers = #tpu.dot_dimension_numbers<[1], [0], [0], [1], [0, 0, 1, 1], [], []>} : vector<16x32xf32>, vector<32x128xf32>, vector<16x128xf32> -> vector<16x128xf32>
    %232 = vector.extract_strided_slice %231 {offsets = [0, 0], sizes = [16, 64], strides = [1, 1]} : vector<16x128xf32> to vector<16x64xf32>
    %233 = vector.extract_strided_slice %231 {offsets = [0, 64], sizes = [16, 64], strides = [1, 1]} : vector<16x128xf32> to vector<16x64xf32>
    %c3_154 = arith.constant 3 : index
    %c0_155 = arith.constant 0 : index
    %c0_156 = arith.constant 0 : index
    %234 = vector.load %arg9[%c3_154, %c0_155, %c0_156] : memref<4x4x64xf32, #tpu.memory_space<vmem>>, vector<1x4x64xf32>
    %235 = vector.shape_cast %234 : vector<1x4x64xf32> to vector<4x64xf32>
    %236 = tpu.concatenate %232, %233, %235 in 0 : vector<16x64xf32>, vector<16x64xf32>, vector<4x64xf32> -> vector<36x64xf32>
    %237 = arith.truncf %236 : vector<36x64xf32> to vector<36x64xbf16>
    %cst_157 = arith.constant dense<0.000000e+00> : vector<32x64xf32>
    %238 = tpu.matmul %5, %237, %cst_157 {dimension_numbers = #tpu.dot_dimension_numbers<[1], [0], [0], [1], [0, 0, 1, 1], [], []>} : vector<32x36xbf16>, vector<36x64xbf16>, vector<32x64xf32> -> vector<32x64xf32>
    %239 = arith.truncf %228 : vector<16x3xf32> to vector<16x3xbf16>
    %cst_158 = arith.constant dense<0.000000e+00> : vector<32x3xf32>
    %240 = tpu.matmul %10, %239, %cst_158 {dimension_numbers = #tpu.dot_dimension_numbers<[1], [0], [0], [1], [0, 0, 1, 1], [], []>} : vector<32x16xbf16>, vector<16x3xbf16>, vector<32x3xf32> -> vector<32x3xf32>
    %241 = arith.mulf %240, %240 : vector<32x3xf32>
    %cst_159 = arith.constant dense<0.000000e+00> : vector<32xf32>
    %242 = vector.multi_reduction <add>, %241, %cst_159 [1] : vector<32x3xf32> to vector<32xf32>
    %243 = vector.shape_cast %242 : vector<32xf32> to vector<32x1xf32>
    %244 = math.sqrt %243 : vector<32x1xf32>
    %c3_160 = arith.constant 3 : index
    %c0_161 = arith.constant 0 : index
    %c0_162 = arith.constant 0 : index
    %245 = vector.load %arg10[%c3_160, %c0_161, %c0_162] : memref<4x1x64xf32, #tpu.memory_space<vmem>>, vector<1x1x64xf32>
    %246 = vector.shape_cast %245 : vector<1x1x64xf32> to vector<1x64xf32>
    %247 = vector.broadcast %244 : vector<32x1xf32> to vector<32x64xf32>
    %248 = vector.broadcast %246 : vector<1x64xf32> to vector<32x64xf32>
    %249 = arith.mulf %247, %248 : vector<32x64xf32>
    %250 = arith.addf %238, %249 : vector<32x64xf32>
    %c3_163 = arith.constant 3 : index
    %c0_164 = arith.constant 0 : index
    %c0_165 = arith.constant 0 : index
    %251 = vector.load %arg11[%c3_163, %c0_164, %c0_165] : memref<4x1x64xf32, #tpu.memory_space<vmem>>, vector<1x1x64xf32>
    %252 = vector.shape_cast %251 : vector<1x1x64xf32> to vector<1x64xf32>
    %253 = vector.broadcast %252 : vector<1x64xf32> to vector<32x64xf32>
    %254 = arith.addf %250, %253 : vector<32x64xf32>
    %cst_166 = arith.constant 0.000000e+00 : f32
    %255 = vector.broadcast %cst_166 : f32 to vector<32x64xf32>
    %256 = arith.subf %255, %254 : vector<32x64xf32>
    %257 = math.exp %256 : vector<32x64xf32>
    %cst_167 = arith.constant 1.000000e+00 : f32
    %258 = vector.broadcast %cst_167 : f32 to vector<32x64xf32>
    %259 = arith.addf %258, %257 : vector<32x64xf32>
    %260 = tpu.reciprocal %259 {approx = true} : vector<32x64xf32> -> vector<32x64xf32>
    %261 = arith.mulf %254, %260 : vector<32x64xf32>
    %c3_168 = arith.constant 3 : index
    %c0_169 = arith.constant 0 : index
    %c0_170 = arith.constant 0 : index
    %262 = vector.load %arg12[%c3_168, %c0_169, %c0_170] : memref<4x64x32xf32, #tpu.memory_space<vmem>>, vector<1x64x32xf32>
    %263 = vector.shape_cast %262 : vector<1x64x32xf32> to vector<64x32xf32>
    %cst_171 = arith.constant dense<0.000000e+00> : vector<32x32xf32>
    %264 = tpu.matmul %261, %263, %cst_171 {dimension_numbers = #tpu.dot_dimension_numbers<[1], [0], [0], [1], [0, 0, 1, 1], [], []>} : vector<32x64xf32>, vector<64x32xf32>, vector<32x32xf32> -> vector<32x32xf32>
    %c3_172 = arith.constant 3 : index
    %c0_173 = arith.constant 0 : index
    %c0_174 = arith.constant 0 : index
    %265 = vector.load %arg13[%c3_172, %c0_173, %c0_174] : memref<4x1x32xf32, #tpu.memory_space<vmem>>, vector<1x1x32xf32>
    %266 = vector.shape_cast %265 : vector<1x1x32xf32> to vector<1x32xf32>
    %267 = vector.broadcast %266 : vector<1x32xf32> to vector<32x32xf32>
    %268 = arith.addf %264, %267 : vector<32x32xf32>
    %269 = arith.truncf %268 : vector<32x32xf32> to vector<32x32xbf16>
    %cst_175 = arith.constant dense<0.000000e+00> : vector<16x32xf32>
    %270 = tpu.matmul %8, %269, %cst_175 {dimension_numbers = #tpu.dot_dimension_numbers<[0], [0], [1], [1], [0, 1, 1, 1], [], []>} : vector<32x16xbf16>, vector<32x32xbf16>, vector<16x32xf32> -> vector<16x32xf32>
    %271 = vector.broadcast %7 : vector<16x1xf32> to vector<16x32xf32>
    %272 = arith.mulf %270, %271 : vector<16x32xf32>
    %273 = arith.addf %202, %272 : vector<16x32xf32>
    %cst_176 = arith.constant dense<0.000000e+00> : vector<32xf32>
    %274 = vector.multi_reduction <add>, %273, %cst_176 [0] : vector<16x32xf32> to vector<32xf32>
    %275 = vector.shape_cast %274 : vector<32xf32> to vector<1x32xf32>
    %cst_177 = arith.constant 1.600000e+01 : f32
    %276 = vector.broadcast %cst_177 : f32 to vector<1x32xf32>
    %277 = arith.divf %275, %276 : vector<1x32xf32>
    %c0_178 = arith.constant 0 : index
    %c0_179 = arith.constant 0 : index
    %278 = vector.load %arg18[%c0_178, %c0_179] : memref<32x16xf32, #tpu.memory_space<vmem>>, vector<32x16xf32>
    %cst_180 = arith.constant dense<0.000000e+00> : vector<1x16xf32>
    %279 = tpu.matmul %277, %278, %cst_180 {dimension_numbers = #tpu.dot_dimension_numbers<[1], [0], [0], [1], [0, 0, 1, 1], [], []>} : vector<1x32xf32>, vector<32x16xf32>, vector<1x16xf32> -> vector<1x16xf32>
    %c0_181 = arith.constant 0 : index
    %c0_182 = arith.constant 0 : index
    %280 = vector.load %arg19[%c0_181, %c0_182] : memref<1x16xf32, #tpu.memory_space<vmem>>, vector<1x16xf32>
    %281 = arith.addf %279, %280 : vector<1x16xf32>
    %cst_183 = arith.constant 0.000000e+00 : f32
    %282 = vector.broadcast %cst_183 : f32 to vector<1x16xf32>
    %283 = arith.subf %282, %281 : vector<1x16xf32>
    %284 = math.exp %283 : vector<1x16xf32>
    %cst_184 = arith.constant 1.000000e+00 : f32
    %285 = vector.broadcast %cst_184 : f32 to vector<1x16xf32>
    %286 = arith.addf %285, %284 : vector<1x16xf32>
    %287 = tpu.reciprocal %286 {approx = true} : vector<1x16xf32> -> vector<1x16xf32>
    %288 = arith.mulf %281, %287 : vector<1x16xf32>
    %c0_185 = arith.constant 0 : index
    %c0_186 = arith.constant 0 : index
    %289 = vector.load %arg20[%c0_185, %c0_186] : memref<16x1xf32, #tpu.memory_space<vmem>>, vector<16x1xf32>
    %cst_187 = arith.constant dense<0.000000e+00> : vector<1x1xf32>
    %290 = tpu.matmul %288, %289, %cst_187 {dimension_numbers = #tpu.dot_dimension_numbers<[1], [0], [0], [1], [0, 0, 1, 1], [], []>} : vector<1x16xf32>, vector<16x1xf32>, vector<1x1xf32> -> vector<1x1xf32>
    %c0_188 = arith.constant 0 : index
    %c0_189 = arith.constant 0 : index
    %291 = vector.load %arg21[%c0_188, %c0_189] : memref<1x1xf32, #tpu.memory_space<vmem>>, vector<1x1xf32>
    %292 = arith.addf %290, %291 : vector<1x1xf32>
    %c0_190 = arith.constant 0 : index
    %c0_191 = arith.constant 0 : index
    %c0_192 = arith.constant 0 : index
    %293 = vector.load %arg22[%c0_190, %c0_191, %c0_192] : memref<1x1x1xf32, #tpu.memory_space<vmem>>, vector<1x1x1xf32>
    %294 = vector.shape_cast %293 : vector<1x1x1xf32> to vector<1x1xf32>
    %295 = vector.shape_cast %292 : vector<1x1xf32> to vector<1x1x1xf32>
    tpu.vector_store %arg22[%c0_190, %c0_191, %c0_192], %295 {strides = array<i32>} : memref<1x1x1xf32, #tpu.memory_space<vmem>>, vector<1x1x1xf32>,
    return
  }
  func.func @transform_0(%arg0: i32) -> (i32, i32, i32) {
    %c0_i32 = arith.constant 0 : i32
    %c0_i32_0 = arith.constant 0 : i32
    %c0_i32_1 = arith.constant 0 : i32
    return %arg0, %c0_i32, %c0_i32_0 : i32, i32, i32
  }
  func.func @transform_1(%arg0: i32) -> (i32, i32, i32) {
    %c0_i32 = arith.constant 0 : i32
    %c0_i32_0 = arith.constant 0 : i32
    %c0_i32_1 = arith.constant 0 : i32
    return %arg0, %c0_i32, %c0_i32_0 : i32, i32, i32
  }
  func.func @transform_2(%arg0: i32) -> (i32, i32, i32) {
    %c0_i32 = arith.constant 0 : i32
    %c0_i32_0 = arith.constant 0 : i32
    %c0_i32_1 = arith.constant 0 : i32
    return %arg0, %c0_i32, %c0_i32_0 : i32, i32, i32
  }
  func.func @transform_3(%arg0: i32) -> (i32, i32, i32) {
    %c0_i32 = arith.constant 0 : i32
    %c0_i32_0 = arith.constant 0 : i32
    %c0_i32_1 = arith.constant 0 : i32
    return %arg0, %c0_i32, %c0_i32_0 : i32, i32, i32
  }
  func.func @transform_4(%arg0: i32) -> (i32, i32, i32, i32) {
    %c0_i32 = arith.constant 0 : i32
    %c0_i32_0 = arith.constant 0 : i32
    %c0_i32_1 = arith.constant 0 : i32
    %c0_i32_2 = arith.constant 0 : i32
    return %arg0, %c0_i32, %c0_i32_0, %c0_i32_1 : i32, i32, i32, i32
  }
  func.func @transform_5(%arg0: i32) -> (i32, i32) {
    %c0_i32 = arith.constant 0 : i32
    %c0_i32_0 = arith.constant 0 : i32
    %c0_i32_1 = arith.constant 0 : i32
    return %c0_i32, %c0_i32_0 : i32, i32
  }
  func.func @transform_6(%arg0: i32) -> (i32, i32) {
    %c0_i32 = arith.constant 0 : i32
    %c0_i32_0 = arith.constant 0 : i32
    %c0_i32_1 = arith.constant 0 : i32
    return %c0_i32, %c0_i32_0 : i32, i32
  }
  func.func @transform_7(%arg0: i32) -> (i32, i32, i32) {
    %c0_i32 = arith.constant 0 : i32
    %c0_i32_0 = arith.constant 0 : i32
    %c0_i32_1 = arith.constant 0 : i32
    %c0_i32_2 = arith.constant 0 : i32
    return %c0_i32, %c0_i32_0, %c0_i32_1 : i32, i32, i32
  }
  func.func @transform_8(%arg0: i32) -> (i32, i32, i32) {
    %c0_i32 = arith.constant 0 : i32
    %c0_i32_0 = arith.constant 0 : i32
    %c0_i32_1 = arith.constant 0 : i32
    %c0_i32_2 = arith.constant 0 : i32
    return %c0_i32, %c0_i32_0, %c0_i32_1 : i32, i32, i32
  }
  func.func @transform_9(%arg0: i32) -> (i32, i32, i32) {
    %c0_i32 = arith.constant 0 : i32
    %c0_i32_0 = arith.constant 0 : i32
    %c0_i32_1 = arith.constant 0 : i32
    %c0_i32_2 = arith.constant 0 : i32
    return %c0_i32, %c0_i32_0, %c0_i32_1 : i32, i32, i32
  }
  func.func @transform_10(%arg0: i32) -> (i32, i32, i32) {
    %c0_i32 = arith.constant 0 : i32
    %c0_i32_0 = arith.constant 0 : i32
    %c0_i32_1 = arith.constant 0 : i32
    %c0_i32_2 = arith.constant 0 : i32
    return %c0_i32, %c0_i32_0, %c0_i32_1 : i32, i32, i32
  }
  func.func @transform_11(%arg0: i32) -> (i32, i32, i32) {
    %c0_i32 = arith.constant 0 : i32
    %c0_i32_0 = arith.constant 0 : i32
    %c0_i32_1 = arith.constant 0 : i32
    %c0_i32_2 = arith.constant 0 : i32
    return %c0_i32, %c0_i32_0, %c0_i32_1 : i32, i32, i32
  }
  func.func @transform_12(%arg0: i32) -> (i32, i32, i32) {
    %c0_i32 = arith.constant 0 : i32
    %c0_i32_0 = arith.constant 0 : i32
    %c0_i32_1 = arith.constant 0 : i32
    %c0_i32_2 = arith.constant 0 : i32
    return %c0_i32, %c0_i32_0, %c0_i32_1 : i32, i32, i32
  }
  func.func @transform_13(%arg0: i32) -> (i32, i32, i32) {
    %c0_i32 = arith.constant 0 : i32
    %c0_i32_0 = arith.constant 0 : i32
    %c0_i32_1 = arith.constant 0 : i32
    %c0_i32_2 = arith.constant 0 : i32
    return %c0_i32, %c0_i32_0, %c0_i32_1 : i32, i32, i32
  }
  func.func @transform_14(%arg0: i32) -> (i32, i32, i32) {
    %c0_i32 = arith.constant 0 : i32
    %c0_i32_0 = arith.constant 0 : i32
    %c0_i32_1 = arith.constant 0 : i32
    %c0_i32_2 = arith.constant 0 : i32
    return %c0_i32, %c0_i32_0, %c0_i32_1 : i32, i32, i32
  }
  func.func @transform_15(%arg0: i32) -> (i32, i32, i32) {
    %c0_i32 = arith.constant 0 : i32
    %c0_i32_0 = arith.constant 0 : i32
    %c0_i32_1 = arith.constant 0 : i32
    %c0_i32_2 = arith.constant 0 : i32
    return %c0_i32, %c0_i32_0, %c0_i32_1 : i32, i32, i32
  }
  func.func @transform_16(%arg0: i32) -> (i32, i32, i32) {
    %c0_i32 = arith.constant 0 : i32
    %c0_i32_0 = arith.constant 0 : i32
    %c0_i32_1 = arith.constant 0 : i32
    %c0_i32_2 = arith.constant 0 : i32
    return %c0_i32, %c0_i32_0, %c0_i32_1 : i32, i32, i32
  }
  func.func @transform_17(%arg0: i32) -> (i32, i32) {
    %c0_i32 = arith.constant 0 : i32
    %c0_i32_0 = arith.constant 0 : i32
    %c0_i32_1 = arith.constant 0 : i32
    return %c0_i32, %c0_i32_0 : i32, i32
  }
  func.func @transform_18(%arg0: i32) -> (i32, i32) {
    %c0_i32 = arith.constant 0 : i32
    %c0_i32_0 = arith.constant 0 : i32
    %c0_i32_1 = arith.constant 0 : i32
    return %c0_i32, %c0_i32_0 : i32, i32
  }
  func.func @transform_19(%arg0: i32) -> (i32, i32) {
    %c0_i32 = arith.constant 0 : i32
    %c0_i32_0 = arith.constant 0 : i32
    %c0_i32_1 = arith.constant 0 : i32
    return %c0_i32, %c0_i32_0 : i32, i32
  }
  func.func @transform_20(%arg0: i32) -> (i32, i32) {
    %c0_i32 = arith.constant 0 : i32
    %c0_i32_0 = arith.constant 0 : i32
    %c0_i32_1 = arith.constant 0 : i32
    return %c0_i32, %c0_i32_0 : i32, i32
  }
  func.func @transform_21(%arg0: i32) -> (i32, i32, i32) {
    %c0_i32 = arith.constant 0 : i32
    %c0_i32_0 = arith.constant 0 : i32
    %c0_i32_1 = arith.constant 0 : i32
    return %arg0, %c0_i32, %c0_i32_0 : i32, i32, i32
  }
}

</mosaic_0001>

<llo_original>
// kernel: tpu_custom_call.1
$region0: #{tpu_custom_call.1}
  #allocation0 [shape = 'u32[]', space=smem, size = 0x4, offset = 0x4, fixed_abs, tag = 'smem constant byte address 0x4 - core index']
  #allocation1 [shape = 'u32[144,128]{1,0:T(1,128)}', space=vmem, size = 0x12000, scoped, tag = 'internal scratch']
  #allocation2 [shape = 'f32[1,1]{1,0:T(1,128)S(1)}', space=vmem, size = 0x200, scoped, tag = 'scoped memory for tpu_custom_call.1']
  %s0 = inlined_call_operand.vmem [shape: f32[2,16,32], index: 0, kind: input, shape index: {}]
  %s1 = inlined_call_operand.vmem [shape: f32[2,16,3], index: 1, kind: input, shape index: {}]
  %s2 = inlined_call_operand.vmem [shape: bf16[2,32,36], index: 2, kind: input, shape index: {}]
  %s3 = inlined_call_operand.vmem [shape: f32[2,16,1], index: 3, kind: input, shape index: {}]
  %s4 = inlined_call_operand.vmem [shape: f32[2,4,16,3], index: 4, kind: input, shape index: {}]
  %s5 = inlined_call_operand.vmem [shape: f32[32,32], index: 5, kind: input, shape index: {}]
  %s6 = inlined_call_operand.vmem [shape: f32[1,32], index: 6, kind: input, shape index: {}]
  %s7 = inlined_call_operand.vmem [shape: f32[4,32,128], index: 7, kind: input, shape index: {}]
  %s8 = inlined_call_operand.vmem [shape: f32[4,4,64], index: 8, kind: input, shape index: {}]
  %s9 = inlined_call_operand.vmem [shape: f32[4,1,64], index: 9, kind: input, shape index: {}]
  %s10 = inlined_call_operand.vmem [shape: f32[4,1,64], index: 10, kind: input, shape index: {}]
  %s11 = inlined_call_operand.vmem [shape: f32[4,64,32], index: 11, kind: input, shape index: {}]
  %s12 = inlined_call_operand.vmem [shape: f32[4,1,32], index: 12, kind: input, shape index: {}]
  %s13 = inlined_call_operand.vmem [shape: f32[4,32,32], index: 13, kind: input, shape index: {}]
  %s14 = inlined_call_operand.vmem [shape: f32[4,1,32], index: 14, kind: input, shape index: {}]
  %s15 = inlined_call_operand.vmem [shape: f32[4,32,1], index: 15, kind: input, shape index: {}]
  %s16 = inlined_call_operand.vmem [shape: f32[4,1,1], index: 16, kind: input, shape index: {}]
  %s17 = inlined_call_operand.vmem [shape: f32[32,16], index: 17, kind: input, shape index: {}]
  %s18 = inlined_call_operand.vmem [shape: f32[1,16], index: 18, kind: input, shape index: {}]
  %s19 = inlined_call_operand.vmem [shape: f32[16,1], index: 19, kind: input, shape index: {}]
  %s20 = inlined_call_operand.<no memory space> [shape: f32[1,1], index: 20, kind: input, shape index: {}]
  %s21 = inlined_call_operand.vmem [shape: f32[2,1,1], index: 21, kind: output, shape index: {}]
  %s22 = sld [smem:[#allocation0]]
  $region117: #{tpu_custom_call.1} parent=0
    _
  %s24 = ssub.s32 1, %s22
  %s25 = scalar_select 0, %s24, %s22
  %v26 = vstv %s20
  %27 = vst [vmem:[#allocation2] sm:$0x1] %v26
  loop: start=0, step=1, limit=4
  $region2: #{tpu_custom_call.1} parent=0 // loop_pre_header
    _
  $region3: #{tpu_custom_call.1} parent=0 // loop_header
    %s29 = sphi 0, %s33
    %p30 = scmp.ge.s32.totalorder %s29, 4
    %s39 = sphi 0, %s41
    %s42 = sphi 0, %s39
    %s43 = sphi 0, %s42
    %s59 = sphi 0, %s43
    %s65 = sphi 0, %s67
    %s68 = sphi 0, %s65
    %s69 = sphi 0, %s68
    %s85 = sphi 0, %s69
    %s91 = sphi 0, %s93
    %s94 = sphi 0, %s91
    %s95 = sphi 0, %s94
    %s111 = sphi 0, %s95
    %s117 = sphi 0, %s119
    %s120 = sphi 0, %s117
    %s121 = sphi 0, %s120
    %s137 = sphi 0, %s121
    %s143 = sphi 0, %s145
    %s146 = sphi 0, %s143
    %s147 = sphi 0, %s146
    %s163 = sphi 0, %s147
    %s167 = sphi 0, %s167
    %s169 = sphi 0, %s167
    %s170 = sphi 0, %s169
    %s184 = sphi 0, %s170
    %s188 = sphi 0, %s188
    %s190 = sphi 0, %s188
    %s191 = sphi 0, %s190
    %s205 = sphi 0, %s191
    %s209 = sphi 0, %s209
    %s211 = sphi 0, %s209
    %s212 = sphi 0, %s211
    %s226 = sphi 0, %s212
    %s230 = sphi 0, %s230
    %s232 = sphi 0, %s230
    %s233 = sphi 0, %s232
    %s247 = sphi 0, %s233
    %s251 = sphi 0, %s251
    %s253 = sphi 0, %s251
    %s254 = sphi 0, %s253
    %s268 = sphi 0, %s254
    %s272 = sphi 0, %s272
    %s274 = sphi 0, %s272
    %s275 = sphi 0, %s274
    %s289 = sphi 0, %s275
    %s293 = sphi 0, %s293
    %s295 = sphi 0, %s293
    %s296 = sphi 0, %s295
    %s310 = sphi 0, %s296
    %s314 = sphi 0, %s314
    %s316 = sphi 0, %s314
    %s317 = sphi 0, %s316
    %s331 = sphi 0, %s317
    %s335 = sphi 0, %s335
    %s337 = sphi 0, %s335
    %s338 = sphi 0, %s337
    %s352 = sphi 0, %s338
    %s356 = sphi 0, %s356
    %s358 = sphi 0, %s356
    %s359 = sphi 0, %s358
    %s373 = sphi 0, %s359
    %s377 = sphi 0, %s377
    %s379 = sphi 0, %s377
    %s380 = sphi 0, %s379
    %s394 = sphi 0, %s380
    %s398 = sphi 0, %s398
    %s400 = sphi 0, %s398
    %s401 = sphi 0, %s400
    %s415 = sphi 0, %s401
    %s419 = sphi 0, %s419
    %s421 = sphi 0, %s419
    %s422 = sphi 0, %s421
    %s436 = sphi 0, %s422
    %s440 = sphi 0, %s440
    %s442 = sphi 0, %s440
    %s443 = sphi 0, %s442
    %s457 = sphi 0, %s443
    %s461 = sphi 0, %s461
    %s463 = sphi 0, %s461
    %s464 = sphi 0, %s463
    %s478 = sphi 0, %s464
    %s482 = sphi 0, %s482
    %s484 = sphi 0, %s482
    %s485 = sphi 0, %s484
    %s499 = sphi 0, %s485
    %s505 = sphi 0, %s507
    %s508 = sphi 0, %s505
    %s509 = sphi 0, %s508
    %s525 = sphi 0, %s509
  $region4: #{tpu_custom_call.1} parent=0 // loop_header_branch
    %32 = sbr.rel (%p30) target = $region8
  $region5: #{tpu_custom_call.1} parent=0 // loop_body
    %s34 = ssub.s32 %s29, 1
    %s35 = ssub.s32 %s29, 2
    %s36 = sadd.s32 %s29, 1
    %s37 = ssub.s32 %s29, %s36
    %p38 = scmp.eq.s32.totalorder %s37, 0
    %s40 = sadd.s32 %s39, 1
    %s41 = scalar_select %p38, %s39, %s40
    %p44 = pneg %p38
    %p45 = scmp.eq.s32.totalorder %s29, 1
    %p46 = por %p44, %p45
    %p47 = scmp.ne.s32.totalorder %s39, %s42
    %p48 = scmp.eq.s32.totalorder %s29, 0
    %p49 = por %p47, %p48
    %p50 = scmp.ne.s32.totalorder %s39, %s42
    %p51 = scmp.eq.s32.totalorder %s34, 1
    %p52 = por %p50, %p51
    %p53 = scmp.ne.s32.totalorder %s42, %s43
    %p54 = scmp.eq.s32.totalorder %s34, 0
    %p55 = por %p53, %p54
    %p56 = scmp.ne.s32.totalorder %s42, %s43
    %p57 = scmp.eq.s32.totalorder %s35, 1
    %p58 = por %p56, %p57
    %p60 = scmp.ne.s32.totalorder %s43, %s59
    %p61 = scmp.eq.s32.totalorder %s35, 0
    %p62 = por %p60, %p61
    %s63 = ssub.s32 %s29, %s36
    %p64 = scmp.eq.s32.totalorder %s63, 0
    %s66 = sadd.s32 %s65, 1
    %s67 = scalar_select %p64, %s65, %s66
    %p70 = pneg %p64
    %p71 = scmp.eq.s32.totalorder %s29, 1
    %p72 = por %p70, %p71
    %p73 = scmp.ne.s32.totalorder %s65, %s68
    %p74 = scmp.eq.s32.totalorder %s29, 0
    %p75 = por %p73, %p74
    %p76 = scmp.ne.s32.totalorder %s65, %s68
    %p77 = scmp.eq.s32.totalorder %s34, 1
    %p78 = por %p76, %p77
    %p79 = scmp.ne.s32.totalorder %s68, %s69
    %p80 = scmp.eq.s32.totalorder %s34, 0
    %p81 = por %p79, %p80
    %p82 = scmp.ne.s32.totalorder %s68, %s69
    %p83 = scmp.eq.s32.totalorder %s35, 1
    %p84 = por %p82, %p83
    %p86 = scmp.ne.s32.totalorder %s69, %s85
    %p87 = scmp.eq.s32.totalorder %s35, 0
    %p88 = por %p86, %p87
    %s89 = ssub.s32 %s29, %s36
    %p90 = scmp.eq.s32.totalorder %s89, 0
    %s92 = sadd.s32 %s91, 1
    %s93 = scalar_select %p90, %s91, %s92
    %p96 = pneg %p90
    %p97 = scmp.eq.s32.totalorder %s29, 1
    %p98 = por %p96, %p97
    %p99 = scmp.ne.s32.totalorder %s91, %s94
    %p100 = scmp.eq.s32.totalorder %s29, 0
    %p101 = por %p99, %p100
    %p102 = scmp.ne.s32.totalorder %s91, %s94
    %p103 = scmp.eq.s32.totalorder %s34, 1
    %p104 = por %p102, %p103
    %p105 = scmp.ne.s32.totalorder %s94, %s95
    %p106 = scmp.eq.s32.totalorder %s34, 0
    %p107 = por %p105, %p106
    %p108 = scmp.ne.s32.totalorder %s94, %s95
    %p109 = scmp.eq.s32.totalorder %s35, 1
    %p110 = por %p108, %p109
    %p112 = scmp.ne.s32.totalorder %s95, %s111
    %p113 = scmp.eq.s32.totalorder %s35, 0
    %p114 = por %p112, %p113
    %s115 = ssub.s32 %s29, %s36
    %p116 = scmp.eq.s32.totalorder %s115, 0
    %s118 = sadd.s32 %s117, 1
    %s119 = scalar_select %p116, %s117, %s118
    %p122 = pneg %p116
    %p123 = scmp.eq.s32.totalorder %s29, 1
    %p124 = por %p122, %p123
    %p125 = scmp.ne.s32.totalorder %s117, %s120
    %p126 = scmp.eq.s32.totalorder %s29, 0
    %p127 = por %p125, %p126
    %p128 = scmp.ne.s32.totalorder %s117, %s120
    %p129 = scmp.eq.s32.totalorder %s34, 1
    %p130 = por %p128, %p129
    %p131 = scmp.ne.s32.totalorder %s120, %s121
    %p132 = scmp.eq.s32.totalorder %s34, 0
    %p133 = por %p131, %p132
    %p134 = scmp.ne.s32.totalorder %s120, %s121
    %p135 = scmp.eq.s32.totalorder %s35, 1
    %p136 = por %p134, %p135
    %p138 = scmp.ne.s32.totalorder %s121, %s137
    %p139 = scmp.eq.s32.totalorder %s35, 0
    %p140 = por %p138, %p139
    %s141 = ssub.s32 %s29, %s36
    %p142 = scmp.eq.s32.totalorder %s141, 0
    %s144 = sadd.s32 %s143, 1
    %s145 = scalar_select %p142, %s143, %s144
    %p148 = pneg %p142
    %p149 = scmp.eq.s32.totalorder %s29, 1
    %p150 = por %p148, %p149
    %p151 = scmp.ne.s32.totalorder %s143, %s146
    %p152 = scmp.eq.s32.totalorder %s29, 0
    %p153 = por %p151, %p152
    %p154 = scmp.ne.s32.totalorder %s143, %s146
    %p155 = scmp.eq.s32.totalorder %s34, 1
    %p156 = por %p154, %p155
    %p157 = scmp.ne.s32.totalorder %s146, %s147
    %p158 = scmp.eq.s32.totalorder %s34, 0
    %p159 = por %p157, %p158
    %p160 = scmp.ne.s32.totalorder %s146, %s147
    %p161 = scmp.eq.s32.totalorder %s35, 1
    %p162 = por %p160, %p161
    %p164 = scmp.ne.s32.totalorder %s147, %s163
    %p165 = scmp.eq.s32.totalorder %s35, 0
    %p166 = por %p164, %p165
    %s168 = sadd.s32 %s167, 1
    %p171 = scmp.eq.s32.totalorder %s29, 1
    %p172 = scmp.ne.s32.totalorder %s167, %s169
    %p173 = scmp.eq.s32.totalorder %s29, 0
    %p174 = por %p172, %p173
    %p175 = scmp.ne.s32.totalorder %s167, %s169
    %p176 = scmp.eq.s32.totalorder %s34, 1
    %p177 = por %p175, %p176
    %p178 = scmp.ne.s32.totalorder %s169, %s170
    %p179 = scmp.eq.s32.totalorder %s34, 0
    %p180 = por %p178, %p179
    %p181 = scmp.ne.s32.totalorder %s169, %s170
    %p182 = scmp.eq.s32.totalorder %s35, 1
    %p183 = por %p181, %p182
    %p185 = scmp.ne.s32.totalorder %s170, %s184
    %p186 = scmp.eq.s32.totalorder %s35, 0
    %p187 = por %p185, %p186
    %s189 = sadd.s32 %s188, 1
    %p192 = scmp.eq.s32.totalorder %s29, 1
    %p193 = scmp.ne.s32.totalorder %s188, %s190
    %p194 = scmp.eq.s32.totalorder %s29, 0
    %p195 = por %p193, %p194
    %p196 = scmp.ne.s32.totalorder %s188, %s190
    %p197 = scmp.eq.s32.totalorder %s34, 1
    %p198 = por %p196, %p197
    %p199 = scmp.ne.s32.totalorder %s190, %s191
    %p200 = scmp.eq.s32.totalorder %s34, 0
    %p201 = por %p199, %p200
    %p202 = scmp.ne.s32.totalorder %s190, %s191
    %p203 = scmp.eq.s32.totalorder %s35, 1
    %p204 = por %p202, %p203
    %p206 = scmp.ne.s32.totalorder %s191, %s205
    %p207 = scmp.eq.s32.totalorder %s35, 0
    %p208 = por %p206, %p207
    %s210 = sadd.s32 %s209, 1
    %p213 = scmp.eq.s32.totalorder %s29, 1
    %p214 = scmp.ne.s32.totalorder %s209, %s211
    %p215 = scmp.eq.s32.totalorder %s29, 0
    %p216 = por %p214, %p215
    %p217 = scmp.ne.s32.totalorder %s209, %s211
    %p218 = scmp.eq.s32.totalorder %s34, 1
    %p219 = por %p217, %p218
    %p220 = scmp.ne.s32.totalorder %s211, %s212
    %p221 = scmp.eq.s32.totalorder %s34, 0
    %p222 = por %p220, %p221
    %p223 = scmp.ne.s32.totalorder %s211, %s212
    %p224 = scmp.eq.s32.totalorder %s35, 1
    %p225 = por %p223, %p224
    %p227 = scmp.ne.s32.totalorder %s212, %s226
    %p228 = scmp.eq.s32.totalorder %s35, 0
    %p229 = por %p227, %p228
    %s231 = sadd.s32 %s230, 1
    %p234 = scmp.eq.s32.totalorder %s29, 1
    %p235 = scmp.ne.s32.totalorder %s230, %s232
    %p236 = scmp.eq.s32.totalorder %s29, 0
    %p237 = por %p235, %p236
    %p238 = scmp.ne.s32.totalorder %s230, %s232
    %p239 = scmp.eq.s32.totalorder %s34, 1
    %p240 = por %p238, %p239
    %p241 = scmp.ne.s32.totalorder %s232, %s233
    %p242 = scmp.eq.s32.totalorder %s34, 0
    %p243 = por %p241, %p242
    %p244 = scmp.ne.s32.totalorder %s232, %s233
    %p245 = scmp.eq.s32.totalorder %s35, 1
    %p246 = por %p244, %p245
    %p248 = scmp.ne.s32.totalorder %s233, %s247
    %p249 = scmp.eq.s32.totalorder %s35, 0
    %p250 = por %p248, %p249
    %s252 = sadd.s32 %s251, 1
    %p255 = scmp.eq.s32.totalorder %s29, 1
    %p256 = scmp.ne.s32.totalorder %s251, %s253
    %p257 = scmp.eq.s32.totalorder %s29, 0
    %p258 = por %p256, %p257
    %p259 = scmp.ne.s32.totalorder %s251, %s253
    %p260 = scmp.eq.s32.totalorder %s34, 1
    %p261 = por %p259, %p260
    %p262 = scmp.ne.s32.totalorder %s253, %s254
    %p263 = scmp.eq.s32.totalorder %s34, 0
    %p264 = por %p262, %p263
    %p265 = scmp.ne.s32.totalorder %s253, %s254
    %p266 = scmp.eq.s32.totalorder %s35, 1
    %p267 = por %p265, %p266
    %p269 = scmp.ne.s32.totalorder %s254, %s268
    %p270 = scmp.eq.s32.totalorder %s35, 0
    %p271 = por %p269, %p270
    %s273 = sadd.s32 %s272, 1
    %p276 = scmp.eq.s32.totalorder %s29, 1
    %p277 = scmp.ne.s32.totalorder %s272, %s274
    %p278 = scmp.eq.s32.totalorder %s29, 0
    %p279 = por %p277, %p278
    %p280 = scmp.ne.s32.totalorder %s272, %s274
    %p281 = scmp.eq.s32.totalorder %s34, 1
    %p282 = por %p280, %p281
    %p283 = scmp.ne.s32.totalorder %s274, %s275
    %p284 = scmp.eq.s32.totalorder %s34, 0
    %p285 = por %p283, %p284
    %p286 = scmp.ne.s32.totalorder %s274, %s275
    %p287 = scmp.eq.s32.totalorder %s35, 1
    %p288 = por %p286, %p287
    %p290 = scmp.ne.s32.totalorder %s275, %s289
    %p291 = scmp.eq.s32.totalorder %s35, 0
    %p292 = por %p290, %p291
    %s294 = sadd.s32 %s293, 1
    %p297 = scmp.eq.s32.totalorder %s29, 1
    %p298 = scmp.ne.s32.totalorder %s293, %s295
    %p299 = scmp.eq.s32.totalorder %s29, 0
    %p300 = por %p298, %p299
    %p301 = scmp.ne.s32.totalorder %s293, %s295
    %p302 = scmp.eq.s32.totalorder %s34, 1
    %p303 = por %p301, %p302
    %p304 = scmp.ne.s32.totalorder %s295, %s296
    %p305 = scmp.eq.s32.totalorder %s34, 0
    %p306 = por %p304, %p305
    %p307 = scmp.ne.s32.totalorder %s295, %s296
    %p308 = scmp.eq.s32.totalorder %s35, 1
    %p309 = por %p307, %p308
    %p311 = scmp.ne.s32.totalorder %s296, %s310
    %p312 = scmp.eq.s32.totalorder %s35, 0
    %p313 = por %p311, %p312
    %s315 = sadd.s32 %s314, 1
    %p318 = scmp.eq.s32.totalorder %s29, 1
    %p319 = scmp.ne.s32.totalorder %s314, %s316
    %p320 = scmp.eq.s32.totalorder %s29, 0
    %p321 = por %p319, %p320
    %p322 = scmp.ne.s32.totalorder %s314, %s316
    %p323 = scmp.eq.s32.totalorder %s34, 1
    %p324 = por %p322, %p323
    %p325 = scmp.ne.s32.totalorder %s316, %s317
    %p326 = scmp.eq.s32.totalorder %s34, 0
    %p327 = por %p325, %p326
    %p328 = scmp.ne.s32.totalorder %s316, %s317
    %p329 = scmp.eq.s32.totalorder %s35, 1
    %p330 = por %p328, %p329
    %p332 = scmp.ne.s32.totalorder %s317, %s331
    %p333 = scmp.eq.s32.totalorder %s35, 0
    %p334 = por %p332, %p333
    %s336 = sadd.s32 %s335, 1
    %p339 = scmp.eq.s32.totalorder %s29, 1
    %p340 = scmp.ne.s32.totalorder %s335, %s337
    %p341 = scmp.eq.s32.totalorder %s29, 0
    %p342 = por %p340, %p341
    %p343 = scmp.ne.s32.totalorder %s335, %s337
    %p344 = scmp.eq.s32.totalorder %s34, 1
    %p345 = por %p343, %p344
    %p346 = scmp.ne.s32.totalorder %s337, %s338
    %p347 = scmp.eq.s32.totalorder %s34, 0
    %p348 = por %p346, %p347
    %p349 = scmp.ne.s32.totalorder %s337, %s338
    %p350 = scmp.eq.s32.totalorder %s35, 1
    %p351 = por %p349, %p350
    %p353 = scmp.ne.s32.totalorder %s338, %s352
    %p354 = scmp.eq.s32.totalorder %s35, 0
    %p355 = por %p353, %p354
    %s357 = sadd.s32 %s356, 1
    %p360 = scmp.eq.s32.totalorder %s29, 1
    %p361 = scmp.ne.s32.totalorder %s356, %s358
    %p362 = scmp.eq.s32.totalorder %s29, 0
    %p363 = por %p361, %p362
    %p364 = scmp.ne.s32.totalorder %s356, %s358
    %p365 = scmp.eq.s32.totalorder %s34, 1
    %p366 = por %p364, %p365
    %p367 = scmp.ne.s32.totalorder %s358, %s359
    %p368 = scmp.eq.s32.totalorder %s34, 0
    %p369 = por %p367, %p368
    %p370 = scmp.ne.s32.totalorder %s358, %s359
    %p371 = scmp.eq.s32.totalorder %s35, 1
    %p372 = por %p370, %p371
    %p374 = scmp.ne.s32.totalorder %s359, %s373
    %p375 = scmp.eq.s32.totalorder %s35, 0
    %p376 = por %p374, %p375
    %s378 = sadd.s32 %s377, 1
    %p381 = scmp.eq.s32.totalorder %s29, 1
    %p382 = scmp.ne.s32.totalorder %s377, %s379
    %p383 = scmp.eq.s32.totalorder %s29, 0
    %p384 = por %p382, %p383
    %p385 = scmp.ne.s32.totalorder %s377, %s379
    %p386 = scmp.eq.s32.totalorder %s34, 1
    %p387 = por %p385, %p386
    %p388 = scmp.ne.s32.totalorder %s379, %s380
    %p389 = scmp.eq.s32.totalorder %s34, 0
    %p390 = por %p388, %p389
    %p391 = scmp.ne.s32.totalorder %s379, %s380
    %p392 = scmp.eq.s32.totalorder %s35, 1
    %p393 = por %p391, %p392
    %p395 = scmp.ne.s32.totalorder %s380, %s394
    %p396 = scmp.eq.s32.totalorder %s35, 0
    %p397 = por %p395, %p396
    %s399 = sadd.s32 %s398, 1
    %p402 = scmp.eq.s32.totalorder %s29, 1
    %p403 = scmp.ne.s32.totalorder %s398, %s400
    %p404 = scmp.eq.s32.totalorder %s29, 0
    %p405 = por %p403, %p404
    %p406 = scmp.ne.s32.totalorder %s398, %s400
    %p407 = scmp.eq.s32.totalorder %s34, 1
    %p408 = por %p406, %p407
    %p409 = scmp.ne.s32.totalorder %s400, %s401
    %p410 = scmp.eq.s32.totalorder %s34, 0
    %p411 = por %p409, %p410
    %p412 = scmp.ne.s32.totalorder %s400, %s401
    %p413 = scmp.eq.s32.totalorder %s35, 1
    %p414 = por %p412, %p413
    %p416 = scmp.ne.s32.totalorder %s401, %s415
    %p417 = scmp.eq.s32.totalorder %s35, 0
    %p418 = por %p416, %p417
    %s420 = sadd.s32 %s419, 1
    %p423 = scmp.eq.s32.totalorder %s29, 1
    %p424 = scmp.ne.s32.totalorder %s419, %s421
    %p425 = scmp.eq.s32.totalorder %s29, 0
    %p426 = por %p424, %p425
    %p427 = scmp.ne.s32.totalorder %s419, %s421
    %p428 = scmp.eq.s32.totalorder %s34, 1
    %p429 = por %p427, %p428
    %p430 = scmp.ne.s32.totalorder %s421, %s422
    %p431 = scmp.eq.s32.totalorder %s34, 0
    %p432 = por %p430, %p431
    %p433 = scmp.ne.s32.totalorder %s421, %s422
    %p434 = scmp.eq.s32.totalorder %s35, 1
    %p435 = por %p433, %p434
    %p437 = scmp.ne.s32.totalorder %s422, %s436
    %p438 = scmp.eq.s32.totalorder %s35, 0
    %p439 = por %p437, %p438
    %s441 = sadd.s32 %s440, 1
    %p444 = scmp.eq.s32.totalorder %s29, 1
    %p445 = scmp.ne.s32.totalorder %s440, %s442
    %p446 = scmp.eq.s32.totalorder %s29, 0
    %p447 = por %p445, %p446
    %p448 = scmp.ne.s32.totalorder %s440, %s442
    %p449 = scmp.eq.s32.totalorder %s34, 1
    %p450 = por %p448, %p449
    %p451 = scmp.ne.s32.totalorder %s442, %s443
    %p452 = scmp.eq.s32.totalorder %s34, 0
    %p453 = por %p451, %p452
    %p454 = scmp.ne.s32.totalorder %s442, %s443
    %p455 = scmp.eq.s32.totalorder %s35, 1
    %p456 = por %p454, %p455
    %p458 = scmp.ne.s32.totalorder %s443, %s457
    %p459 = scmp.eq.s32.totalorder %s35, 0
    %p460 = por %p458, %p459
    %s462 = sadd.s32 %s461, 1
    %p465 = scmp.eq.s32.totalorder %s29, 1
    %p466 = scmp.ne.s32.totalorder %s461, %s463
    %p467 = scmp.eq.s32.totalorder %s29, 0
    %p468 = por %p466, %p467
    %p469 = scmp.ne.s32.totalorder %s461, %s463
    %p470 = scmp.eq.s32.totalorder %s34, 1
    %p471 = por %p469, %p470
    %p472 = scmp.ne.s32.totalorder %s463, %s464
    %p473 = scmp.eq.s32.totalorder %s34, 0
    %p474 = por %p472, %p473
    %p475 = scmp.ne.s32.totalorder %s463, %s464
    %p476 = scmp.eq.s32.totalorder %s35, 1
    %p477 = por %p475, %p476
    %p479 = scmp.ne.s32.totalorder %s464, %s478
    %p480 = scmp.eq.s32.totalorder %s35, 0
    %p481 = por %p479, %p480
    %s483 = sadd.s32 %s482, 1
    %p486 = scmp.eq.s32.totalorder %s29, 1
    %p487 = scmp.ne.s32.totalorder %s482, %s484
    %p488 = scmp.eq.s32.totalorder %s29, 0
    %p489 = por %p487, %p488
    %p490 = scmp.ne.s32.totalorder %s482, %s484
    %p491 = scmp.eq.s32.totalorder %s34, 1
    %p492 = por %p490, %p491
    %p493 = scmp.ne.s32.totalorder %s484, %s485
    %p494 = scmp.eq.s32.totalorder %s34, 0
    %p495 = por %p493, %p494
    %p496 = scmp.ne.s32.totalorder %s484, %s485
    %p497 = scmp.eq.s32.totalorder %s35, 1
    %p498 = por %p496, %p497
    %p500 = scmp.ne.s32.totalorder %s485, %s499
    %p501 = scmp.eq.s32.totalorder %s35, 0
    %p502 = por %p500, %p501
    %s503 = ssub.s32 %s29, %s36
    %p504 = scmp.eq.s32.totalorder %s503, 0
    %s506 = sadd.s32 %s505, 1
    %s507 = scalar_select %p504, %s505, %s506
    %p510 = pneg %p504
    %p511 = scmp.eq.s32.totalorder %s29, 1
    %p512 = por %p510, %p511
    %p513 = scmp.ne.s32.totalorder %s505, %s508
    %p514 = scmp.eq.s32.totalorder %s29, 0
    %p515 = por %p513, %p514
    %p516 = scmp.ne.s32.totalorder %s505, %s508
    %p517 = scmp.eq.s32.totalorder %s34, 1
    %p518 = por %p516, %p517
    %p519 = scmp.ne.s32.totalorder %s508, %s509
    %p520 = scmp.eq.s32.totalorder %s34, 0
    %p521 = por %p519, %p520
    %p522 = scmp.ne.s32.totalorder %s508, %s509
    %p523 = scmp.eq.s32.totalorder %s35, 1
    %p524 = por %p522, %p523
    %p526 = scmp.ne.s32.totalorder %s509, %s525
    %p527 = scmp.eq.s32.totalorder %s35, 0
    %p528 = por %p526, %p527
    %p529 = scmp.le.s32.totalorder 1, %s29
    %p530 = scmp.lt.s32.totalorder %s29, 3
    %p531 = pnand %p529, %p530
    %p532 = pneg %p531
    // Predicated region
    $region9: #{tpu_custom_call.1} parent=5 // pred_check
      _
    $region10: #{tpu_custom_call.1} parent=5 // pred_check_branch
      %534 = sbr.rel (%p531) target = $region12
    $region11: #{tpu_custom_call.1} parent=5 // pred_region
      %s535 = ssub.s32 %s29, 1
      // Predicated region
      $region13: #{tpu_custom_call.1} parent=11 // pred_check
        %p536 = pneg %p180
      $region14: #{tpu_custom_call.1} parent=11 // pred_check_branch
        %538 = sbr.rel (%p536) target = $region16
      $region15: #{tpu_custom_call.1} parent=11 // pred_region
        _
      $region16: #{tpu_custom_call.1} parent=11 // pred_fallthru
        _
      // Predicated region
      $region17: #{tpu_custom_call.1} parent=11 // pred_check
        %p539 = pneg %p201
      $region18: #{tpu_custom_call.1} parent=11 // pred_check_branch
        %541 = sbr.rel (%p539) target = $region20
      $region19: #{tpu_custom_call.1} parent=11 // pred_region
        _
      $region20: #{tpu_custom_call.1} parent=11 // pred_fallthru
        _
      // Predicated region
      $region21: #{tpu_custom_call.1} parent=11 // pred_check
        %p542 = pneg %p222
      $region22: #{tpu_custom_call.1} parent=11 // pred_check_branch
        %544 = sbr.rel (%p542) target = $region24
      $region23: #{tpu_custom_call.1} parent=11 // pred_region
        _
      $region24: #{tpu_custom_call.1} parent=11 // pred_fallthru
        _
      // Predicated region
      $region25: #{tpu_custom_call.1} parent=11 // pred_check
        %p545 = pneg %p243
      $region26: #{tpu_custom_call.1} parent=11 // pred_check_branch
        %547 = sbr.rel (%p545) target = $region28
      $region27: #{tpu_custom_call.1} parent=11 // pred_region
        _
      $region28: #{tpu_custom_call.1} parent=11 // pred_fallthru
        _
      // Predicated region
      $region29: #{tpu_custom_call.1} parent=11 // pred_check
        %p548 = pneg %p264
      $region30: #{tpu_custom_call.1} parent=11 // pred_check_branch
        %550 = sbr.rel (%p548) target = $region32
      $region31: #{tpu_custom_call.1} parent=11 // pred_region
        _
      $region32: #{tpu_custom_call.1} parent=11 // pred_fallthru
        _
      // Predicated region
      $region33: #{tpu_custom_call.1} parent=11 // pred_check
        %p551 = pneg %p285
      $region34: #{tpu_custom_call.1} parent=11 // pred_check_branch
        %553 = sbr.rel (%p551) target = $region36
      $region35: #{tpu_custom_call.1} parent=11 // pred_region
        _
      $region36: #{tpu_custom_call.1} parent=11 // pred_fallthru
        _
      // Predicated region
      $region37: #{tpu_custom_call.1} parent=11 // pred_check
        %p554 = pneg %p306
      $region38: #{tpu_custom_call.1} parent=11 // pred_check_branch
        %556 = sbr.rel (%p554) target = $region40
      $region39: #{tpu_custom_call.1} parent=11 // pred_region
        _
      $region40: #{tpu_custom_call.1} parent=11 // pred_fallthru
        _
      // Predicated region
      $region41: #{tpu_custom_call.1} parent=11 // pred_check
        %p557 = pneg %p327
      $region42: #{tpu_custom_call.1} parent=11 // pred_check_branch
        %559 = sbr.rel (%p557) target = $region44
      $region43: #{tpu_custom_call.1} parent=11 // pred_region
        _
      $region44: #{tpu_custom_call.1} parent=11 // pred_fallthru
        _
      // Predicated region
      $region45: #{tpu_custom_call.1} parent=11 // pred_check
        %p560 = pneg %p348
      $region46: #{tpu_custom_call.1} parent=11 // pred_check_branch
        %562 = sbr.rel (%p560) target = $region48
      $region47: #{tpu_custom_call.1} parent=11 // pred_region
        _
      $region48: #{tpu_custom_call.1} parent=11 // pred_fallthru
        _
      // Predicated region
      $region49: #{tpu_custom_call.1} parent=11 // pred_check
        %p563 = pneg %p369
      $region50: #{tpu_custom_call.1} parent=11 // pred_check_branch
        %565 = sbr.rel (%p563) target = $region52
      $region51: #{tpu_custom_call.1} parent=11 // pred_region
        _
      $region52: #{tpu_custom_call.1} parent=11 // pred_fallthru
        _
      // Predicated region
      $region53: #{tpu_custom_call.1} parent=11 // pred_check
        %p566 = pneg %p390
      $region54: #{tpu_custom_call.1} parent=11 // pred_check_branch
        %568 = sbr.rel (%p566) target = $region56
      $region55: #{tpu_custom_call.1} parent=11 // pred_region
        _
      $region56: #{tpu_custom_call.1} parent=11 // pred_fallthru
        _
      // Predicated region
      $region57: #{tpu_custom_call.1} parent=11 // pred_check
        %p569 = pneg %p411
      $region58: #{tpu_custom_call.1} parent=11 // pred_check_branch
        %571 = sbr.rel (%p569) target = $region60
      $region59: #{tpu_custom_call.1} parent=11 // pred_region
        _
      $region60: #{tpu_custom_call.1} parent=11 // pred_fallthru
        _
      // Predicated region
      $region61: #{tpu_custom_call.1} parent=11 // pred_check
        %p572 = pneg %p432
      $region62: #{tpu_custom_call.1} parent=11 // pred_check_branch
        %574 = sbr.rel (%p572) target = $region64
      $region63: #{tpu_custom_call.1} parent=11 // pred_region
        _
      $region64: #{tpu_custom_call.1} parent=11 // pred_fallthru
        _
      // Predicated region
      $region65: #{tpu_custom_call.1} parent=11 // pred_check
        %p575 = pneg %p453
      $region66: #{tpu_custom_call.1} parent=11 // pred_check_branch
        %577 = sbr.rel (%p575) target = $region68
      $region67: #{tpu_custom_call.1} parent=11 // pred_region
        _
      $region68: #{tpu_custom_call.1} parent=11 // pred_fallthru
        _
      // Predicated region
      $region69: #{tpu_custom_call.1} parent=11 // pred_check
        %p578 = pneg %p474
      $region70: #{tpu_custom_call.1} parent=11 // pred_check_branch
        %580 = sbr.rel (%p578) target = $region72
      $region71: #{tpu_custom_call.1} parent=11 // pred_region
        _
      $region72: #{tpu_custom_call.1} parent=11 // pred_fallthru
        _
      // Predicated region
      $region73: #{tpu_custom_call.1} parent=11 // pred_check
        %p581 = pneg %p495
      $region74: #{tpu_custom_call.1} parent=11 // pred_check_branch
        %583 = sbr.rel (%p581) target = $region76
      $region75: #{tpu_custom_call.1} parent=11 // pred_region
        _
      $region76: #{tpu_custom_call.1} parent=11 // pred_fallthru
        _
    $region12: #{tpu_custom_call.1} parent=5 // pred_fallthru
      _
    %p584 = scmp.lt.s32.totalorder %s29, 2
    // Predicated region
    $region77: #{tpu_custom_call.1} parent=5 // pred_check
      %p585 = pneg %p584
    $region78: #{tpu_custom_call.1} parent=5 // pred_check_branch
      %587 = sbr.rel (%p585) target = $region80
    $region79: #{tpu_custom_call.1} parent=5 // pred_region
      // Predicated region
      $region81: #{tpu_custom_call.1} parent=79 // pred_check
        %p588 = pneg %p49
      $region82: #{tpu_custom_call.1} parent=79 // pred_check_branch
        %590 = sbr.rel (%p588) target = $region84
      $region83: #{tpu_custom_call.1} parent=79 // pred_region
        %p591 = scmp.lt.s32.totalorder %s29, 1
        %s592 = scalar_select %p591, %s29, 1
        %s593 = smul.addr %s592, 2
        %s594 = smul.addr %s593, 8
        %s595 = scalar_lea.vmem %s0, %s594
      $region84: #{tpu_custom_call.1} parent=79 // pred_fallthru
        _
      // Predicated region
      $region85: #{tpu_custom_call.1} parent=79 // pred_check
        %p596 = pneg %p75
      $region86: #{tpu_custom_call.1} parent=79 // pred_check_branch
        %598 = sbr.rel (%p596) target = $region88
      $region87: #{tpu_custom_call.1} parent=79 // pred_region
        %p599 = scmp.lt.s32.totalorder %s29, 1
        %s600 = scalar_select %p599, %s29, 1
        %s601 = smul.addr %s600, 2
        %s602 = smul.addr %s601, 8
        %s603 = scalar_lea.vmem %s1, %s602
      $region88: #{tpu_custom_call.1} parent=79 // pred_fallthru
        _
      // Predicated region
      $region89: #{tpu_custom_call.1} parent=79 // pred_check
        %p604 = pneg %p101
      $region90: #{tpu_custom_call.1} parent=79 // pred_check_branch
        %606 = sbr.rel (%p604) target = $region92
      $region91: #{tpu_custom_call.1} parent=79 // pred_region
        %p607 = scmp.lt.s32.totalorder %s29, 1
        %s608 = scalar_select %p607, %s29, 1
        %s609 = smul.addr %s608, 4
        %s610 = smul.addr %s609, 4
        %s611 = scalar_lea.vmem %s2, %s610
      $region92: #{tpu_custom_call.1} parent=79 // pred_fallthru
        _
      // Predicated region
      $region93: #{tpu_custom_call.1} parent=79 // pred_check
        %p612 = pneg %p127
      $region94: #{tpu_custom_call.1} parent=79 // pred_check_branch
        %614 = sbr.rel (%p612) target = $region96
      $region95: #{tpu_custom_call.1} parent=79 // pred_region
        %p615 = scmp.lt.s32.totalorder %s29, 1
        %s616 = scalar_select %p615, %s29, 1
        %s617 = smul.addr %s616, 2
        %s618 = smul.addr %s617, 8
        %s619 = scalar_lea.vmem %s3, %s618
      $region96: #{tpu_custom_call.1} parent=79 // pred_fallthru
        _
      // Predicated region
      $region97: #{tpu_custom_call.1} parent=79 // pred_check
        %p620 = pneg %p153
      $region98: #{tpu_custom_call.1} parent=79 // pred_check_branch
        %622 = sbr.rel (%p620) target = $region100
      $region99: #{tpu_custom_call.1} parent=79 // pred_region
        %p623 = scmp.lt.s32.totalorder %s29, 1
        %s624 = scalar_select %p623, %s29, 1
        %s625 = smul.addr %s624, 8
        %s626 = smul.addr %s625, 8
        %s627 = scalar_lea.vmem %s4, %s626
      $region100: #{tpu_custom_call.1} parent=79 // pred_fallthru
        _
    $region80: #{tpu_custom_call.1} parent=5 // pred_fallthru
      _
    %p628 = scmp.le.s32.totalorder 1, %s29
    %p629 = scmp.lt.s32.totalorder %s29, 3
    %p630 = pnand %p628, %p629
    %p631 = pneg %p630
    // Predicated region
    $region101: #{tpu_custom_call.1} parent=5 // pred_check
      _
    $region102: #{tpu_custom_call.1} parent=5 // pred_check_branch
      %633 = sbr.rel (%p630) target = $region104
    $region103: #{tpu_custom_call.1} parent=5 // pred_region
      %s634 = ssub.s32 %s29, 1
      %p635 = scmp.lt.s32.totalorder %s34, 1
      %s636 = scalar_select %p635, %s34, 1
      %s637 = smul.addr %s636, 2
      %s638 = smul.addr %s637, 8
      %s639 = scalar_lea.vmem %s0, %s638
      %p640 = pneg %p55
      %p641 = pneg %p52
      %p642 = scmp.lt.s32.totalorder %s34, 1
      %s643 = scalar_select %p642, %s34, 1
      %s644 = smul.addr %s643, 2
      %s645 = smul.addr %s644, 8
      %s646 = scalar_lea.vmem %s1, %s645
      %p647 = pneg %p81
      %p648 = pneg %p78
      %p649 = scmp.lt.s32.totalorder %s34, 1
      %s650 = scalar_select %p649, %s34, 1
      %s651 = smul.addr %s650, 4
      %s652 = smul.addr %s651, 4
      %s653 = scalar_lea.vmem %s2, %s652
      %p654 = pneg %p107
      %p655 = pneg %p104
      %p656 = scmp.lt.s32.totalorder %s34, 1
      %s657 = scalar_select %p656, %s34, 1
      %s658 = smul.addr %s657, 2
      %s659 = smul.addr %s658, 8
      %s660 = scalar_lea.vmem %s3, %s659
      %p661 = pneg %p133
      %p662 = pneg %p130
      %p663 = scmp.lt.s32.totalorder %s34, 1
      %s664 = scalar_select %p663, %s34, 1
      %s665 = smul.addr %s664, 8
      %s666 = smul.addr %s665, 8
      %s667 = scalar_lea.vmem %s4, %s666
      %p668 = pneg %p159
      %p669 = pneg %p156
      %p670 = pneg %p180
      %p671 = pneg %p177
      %p672 = pneg %p201
      %p673 = pneg %p198
      %p674 = pneg %p222
      %p675 = pneg %p219
      %p676 = pneg %p243
      %p677 = pneg %p240
      %p678 = pneg %p264
      %p679 = pneg %p261
      %p680 = pneg %p285
      %p681 = pneg %p282
      %p682 = pneg %p306
      %p683 = pneg %p303
      %p684 = pneg %p327
      %p685 = pneg %p324
      %p686 = pneg %p348
      %p687 = pneg %p345
      %p688 = pneg %p369
      %p689 = pneg %p366
      %p690 = pneg %p390
      %p691 = pneg %p387
      %p692 = pneg %p411
      %p693 = pneg %p408
      %p694 = pneg %p432
      %p695 = pneg %p429
      %p696 = pneg %p453
      %p697 = pneg %p450
      %p698 = pneg %p474
      %p699 = pneg %p471
      %p700 = pneg %p495
      %p701 = pneg %p492
      %p702 = pneg %p521
      %p703 = pneg %p518
      %p704 = scmp.lt.s32.totalorder %s34, 1
      %s705 = scalar_select %p704, %s34, 1
      %s706 = scalar_lea.vmem %s21, %s705
      %p707 = scmp.lt.s32.totalorder %s34, 1
      %s708 = scalar_select %p707, %s34, 1
      %s709 = smul.addr %s708, 2
      %s710 = smul.addr %s709, 8
      %s711 = scalar_lea.vmem %s0, %s710
      %p712 = scmp.lt.s32.totalorder %s34, 1
      %s713 = scalar_select %p712, %s34, 1
      %s714 = smul.addr %s713, 2
      %s715 = smul.addr %s714, 8
      %s716 = scalar_lea.vmem %s1, %s715
      %p717 = scmp.lt.s32.totalorder %s34, 1
      %s718 = scalar_select %p717, %s34, 1
      %s719 = smul.addr %s718, 4
      %s720 = smul.addr %s719, 4
      %s721 = scalar_lea.vmem %s2, %s720
      %p722 = scmp.lt.s32.totalorder %s34, 1
      %s723 = scalar_select %p722, %s34, 1
      %s724 = smul.addr %s723, 2
      %s725 = smul.addr %s724, 8
      %s726 = scalar_lea.vmem %s3, %s725
      %p727 = scmp.lt.s32.totalorder %s34, 1
      %s728 = scalar_select %p727, %s34, 1
      %s729 = smul.addr %s728, 8
      %s730 = smul.addr %s729, 8
      %s731 = scalar_lea.vmem %s4, %s730
      %p732 = scmp.lt.s32.totalorder %s34, 1
      %s733 = scalar_select %p732, %s34, 1
      %s734 = scalar_lea.vmem %s21, %s733
      %v736 = vld [vmem:[%s711] sm:$0xff]
      %v737 = vld [vmem:[%s711 + $0x8] sm:$0xff]
      %v738 = vld [vmem:[%s716] sm:$0xff]
      %v739 = vld [vmem:[%s716 + $0x8] sm:$0xff]
      %v740 = vld [vmem:[%s721] sm:$0xf]
      %v741 = vld [vmem:[%s721 + $0x4] sm:$0xf]
      %v742 = vld [vmem:[%s721 + $0x8] sm:$0xf]
      %v743 = vld [vmem:[%s721 + $0xc] sm:$0xf]
      %v744 = vld [vmem:[%s726] sm:$0xff]
      %v745 = vld [vmem:[%s726 + $0x8] sm:$0xff]
      %750 = vrot.lane.b32.xlu0 %v740, 16
      %v751 = vpop.permute.xlu0 %750
      %752 = vrot.lane.b32.xlu0 %v741, 16
      %v753 = vpop.permute.xlu0 %752
      %754 = vrot.lane.b32.xlu0 %v742, 16
      %v755 = vpop.permute.xlu0 %754
      %756 = vrot.lane.b32.xlu0 %v743, 16
      %v757 = vpop.permute.xlu0 %756
      %v762 = vsub.bf16 %v740, %v751
      %v763 = vsub.bf16 %v741, %v753
      %v764 = vsub.bf16 %v742, %v755
      %v765 = vsub.bf16 %v743, %v757
      %v766 = vld [vmem:[%s5] sm:$0xff]
      %v767 = vld [vmem:[%s5 + $0x8] sm:$0xff]
      %v768 = vld [vmem:[%s5 + $0x10] sm:$0xff]
      %v769 = vld [vmem:[%s5 + $0x18] sm:$0xff]
      %v770 = vld [vmem:[%s6] sm:$0x1]
      %v772 = vlaneseq
      %v773 = vshrl.u32 %v772, 7
      %v774 = vsub.s32 0, %v773
      %v775 = vrot.slane %v770, %v774
      %vm777 = vcmask 261120
      %v779 = vsel %vm777, %v736, 0
      %v782 = vsel %vm777, %v737, 0
      %784 = vmatprep.subr.mxu0 0.0
      %785 = vmatpush1.msra.mxu0 %v766
      %786 = vmatprep.subr.mxu0 0.0
      %787 = vmatpush1.msra.mxu0 %v767
      %788 = vmatprep.subr.mxu0 0.0
      %789 = vmatpush1.msra.mxu0 %v768
      %790 = vmatprep.subr.mxu0 0.0
      %791 = vmatpush1.msra.mxu0 %v769
      %792 = vmatprep.subr.mxu0 0.0
      %793 = vmatpush1.msra.mxu0 0.0
      %794 = vmatprep.subr.mxu0 0.0
      %795 = vmatpush1.msra.mxu0 0.0
      %796 = vmatprep.subr.mxu0 0.0
      %797 = vmatpush1.msra.mxu0 0.0
      %798 = vmatprep.subr.mxu0 0.0
      %799 = vmatpush1.msra.mxu0 0.0
      %800 = vmatprep.subr.mxu0 0.0
      %801 = vmatpush1.msra.mxu0 0.0
      %802 = vmatprep.subr.mxu0 0.0
      %803 = vmatpush1.msra.mxu0 0.0
      %804 = vmatprep.subr.mxu0 0.0
      %805 = vmatpush1.msra.mxu0 0.0
      %806 = vmatprep.subr.mxu0 0.0
      %807 = vmatpush1.msra.mxu0 0.0
      %808 = vmatprep.subr.mxu0 0.0
      %809 = vmatpush1.msra.mxu0 0.0
      %810 = vmatprep.subr.mxu0 0.0
      %811 = vmatpush1.msra.mxu0 0.0
      %812 = vmatprep.subr.mxu0 0.0
      %813 = vmatpush1.msra.mxu0 0.0
      %814 = vmatprep.subr.mxu0 0.0
      %815 = vmatpush1.msra.mxu0 0.0
      %816 = vmatprep.subr.mxu0 0.0
      %817 = vmatpush1.msra.mxu0 0.0
      %818 = vmatprep.subr.mxu0 0.0
      %819 = vmatpush1.msra.mxu0 0.0
      %820 = vmatprep.subr.mxu0 0.0
      %821 = vmatpush1.msra.mxu0 0.0
      %822 = vmatprep.subr.mxu0 0.0
      %823 = vmatpush1.msra.mxu0 0.0
      %824 = vmatprep.subr.mxu0 0.0
      %825 = vmatpush1.msra.mxu0 0.0
      %826 = vmatprep.subr.mxu0 0.0
      %827 = vmatpush1.msra.mxu0 0.0
      %828 = vmatprep.subr.mxu0 0.0
      %829 = vmatpush1.msra.mxu0 0.0
      %830 = vmatprep.subr.mxu0 0.0
      %831 = vmatpush1.msra.mxu0 0.0
      %832 = vmatprep.subr.mxu0 0.0
      %833 = vmatpush1.msra.mxu0 0.0
      %834 = vmatprep.subr.mxu0 0.0
      %835 = vmatpush1.msra.mxu0 0.0
      %836 = vmatprep.subr.mxu0 0.0
      %837 = vmatpush1.msra.mxu0 0.0
      %838 = vmatprep.subr.mxu0 0.0
      %839 = vmatpush1.msra.mxu0 0.0
      %840 = vmatprep.subr.mxu0 0.0
      %841 = vmatpush1.msra.mxu0 0.0
      %842 = vmatprep.subr.mxu0 0.0
      %843 = vmatpush1.msra.mxu0 0.0
      %844 = vmatprep.subr.mxu0 0.0
      %845 = vmatpush1.msra.mxu0 0.0
      %846 = vmatprep.subr.mxu0 0.0
      %847 = vmatpush1.msra.mxu0 0.0
      %848 = vmatprep.mubr.f32.mxu0 0.0
      %849 = vmatmul.mubr.f32.gmra.mrb[0].mxu0 %v779
      %v850 = vpop.f32.mrb[0].mxu0
      %v851 = vadd.f32 %v775, %v850
      %v852 = vpop.f32.mrb[0].mxu0
      %853 = vmatprep.mubr.f32.mxu0 0.0
      %854 = vmatmul.mubr.f32.gmra.mrb[0].mxu0 %v782
      %v855 = vpop.f32.mrb[0].mxu0
      %v856 = vadd.f32 %v775, %v855
      %v857 = vpop.f32.mrb[0].mxu0
      %858 = vdwg.mxu0
      %v859 = vld [vmem:[%s7] sm:$0xff]
      %v860 = vld [vmem:[%s7 + $0x8] sm:$0xff]
      %v861 = vld [vmem:[%s7 + $0x10] sm:$0xff]
      %v862 = vld [vmem:[%s7 + $0x18] sm:$0xff]
      %v864 = vsel %vm777, %v851, 0
      %v867 = vsel %vm777, %v856, 0
      %869 = vmatprep.subr.mxu0 0.0
      %870 = vmatpush1.msra.mxu0 %v859
      %871 = vmatprep.subr.mxu0 0.0
      %872 = vmatpush1.msra.mxu0 %v860
      %873 = vmatprep.subr.mxu0 0.0
      %874 = vmatpush1.msra.mxu0 %v861
      %875 = vmatprep.subr.mxu0 0.0
      %876 = vmatpush1.msra.mxu0 %v862
      %877 = vmatprep.subr.mxu0 0.0
      %878 = vmatpush1.msra.mxu0 0.0
      %879 = vmatprep.subr.mxu0 0.0
      %880 = vmatpush1.msra.mxu0 0.0
      %881 = vmatprep.subr.mxu0 0.0
      %882 = vmatpush1.msra.mxu0 0.0
      %883 = vmatprep.subr.mxu0 0.0
      %884 = vmatpush1.msra.mxu0 0.0
      %885 = vmatprep.subr.mxu0 0.0
      %886 = vmatpush1.msra.mxu0 0.0
      %887 = vmatprep.subr.mxu0 0.0
      %888 = vmatpush1.msra.mxu0 0.0
      %889 = vmatprep.subr.mxu0 0.0
      %890 = vmatpush1.msra.mxu0 0.0
      %891 = vmatprep.subr.mxu0 0.0
      %892 = vmatpush1.msra.mxu0 0.0
      %893 = vmatprep.subr.mxu0 0.0
      %894 = vmatpush1.msra.mxu0 0.0
      %895 = vmatprep.subr.mxu0 0.0
      %896 = vmatpush1.msra.mxu0 0.0
      %897 = vmatprep.subr.mxu0 0.0
      %898 = vmatpush1.msra.mxu0 0.0
      %899 = vmatprep.subr.mxu0 0.0
      %900 = vmatpush1.msra.mxu0 0.0
      %901 = vmatprep.subr.mxu0 0.0
      %902 = vmatpush1.msra.mxu0 0.0
      %903 = vmatprep.subr.mxu0 0.0
      %904 = vmatpush1.msra.mxu0 0.0
      %905 = vmatprep.subr.mxu0 0.0
      %906 = vmatpush1.msra.mxu0 0.0
      %907 = vmatprep.subr.mxu0 0.0
      %908 = vmatpush1.msra.mxu0 0.0
      %909 = vmatprep.subr.mxu0 0.0
      %910 = vmatpush1.msra.mxu0 0.0
      %911 = vmatprep.subr.mxu0 0.0
      %912 = vmatpush1.msra.mxu0 0.0
      %913 = vmatprep.subr.mxu0 0.0
      %914 = vmatpush1.msra.mxu0 0.0
      %915 = vmatprep.subr.mxu0 0.0
      %916 = vmatpush1.msra.mxu0 0.0
      %917 = vmatprep.subr.mxu0 0.0
      %918 = vmatpush1.msra.mxu0 0.0
      %919 = vmatprep.subr.mxu0 0.0
      %920 = vmatpush1.msra.mxu0 0.0
      %921 = vmatprep.subr.mxu0 0.0
      %922 = vmatpush1.msra.mxu0 0.0
      %923 = vmatprep.subr.mxu0 0.0
      %924 = vmatpush1.msra.mxu0 0.0
      %925 = vmatprep.subr.mxu0 0.0
      %926 = vmatpush1.msra.mxu0 0.0
      %927 = vmatprep.subr.mxu0 0.0
      %928 = vmatpush1.msra.mxu0 0.0
      %929 = vmatprep.subr.mxu0 0.0
      %930 = vmatpush1.msra.mxu0 0.0
      %931 = vmatprep.subr.mxu0 0.0
      %932 = vmatpush1.msra.mxu0 0.0
      %933 = vmatprep.mubr.f32.mxu0 0.0
      %934 = vmatmul.mubr.f32.gmra.mrb[0].mxu0 %v864
      %v935 = vpop.f32.mrb[0].mxu0
      %v936 = vadd.f32 0.0, %v935
      %v937 = vpop.f32.mrb[0].mxu0
      %938 = vmatprep.mubr.f32.mxu0 0.0
      %939 = vmatmul.mubr.f32.gmra.mrb[0].mxu0 %v867
      %v940 = vpop.f32.mrb[0].mxu0
      %v941 = vadd.f32 0.0, %v940
      %v942 = vpop.f32.mrb[0].mxu0
      %943 = vdwg.mxu0
      %v944 = vld [vmem:[%s8] sm:$0xf]
      %947 = vrot.lane.b32.xlu0 %v936, 64
      %v948 = vpop.permute.xlu0 %947
      %949 = vrot.lane.b32.xlu0 %v941, 64
      %v950 = vpop.permute.xlu0 %949
      %v953 = vpack.c.bf16 %v941, %v936
      %v954 = vpack.c.bf16 %v950, %v948
      %v955 = vpack.c.bf16 %v944, %v944
      %v956 = vpack.c.bf16 %v739, %v738
      %v961 = vunpack.c.l.b16 %v762
      %v962 = vunpack.c.l.b16 %v763
      %v963 = vunpack.c.l.b16 %v764
      %v964 = vunpack.c.l.b16 %v765
      %v965 = vpack.c.b16 %v962, %v961
      %v966 = vpack.c.b16 %v964, %v963
      %967 = vrot.lane.b32.xlu0 %v965, 112
      %v968 = vpop.permute.xlu0 %967
      %969 = vrot.lane.b32.xlu0 %v966, 112
      %v970 = vpop.permute.xlu0 %969
      %vm971 = vcmask 130048
      %v973 = vsel %vm971, %v968, 0
      %v976 = vsel %vm971, %v970, 0
      %978 = vmatprep.subr.bf16.mxu0 0
      %979 = vmatpush1.bf16.msra.mxu0 %v956
      %980 = vmatprep.subr.bf16.mxu0 0
      %981 = vmatpush1.bf16.msra.mxu0 0
      %982 = vmatprep.subr.bf16.mxu0 0
      %983 = vmatpush1.bf16.msra.mxu0 0
      %984 = vmatprep.subr.bf16.mxu0 0
      %985 = vmatpush1.bf16.msra.mxu0 0
      %986 = vmatprep.subr.bf16.mxu0 0
      %987 = vmatpush1.bf16.msra.mxu0 0
      %988 = vmatprep.subr.bf16.mxu0 0
      %989 = vmatpush1.bf16.msra.mxu0 0
      %990 = vmatprep.subr.bf16.mxu0 0
      %991 = vmatpush1.bf16.msra.mxu0 0
      %992 = vmatprep.subr.bf16.mxu0 0
      %993 = vmatpush1.bf16.msra.mxu0 0
      %994 = vmatprep.subr.bf16.mxu0 0
      %995 = vmatpush1.bf16.msra.mxu0 0
      %996 = vmatprep.subr.bf16.mxu0 0
      %997 = vmatpush1.bf16.msra.mxu0 0
      %998 = vmatprep.subr.bf16.mxu0 0
      %999 = vmatpush1.bf16.msra.mxu0 0
      %1000 = vmatprep.subr.bf16.mxu0 0
      %1001 = vmatpush1.bf16.msra.mxu0 0
      %1002 = vmatprep.subr.bf16.mxu0 0
      %1003 = vmatpush1.bf16.msra.mxu0 0
      %1004 = vmatprep.subr.bf16.mxu0 0
      %1005 = vmatpush1.bf16.msra.mxu0 0
      %1006 = vmatprep.subr.bf16.mxu0 0
      %1007 = vmatpush1.bf16.msra.mxu0 0
      %1008 = vmatprep.subr.bf16.mxu0 0
      %1009 = vmatpush1.bf16.msra.mxu0 0
      %1010 = vmatprep.mubr.bf16.mxu0 0
      %1011 = vmatmul.mubr.bf16.gmra.mrb[0].mxu0 %v973
      %v1012 = vpop.f32.mrb[0].mxu0
      %v1013 = vadd.f32 0.0, %v1012
      %v1014 = vpop.f32.mrb[0].mxu0
      %v1015 = vpop.f32.mrb[0].mxu0
      %v1016 = vadd.f32 0.0, %v1015
      %v1017 = vpop.f32.mrb[0].mxu0
      %1018 = vmatprep.mubr.bf16.mxu0 0
      %1019 = vmatmul.mubr.bf16.gmra.mrb[0].mxu0 %v976
      %v1020 = vpop.f32.mrb[0].mxu0
      %v1021 = vadd.f32 0.0, %v1020
      %v1022 = vpop.f32.mrb[0].mxu0
      %v1023 = vpop.f32.mrb[0].mxu0
      %v1024 = vadd.f32 0.0, %v1023
      %v1025 = vpop.f32.mrb[0].mxu0
      %1026 = vdwg.mxu0
      %v1027 = vmul.f32 %v1013, %v1013
      %v1028 = vmul.f32 %v1016, %v1016
      %v1029 = vmul.f32 %v1021, %v1021
      %v1030 = vmul.f32 %v1024, %v1024
      %vm1031 = vcmask 23552
      %v1032 = vsel %vm1031, %v1027, 0.0
      %1033 = vadd.xlane.f32.xlu0 %v1032
      %v1034 = vpop.xlane.xlu0 %1033
      %v1035 = vsel %vm1031, %v1028, 0.0
      %1036 = vadd.xlane.f32.xlu0 %v1035
      %v1037 = vpop.xlane.xlu0 %1036
      %v1038 = vsel %vm1031, %v1029, 0.0
      %1039 = vadd.xlane.f32.xlu0 %v1038
      %v1040 = vpop.xlane.xlu0 %1039
      %v1041 = vsel %vm1031, %v1030, 0.0
      %1042 = vadd.xlane.f32.xlu0 %v1041
      %v1043 = vpop.xlane.xlu0 %1042
      %v1044 = vrsqrt.pop %v1034
      %v1045 = vmul.f32 %v1034, %v1044
      %vm1046 = vcmp.eq.f32.partialorder %v1034, inf
      %v1047 = vsel %vm1046, %v1034, %v1045
      %vm1048 = vcmp.eq.f32.partialorder %v1034, 0.0
      %v1049 = vand.u32 %v1034, 2147483648
      %v1050 = vsel %vm1048, %v1049, %v1047
      %v1051 = vrsqrt.pop %v1037
      %v1052 = vmul.f32 %v1037, %v1051
      %vm1053 = vcmp.eq.f32.partialorder %v1037, inf
      %v1054 = vsel %vm1053, %v1037, %v1052
      %vm1055 = vcmp.eq.f32.partialorder %v1037, 0.0
      %v1056 = vand.u32 %v1037, 2147483648
      %v1057 = vsel %vm1055, %v1056, %v1054
      %v1058 = vrsqrt.pop %v1040
      %v1059 = vmul.f32 %v1040, %v1058
      %vm1060 = vcmp.eq.f32.partialorder %v1040, inf
      %v1061 = vsel %vm1060, %v1040, %v1059
      %vm1062 = vcmp.eq.f32.partialorder %v1040, 0.0
      %v1063 = vand.u32 %v1040, 2147483648
      %v1064 = vsel %vm1062, %v1063, %v1061
      %v1065 = vrsqrt.pop %v1043
      %v1066 = vmul.f32 %v1043, %v1065
      %vm1067 = vcmp.eq.f32.partialorder %v1043, inf
      %v1068 = vsel %vm1067, %v1043, %v1066
      %vm1069 = vcmp.eq.f32.partialorder %v1043, 0.0
      %v1070 = vand.u32 %v1043, 2147483648
      %v1071 = vsel %vm1069, %v1070, %v1068
      %v1072 = vld [vmem:[%s9] sm:$0x1]
      %v1074 = vlaneseq
      %v1075 = vshrl.u32 %v1074, 7
      %v1076 = vsub.s32 0, %v1075
      %v1077 = vrot.slane %v1072, %v1076
      %v1079 = vmul.f32 %v1050, %v1077
      %v1080 = vmul.f32 %v1057, %v1077
      %v1081 = vmul.f32 %v1064, %v1077
      %v1082 = vmul.f32 %v1071, %v1077
      %v1083 = vunpack.c.l.b16 %v740
      %v1084 = vunpack.c.l.b16 %v741
      %v1085 = vunpack.c.l.b16 %v742
      %v1086 = vunpack.c.l.b16 %v743
      %v1087 = vpack.c.b16 %v1084, %v1083
      %v1088 = vpack.c.b16 %v1086, %v1085
      %vm1089 = vcmask 293888
      %v1091 = vsel %vm1089, %v1087, 0
      %v1094 = vsel %vm1089, %v1088, 0
      %vm1096 = vcmask 1041408
      %v1098 = vsel %vm1096, %v955, 0
      %1100 = vmatprep.subr.bf16.mxu0 0
      %1101 = vmatpush1.bf16.msra.mxu0 %v953
      %1102 = vmatprep.subr.bf16.mxu0 0
      %1103 = vmatpush1.bf16.msra.mxu0 %v954
      %1104 = vmatprep.subr.bf16.mxu0 0
      %1105 = vmatpush1.bf16.msra.mxu0 %v1098
      %1106 = vmatprep.subr.bf16.mxu0 0
      %1107 = vmatpush1.bf16.msra.mxu0 0
      %1108 = vmatprep.subr.bf16.mxu0 0
      %1109 = vmatpush1.bf16.msra.mxu0 0
      %1110 = vmatprep.subr.bf16.mxu0 0
      %1111 = vmatpush1.bf16.msra.mxu0 0
      %1112 = vmatprep.subr.bf16.mxu0 0
      %1113 = vmatpush1.bf16.msra.mxu0 0
      %1114 = vmatprep.subr.bf16.mxu0 0
      %1115 = vmatpush1.bf16.msra.mxu0 0
      %1116 = vmatprep.subr.bf16.mxu0 0
      %1117 = vmatpush1.bf16.msra.mxu0 0
      %1118 = vmatprep.subr.bf16.mxu0 0
      %1119 = vmatpush1.bf16.msra.mxu0 0
      %1120 = vmatprep.subr.bf16.mxu0 0
      %1121 = vmatpush1.bf16.msra.mxu0 0
      %1122 = vmatprep.subr.bf16.mxu0 0
      %1123 = vmatpush1.bf16.msra.mxu0 0
      %1124 = vmatprep.subr.bf16.mxu0 0
      %1125 = vmatpush1.bf16.msra.mxu0 0
      %1126 = vmatprep.subr.bf16.mxu0 0
      %1127 = vmatpush1.bf16.msra.mxu0 0
      %1128 = vmatprep.subr.bf16.mxu0 0
      %1129 = vmatpush1.bf16.msra.mxu0 0
      %1130 = vmatprep.subr.bf16.mxu0 0
      %1131 = vmatpush1.bf16.msra.mxu0 0
      %1132 = vmatprep.mubr.bf16.mxu0 0
      %1133 = vmatmul.mubr.bf16.gmra.mrb[0].mxu0 %v1091
      %v1134 = vpop.f32.mrb[0].mxu0
      %v1135 = vadd.f32 %v1079, %v1134
      %v1136 = vpop.f32.mrb[0].mxu0
      %v1137 = vpop.f32.mrb[0].mxu0
      %v1138 = vadd.f32 %v1080, %v1137
      %v1139 = vpop.f32.mrb[0].mxu0
      %1140 = vmatprep.mubr.bf16.mxu0 0
      %1141 = vmatmul.mubr.bf16.gmra.mrb[0].mxu0 %v1094
      %v1142 = vpop.f32.mrb[0].mxu0
      %v1143 = vadd.f32 %v1081, %v1142
      %v1144 = vpop.f32.mrb[0].mxu0
      %v1145 = vpop.f32.mrb[0].mxu0
      %v1146 = vadd.f32 %v1082, %v1145
      %v1147 = vpop.f32.mrb[0].mxu0
      %1148 = vdwg.mxu0
      %v1149 = vld [vmem:[%s10] sm:$0x1]
      %v1151 = vlaneseq
      %v1152 = vshrl.u32 %v1151, 7
      %v1153 = vsub.s32 0, %v1152
      %v1154 = vrot.slane %v1149, %v1153
      %v1156 = vadd.f32 %v1135, %v1154
      %v1157 = vadd.f32 %v1138, %v1154
      %v1158 = vadd.f32 %v1143, %v1154
      %v1159 = vadd.f32 %v1146, %v1154
      %v1160 = vsub.f32 0.0, %v1156
      %v1161 = vsub.f32 0.0, %v1157
      %v1162 = vsub.f32 0.0, %v1158
      %v1163 = vsub.f32 0.0, %v1159
      %v1164 = vmul.f32 %v1160, 1.442695
      %v1165 = vpow.pop %v1164
      %v1166 = vmul.f32 %v1161, 1.442695
      %v1167 = vpow.pop %v1166
      %v1168 = vmul.f32 %v1162, 1.442695
      %v1169 = vpow.pop %v1168
      %v1170 = vmul.f32 %v1163, 1.442695
      %v1171 = vpow.pop %v1170
      %v1172 = vadd.f32 %v1165, 1.0
      %v1173 = vadd.f32 %v1167, 1.0
      %v1174 = vadd.f32 %v1169, 1.0
      %v1175 = vadd.f32 %v1171, 1.0
      %v1176 = vrcp.pop %v1172
      %v1177 = vrcp.pop %v1173
      %v1178 = vrcp.pop %v1174
      %v1179 = vrcp.pop %v1175
      %v1180 = vmul.f32 %v1156, %v1176
      %v1181 = vmul.f32 %v1157, %v1177
      %v1182 = vmul.f32 %v1158, %v1178
      %v1183 = vmul.f32 %v1159, %v1179
      %v1184 = vld [vmem:[%s11] sm:$0xff]
      %v1185 = vld [vmem:[%s11 + $0x8] sm:$0xff]
      %v1186 = vld [vmem:[%s11 + $0x10] sm:$0xff]
      %v1187 = vld [vmem:[%s11 + $0x18] sm:$0xff]
      %v1188 = vld [vmem:[%s11 + $0x20] sm:$0xff]
      %v1189 = vld [vmem:[%s11 + $0x28] sm:$0xff]
      %v1190 = vld [vmem:[%s11 + $0x30] sm:$0xff]
      %v1191 = vld [vmem:[%s11 + $0x38] sm:$0xff]
      %v1192 = vld [vmem:[%s12] sm:$0x1]
      %v1194 = vlaneseq
      %v1195 = vshrl.u32 %v1194, 7
      %v1196 = vsub.s32 0, %v1195
      %v1197 = vrot.slane %v1192, %v1196
      %vm1199 = vcmask 523264
      %v1201 = vsel %vm1199, %v1180, 0
      %v1204 = vsel %vm1199, %v1181, 0
      %v1207 = vsel %vm1199, %v1182, 0
      %v1210 = vsel %vm1199, %v1183, 0
      %1212 = vmatprep.subr.mxu0 0.0
      %1213 = vmatpush1.msra.mxu0 %v1184
      %1214 = vmatprep.subr.mxu0 0.0
      %1215 = vmatpush1.msra.mxu0 %v1185
      %1216 = vmatprep.subr.mxu0 0.0
      %1217 = vmatpush1.msra.mxu0 %v1186
      %1218 = vmatprep.subr.mxu0 0.0
      %1219 = vmatpush1.msra.mxu0 %v1187
      %1220 = vmatprep.subr.mxu0 0.0
      %1221 = vmatpush1.msra.mxu0 %v1188
      %1222 = vmatprep.subr.mxu0 0.0
      %1223 = vmatpush1.msra.mxu0 %v1189
      %1224 = vmatprep.subr.mxu0 0.0
      %1225 = vmatpush1.msra.mxu0 %v1190
      %1226 = vmatprep.subr.mxu0 0.0
      %1227 = vmatpush1.msra.mxu0 %v1191
      %1228 = vmatprep.subr.mxu0 0.0
      %1229 = vmatpush1.msra.mxu0 0.0
      %1230 = vmatprep.subr.mxu0 0.0
      %1231 = vmatpush1.msra.mxu0 0.0
      %1232 = vmatprep.subr.mxu0 0.0
      %1233 = vmatpush1.msra.mxu0 0.0
      %1234 = vmatprep.subr.mxu0 0.0
      %1235 = vmatpush1.msra.mxu0 0.0
      %1236 = vmatprep.subr.mxu0 0.0
      %1237 = vmatpush1.msra.mxu0 0.0
      %1238 = vmatprep.subr.mxu0 0.0
      %1239 = vmatpush1.msra.mxu0 0.0
      %1240 = vmatprep.subr.mxu0 0.0
      %1241 = vmatpush1.msra.mxu0 0.0
      %1242 = vmatprep.subr.mxu0 0.0
      %1243 = vmatpush1.msra.mxu0 0.0
      %1244 = vmatprep.subr.mxu0 0.0
      %1245 = vmatpush1.msra.mxu0 0.0
      %1246 = vmatprep.subr.mxu0 0.0
      %1247 = vmatpush1.msra.mxu0 0.0
      %1248 = vmatprep.subr.mxu0 0.0
      %1249 = vmatpush1.msra.mxu0 0.0
      %1250 = vmatprep.subr.mxu0 0.0
      %1251 = vmatpush1.msra.mxu0 0.0
      %1252 = vmatprep.subr.mxu0 0.0
      %1253 = vmatpush1.msra.mxu0 0.0
      %1254 = vmatprep.subr.mxu0 0.0
      %1255 = vmatpush1.msra.mxu0 0.0
      %1256 = vmatprep.subr.mxu0 0.0
      %1257 = vmatpush1.msra.mxu0 0.0
      %1258 = vmatprep.subr.mxu0 0.0
      %1259 = vmatpush1.msra.mxu0 0.0
      %1260 = vmatprep.subr.mxu0 0.0
      %1261 = vmatpush1.msra.mxu0 0.0
      %1262 = vmatprep.subr.mxu0 0.0
      %1263 = vmatpush1.msra.mxu0 0.0
      %1264 = vmatprep.subr.mxu0 0.0
      %1265 = vmatpush1.msra.mxu0 0.0
      %1266 = vmatprep.subr.mxu0 0.0
      %1267 = vmatpush1.msra.mxu0 0.0
      %1268 = vmatprep.subr.mxu0 0.0
      %1269 = vmatpush1.msra.mxu0 0.0
      %1270 = vmatprep.subr.mxu0 0.0
      %1271 = vmatpush1.msra.mxu0 0.0
      %1272 = vmatprep.subr.mxu0 0.0
      %1273 = vmatpush1.msra.mxu0 0.0
      %1274 = vmatprep.subr.mxu0 0.0
      %1275 = vmatpush1.msra.mxu0 0.0
      %1276 = vmatprep.mubr.f32.mxu0 0.0
      %1277 = vmatmul.mubr.f32.gmra.mrb[0].mxu0 %v1201
      %v1278 = vpop.f32.mrb[0].mxu0
      %v1279 = vadd.f32 %v1197, %v1278
      %v1280 = vpop.f32.mrb[0].mxu0
      %1281 = vmatprep.mubr.f32.mxu0 0.0
      %1282 = vmatmul.mubr.f32.gmra.mrb[0].mxu0 %v1204
      %v1283 = vpop.f32.mrb[0].mxu0
      %v1284 = vadd.f32 %v1197, %v1283
      %v1285 = vpop.f32.mrb[0].mxu0
      %1286 = vmatprep.mubr.f32.mxu0 0.0
      %1287 = vmatmul.mubr.f32.gmra.mrb[0].mxu0 %v1207
      %v1288 = vpop.f32.mrb[0].mxu0
      %v1289 = vadd.f32 %v1197, %v1288
      %v1290 = vpop.f32.mrb[0].mxu0
      %1291 = vmatprep.mubr.f32.mxu0 0.0
      %1292 = vmatmul.mubr.f32.gmra.mrb[0].mxu0 %v1210
      %v1293 = vpop.f32.mrb[0].mxu0
      %v1294 = vadd.f32 %v1197, %v1293
      %v1295 = vpop.f32.mrb[0].mxu0
      %1296 = vdwg.mxu0
      %v1297 = vpack.c.bf16 %v1284, %v1279
      %v1298 = vpack.c.bf16 %v1294, %v1289
      %1301 = vxpose.xlu0.c.b16.start [1/8] %v1087, 128
      %1302 = vxpose.xlu0.c.b16.cont [2/8] %v1088, 128
      %1303 = vxpose.xlu0.c.b16.cont [3/8] 0, 128
      %1304 = vxpose.xlu0.c.b16.cont [4/8] 0, 128
      %1305 = vxpose.xlu0.c.b16.cont [5/8] 0, 128
      %1306 = vxpose.xlu0.c.b16.cont [6/8] 0, 128
      %1307 = vxpose.xlu0.c.b16.cont [7/8] 0, 128
      %1308 = vxpose.xlu0.c.b16.end [8/8] 0, 128
      %v1309 = vpop.trf.xlu0
      %v1310 = vpop.trf.xlu0
      %v1311 = vpop.trf.xlu0
      %v1312 = vpop.trf.xlu0
      %v1313 = vpop.trf.xlu0
      %v1314 = vpop.trf.xlu0
      %v1315 = vpop.trf.xlu0
      %v1316 = vpop.trf.xlu0
      %v1318 = vsel %vm777, %v1309, 0
      %1320 = vmatprep.subr.bf16.mxu0 0
      %1321 = vmatpush1.bf16.msra.mxu0 %v1297
      %1322 = vmatprep.subr.bf16.mxu0 0
      %1323 = vmatpush1.bf16.msra.mxu0 %v1298
      %1324 = vmatprep.subr.bf16.mxu0 0
      %1325 = vmatpush1.bf16.msra.mxu0 0
      %1326 = vmatprep.subr.bf16.mxu0 0
      %1327 = vmatpush1.bf16.msra.mxu0 0
      %1328 = vmatprep.subr.bf16.mxu0 0
      %1329 = vmatpush1.bf16.msra.mxu0 0
      %1330 = vmatprep.subr.bf16.mxu0 0
      %1331 = vmatpush1.bf16.msra.mxu0 0
      %1332 = vmatprep.subr.bf16.mxu0 0
      %1333 = vmatpush1.bf16.msra.mxu0 0
      %1334 = vmatprep.subr.bf16.mxu0 0
      %1335 = vmatpush1.bf16.msra.mxu0 0
      %1336 = vmatprep.subr.bf16.mxu0 0
      %1337 = vmatpush1.bf16.msra.mxu0 0
      %1338 = vmatprep.subr.bf16.mxu0 0
      %1339 = vmatpush1.bf16.msra.mxu0 0
      %1340 = vmatprep.subr.bf16.mxu0 0
      %1341 = vmatpush1.bf16.msra.mxu0 0
      %1342 = vmatprep.subr.bf16.mxu0 0
      %1343 = vmatpush1.bf16.msra.mxu0 0
      %1344 = vmatprep.subr.bf16.mxu0 0
      %1345 = vmatpush1.bf16.msra.mxu0 0
      %1346 = vmatprep.subr.bf16.mxu0 0
      %1347 = vmatpush1.bf16.msra.mxu0 0
      %1348 = vmatprep.subr.bf16.mxu0 0
      %1349 = vmatpush1.bf16.msra.mxu0 0
      %1350 = vmatprep.subr.bf16.mxu0 0
      %1351 = vmatpush1.bf16.msra.mxu0 0
      %1352 = vmatprep.mubr.bf16.mxu0 0
      %1353 = vmatmul.mubr.bf16.gmra.mrb[0].mxu0 %v1318
      %v1354 = vpop.f32.mrb[0].mxu0
      %v1355 = vadd.f32 0.0, %v1354
      %v1356 = vpop.f32.mrb[0].mxu0
      %v1357 = vpop.f32.mrb[0].mxu0
      %v1358 = vadd.f32 0.0, %v1357
      %v1359 = vpop.f32.mrb[0].mxu0
      %1360 = vdwg.mxu0
      %1362 = vset.pattern.permute.xlu0 0
      %1363 = vperm.xlu0 %1362, %v744
      %v1364 = vpop.permute.xlu0 %1363
      %1367 = vset.pattern.permute.xlu0 0
      %1368 = vperm.xlu0 %1367, %v745
      %v1369 = vpop.permute.xlu0 %1368
      %v1371 = vmul.f32 %v1355, %v1364
      %v1372 = vmul.f32 %v1358, %v1369
      %v1373 = vadd.f32 %v851, %v1371
      %v1374 = vadd.f32 %v856, %v1372
      %v1375 = vld [vmem:[%s13] sm:$0xff]
      %v1376 = vld [vmem:[%s13 + $0x8] sm:$0xff]
      %v1377 = vld [vmem:[%s13 + $0x10] sm:$0xff]
      %v1378 = vld [vmem:[%s13 + $0x18] sm:$0xff]
      %v1379 = vld [vmem:[%s14] sm:$0x1]
      %v1381 = vlaneseq
      %v1382 = vshrl.u32 %v1381, 7
      %v1383 = vsub.s32 0, %v1382
      %v1384 = vrot.slane %v1379, %v1383
      %v1387 = vsel %vm777, %v1371, 0
      %v1390 = vsel %vm777, %v1372, 0
      %1392 = vmatprep.subr.mxu0 0.0
      %1393 = vmatpush1.msra.mxu0 %v1375
      %1394 = vmatprep.subr.mxu0 0.0
      %1395 = vmatpush1.msra.mxu0 %v1376
      %1396 = vmatprep.subr.mxu0 0.0
      %1397 = vmatpush1.msra.mxu0 %v1377
      %1398 = vmatprep.subr.mxu0 0.0
      %1399 = vmatpush1.msra.mxu0 %v1378
      %1400 = vmatprep.subr.mxu0 0.0
      %1401 = vmatpush1.msra.mxu0 0.0
      %1402 = vmatprep.subr.mxu0 0.0
      %1403 = vmatpush1.msra.mxu0 0.0
      %1404 = vmatprep.subr.mxu0 0.0
      %1405 = vmatpush1.msra.mxu0 0.0
      %1406 = vmatprep.subr.mxu0 0.0
      %1407 = vmatpush1.msra.mxu0 0.0
      %1408 = vmatprep.subr.mxu0 0.0
      %1409 = vmatpush1.msra.mxu0 0.0
      %1410 = vmatprep.subr.mxu0 0.0
      %1411 = vmatpush1.msra.mxu0 0.0
      %1412 = vmatprep.subr.mxu0 0.0
      %1413 = vmatpush1.msra.mxu0 0.0
      %1414 = vmatprep.subr.mxu0 0.0
      %1415 = vmatpush1.msra.mxu0 0.0
      %1416 = vmatprep.subr.mxu0 0.0
      %1417 = vmatpush1.msra.mxu0 0.0
      %1418 = vmatprep.subr.mxu0 0.0
      %1419 = vmatpush1.msra.mxu0 0.0
      %1420 = vmatprep.subr.mxu0 0.0
      %1421 = vmatpush1.msra.mxu0 0.0
      %1422 = vmatprep.subr.mxu0 0.0
      %1423 = vmatpush1.msra.mxu0 0.0
      %1424 = vmatprep.subr.mxu0 0.0
      %1425 = vmatpush1.msra.mxu0 0.0
      %1426 = vmatprep.subr.mxu0 0.0
      %1427 = vmatpush1.msra.mxu0 0.0
      %1428 = vmatprep.subr.mxu0 0.0
      %1429 = vmatpush1.msra.mxu0 0.0
      %1430 = vmatprep.subr.mxu0 0.0
      %1431 = vmatpush1.msra.mxu0 0.0
      %1432 = vmatprep.subr.mxu0 0.0
      %1433 = vmatpush1.msra.mxu0 0.0
      %1434 = vmatprep.subr.mxu0 0.0
      %1435 = vmatpush1.msra.mxu0 0.0
      %1436 = vmatprep.subr.mxu0 0.0
      %1437 = vmatpush1.msra.mxu0 0.0
      %1438 = vmatprep.subr.mxu0 0.0
      %1439 = vmatpush1.msra.mxu0 0.0
      %1440 = vmatprep.subr.mxu0 0.0
      %1441 = vmatpush1.msra.mxu0 0.0
      %1442 = vmatprep.subr.mxu0 0.0
      %1443 = vmatpush1.msra.mxu0 0.0
      %1444 = vmatprep.subr.mxu0 0.0
      %1445 = vmatpush1.msra.mxu0 0.0
      %1446 = vmatprep.subr.mxu0 0.0
      %1447 = vmatpush1.msra.mxu0 0.0
      %1448 = vmatprep.subr.mxu0 0.0
      %1449 = vmatpush1.msra.mxu0 0.0
      %1450 = vmatprep.subr.mxu0 0.0
      %1451 = vmatpush1.msra.mxu0 0.0
      %1452 = vmatprep.subr.mxu0 0.0
      %1453 = vmatpush1.msra.mxu0 0.0
      %1454 = vmatprep.subr.mxu0 0.0
      %1455 = vmatpush1.msra.mxu0 0.0
      %1456 = vmatprep.mubr.f32.mxu0 0.0
      %1457 = vmatmul.mubr.f32.gmra.mrb[0].mxu0 %v1387
      %v1458 = vpop.f32.mrb[0].mxu0
      %v1459 = vadd.f32 %v1384, %v1458
      %v1460 = vpop.f32.mrb[0].mxu0
      %1461 = vmatprep.mubr.f32.mxu0 0.0
      %1462 = vmatmul.mubr.f32.gmra.mrb[0].mxu0 %v1390
      %v1463 = vpop.f32.mrb[0].mxu0
      %v1464 = vadd.f32 %v1384, %v1463
      %v1465 = vpop.f32.mrb[0].mxu0
      %1466 = vdwg.mxu0
      %v1467 = vsub.f32 0.0, %v1459
      %v1468 = vsub.f32 0.0, %v1464
      %v1469 = vmul.f32 %v1467, 1.442695
      %v1470 = vpow.pop %v1469
      %v1471 = vmul.f32 %v1468, 1.442695
      %v1472 = vpow.pop %v1471
      %v1473 = vadd.f32 %v1470, 1.0
      %v1474 = vadd.f32 %v1472, 1.0
      %v1475 = vrcp.pop %v1473
      %v1476 = vrcp.pop %v1474
      %v1477 = vmul.f32 %v1459, %v1475
      %v1478 = vmul.f32 %v1464, %v1476
      %v1479 = vld [vmem:[%s15] sm:$0xff]
      %v1480 = vld [vmem:[%s15 + $0x8] sm:$0xff]
      %v1481 = vld [vmem:[%s15 + $0x10] sm:$0xff]
      %v1482 = vld [vmem:[%s15 + $0x18] sm:$0xff]
      %v1483 = vld [vmem:[%s16] sm:$0x1]
      %v1485 = vlaneseq
      %v1486 = vshrl.u32 %v1485, 7
      %v1487 = vsub.s32 0, %v1486
      %v1488 = vrot.slane %v1483, %v1487
      %v1491 = vsel %vm777, %v1477, 0
      %v1494 = vsel %vm777, %v1478, 0
      %1496 = vmatprep.subr.mxu0 0.0
      %1497 = vmatpush1.msra.mxu0 %v1479
      %1498 = vmatprep.subr.mxu0 0.0
      %1499 = vmatpush1.msra.mxu0 %v1480
      %1500 = vmatprep.subr.mxu0 0.0
      %1501 = vmatpush1.msra.mxu0 %v1481
      %1502 = vmatprep.subr.mxu0 0.0
      %1503 = vmatpush1.msra.mxu0 %v1482
      %1504 = vmatprep.subr.mxu0 0.0
      %1505 = vmatpush1.msra.mxu0 0.0
      %1506 = vmatprep.subr.mxu0 0.0
      %1507 = vmatpush1.msra.mxu0 0.0
      %1508 = vmatprep.subr.mxu0 0.0
      %1509 = vmatpush1.msra.mxu0 0.0
      %1510 = vmatprep.subr.mxu0 0.0
      %1511 = vmatpush1.msra.mxu0 0.0
      %1512 = vmatprep.subr.mxu0 0.0
      %1513 = vmatpush1.msra.mxu0 0.0
      %1514 = vmatprep.subr.mxu0 0.0
      %1515 = vmatpush1.msra.mxu0 0.0
      %1516 = vmatprep.subr.mxu0 0.0
      %1517 = vmatpush1.msra.mxu0 0.0
      %1518 = vmatprep.subr.mxu0 0.0
      %1519 = vmatpush1.msra.mxu0 0.0
      %1520 = vmatprep.subr.mxu0 0.0
      %1521 = vmatpush1.msra.mxu0 0.0
      %1522 = vmatprep.subr.mxu0 0.0
      %1523 = vmatpush1.msra.mxu0 0.0
      %1524 = vmatprep.subr.mxu0 0.0
      %1525 = vmatpush1.msra.mxu0 0.0
      %1526 = vmatprep.subr.mxu0 0.0
      %1527 = vmatpush1.msra.mxu0 0.0
      %1528 = vmatprep.subr.mxu0 0.0
      %1529 = vmatpush1.msra.mxu0 0.0
      %1530 = vmatprep.subr.mxu0 0.0
      %1531 = vmatpush1.msra.mxu0 0.0
      %1532 = vmatprep.subr.mxu0 0.0
      %1533 = vmatpush1.msra.mxu0 0.0
      %1534 = vmatprep.subr.mxu0 0.0
      %1535 = vmatpush1.msra.mxu0 0.0
      %1536 = vmatprep.subr.mxu0 0.0
      %1537 = vmatpush1.msra.mxu0 0.0
      %1538 = vmatprep.subr.mxu0 0.0
      %1539 = vmatpush1.msra.mxu0 0.0
      %1540 = vmatprep.subr.mxu0 0.0
      %1541 = vmatpush1.msra.mxu0 0.0
      %1542 = vmatprep.subr.mxu0 0.0
      %1543 = vmatpush1.msra.mxu0 0.0
      %1544 = vmatprep.subr.mxu0 0.0
      %1545 = vmatpush1.msra.mxu0 0.0
      %1546 = vmatprep.subr.mxu0 0.0
      %1547 = vmatpush1.msra.mxu0 0.0
      %1548 = vmatprep.subr.mxu0 0.0
      %1549 = vmatpush1.msra.mxu0 0.0
      %1550 = vmatprep.subr.mxu0 0.0
      %1551 = vmatpush1.msra.mxu0 0.0
      %1552 = vmatprep.subr.mxu0 0.0
      %1553 = vmatpush1.msra.mxu0 0.0
      %1554 = vmatprep.subr.mxu0 0.0
      %1555 = vmatpush1.msra.mxu0 0.0
      %1556 = vmatprep.subr.mxu0 0.0
      %1557 = vmatpush1.msra.mxu0 0.0
      %1558 = vmatprep.subr.mxu0 0.0
      %1559 = vmatpush1.msra.mxu0 0.0
      %1560 = vmatprep.mubr.f32.mxu0 0.0
      %1561 = vmatmul.mubr.f32.gmra.mrb[0].mxu0 %v1491
      %v1562 = vpop.f32.mrb[0].mxu0
      %v1563 = vadd.f32 %v1488, %v1562
      %v1564 = vpop.f32.mrb[0].mxu0
      %1565 = vmatprep.mubr.f32.mxu0 0.0
      %1566 = vmatmul.mubr.f32.gmra.mrb[0].mxu0 %v1494
      %v1567 = vpop.f32.mrb[0].mxu0
      %v1568 = vadd.f32 %v1488, %v1567
      %v1569 = vpop.f32.mrb[0].mxu0
      %1570 = vdwg.mxu0
      %v1571 = vld [vmem:[%s731] sm:$0xff]
      %v1572 = vld [vmem:[%s731 + $0x8] sm:$0xff]
      %1574 = vset.pattern.permute.xlu0 0
      %1575 = vperm.xlu0 %1574, %v1563
      %v1576 = vpop.permute.xlu0 %1575
      %1579 = vset.pattern.permute.xlu0 0
      %1580 = vperm.xlu0 %1579, %v1568
      %v1581 = vpop.permute.xlu0 %1580
      %v1583 = vmul.f32 %v1576, %v1571
      %v1584 = vmul.f32 %v1581, %v1572
      %v1585 = vadd.f32 %v738, %v1583
      %v1586 = vadd.f32 %v739, %v1584
      %s1587 = scalar_lea.vmem %s7, 32
      %v1588 = vld [vmem:[%s1587] sm:$0xff]
      %v1589 = vld [vmem:[%s1587 + $0x8] sm:$0xff]
      %v1590 = vld [vmem:[%s1587 + $0x10] sm:$0xff]
      %v1591 = vld [vmem:[%s1587 + $0x18] sm:$0xff]
      %v1593 = vsel %vm777, %v1373, 0
      %v1596 = vsel %vm777, %v1374, 0
      %1598 = vmatprep.subr.mxu0 0.0
      %1599 = vmatpush1.msra.mxu0 %v1588
      %1600 = vmatprep.subr.mxu0 0.0
      %1601 = vmatpush1.msra.mxu0 %v1589
      %1602 = vmatprep.subr.mxu0 0.0
      %1603 = vmatpush1.msra.mxu0 %v1590
      %1604 = vmatprep.subr.mxu0 0.0
      %1605 = vmatpush1.msra.mxu0 %v1591
      %1606 = vmatprep.subr.mxu0 0.0
      %1607 = vmatpush1.msra.mxu0 0.0
      %1608 = vmatprep.subr.mxu0 0.0
      %1609 = vmatpush1.msra.mxu0 0.0
      %1610 = vmatprep.subr.mxu0 0.0
      %1611 = vmatpush1.msra.mxu0 0.0
      %1612 = vmatprep.subr.mxu0 0.0
      %1613 = vmatpush1.msra.mxu0 0.0
      %1614 = vmatprep.subr.mxu0 0.0
      %1615 = vmatpush1.msra.mxu0 0.0
      %1616 = vmatprep.subr.mxu0 0.0
      %1617 = vmatpush1.msra.mxu0 0.0
      %1618 = vmatprep.subr.mxu0 0.0
      %1619 = vmatpush1.msra.mxu0 0.0
      %1620 = vmatprep.subr.mxu0 0.0
      %1621 = vmatpush1.msra.mxu0 0.0
      %1622 = vmatprep.subr.mxu0 0.0
      %1623 = vmatpush1.msra.mxu0 0.0
      %1624 = vmatprep.subr.mxu0 0.0
      %1625 = vmatpush1.msra.mxu0 0.0
      %1626 = vmatprep.subr.mxu0 0.0
      %1627 = vmatpush1.msra.mxu0 0.0
      %1628 = vmatprep.subr.mxu0 0.0
      %1629 = vmatpush1.msra.mxu0 0.0
      %1630 = vmatprep.subr.mxu0 0.0
      %1631 = vmatpush1.msra.mxu0 0.0
      %1632 = vmatprep.subr.mxu0 0.0
      %1633 = vmatpush1.msra.mxu0 0.0
      %1634 = vmatprep.subr.mxu0 0.0
      %1635 = vmatpush1.msra.mxu0 0.0
      %1636 = vmatprep.subr.mxu0 0.0
      %1637 = vmatpush1.msra.mxu0 0.0
      %1638 = vmatprep.subr.mxu0 0.0
      %1639 = vmatpush1.msra.mxu0 0.0
      %1640 = vmatprep.subr.mxu0 0.0
      %1641 = vmatpush1.msra.mxu0 0.0
      %1642 = vmatprep.subr.mxu0 0.0
      %1643 = vmatpush1.msra.mxu0 0.0
      %1644 = vmatprep.subr.mxu0 0.0
      %1645 = vmatpush1.msra.mxu0 0.0
      %1646 = vmatprep.subr.mxu0 0.0
      %1647 = vmatpush1.msra.mxu0 0.0
      %1648 = vmatprep.subr.mxu0 0.0
      %1649 = vmatpush1.msra.mxu0 0.0
      %1650 = vmatprep.subr.mxu0 0.0
      %1651 = vmatpush1.msra.mxu0 0.0
      %1652 = vmatprep.subr.mxu0 0.0
      %1653 = vmatpush1.msra.mxu0 0.0
      %1654 = vmatprep.subr.mxu0 0.0
      %1655 = vmatpush1.msra.mxu0 0.0
      %1656 = vmatprep.subr.mxu0 0.0
      %1657 = vmatpush1.msra.mxu0 0.0
      %1658 = vmatprep.subr.mxu0 0.0
      %1659 = vmatpush1.msra.mxu0 0.0
      %1660 = vmatprep.subr.mxu0 0.0
      %1661 = vmatpush1.msra.mxu0 0.0
      %1662 = vmatprep.mubr.f32.mxu0 0.0
      %1663 = vmatmul.mubr.f32.gmra.mrb[0].mxu0 %v1593
      %v1664 = vpop.f32.mrb[0].mxu0
      %v1665 = vadd.f32 0.0, %v1664
      %v1666 = vpop.f32.mrb[0].mxu0
      %1667 = vmatprep.mubr.f32.mxu0 0.0
      %1668 = vmatmul.mubr.f32.gmra.mrb[0].mxu0 %v1596
      %v1669 = vpop.f32.mrb[0].mxu0
      %v1670 = vadd.f32 0.0, %v1669
      %v1671 = vpop.f32.mrb[0].mxu0
      %1672 = vdwg.mxu0
      %s1673 = scalar_lea.vmem %s8, 4
      %v1674 = vld [vmem:[%s1673] sm:$0xf]
      %1677 = vrot.lane.b32.xlu0 %v1665, 64
      %v1678 = vpop.permute.xlu0 %1677
      %1679 = vrot.lane.b32.xlu0 %v1670, 64
      %v1680 = vpop.permute.xlu0 %1679
      %v1683 = vpack.c.bf16 %v1670, %v1665
      %v1684 = vpack.c.bf16 %v1680, %v1678
      %v1685 = vpack.c.bf16 %v1674, %v1674
      %v1686 = vpack.c.bf16 %v1586, %v1585
      %1687 = vmatprep.subr.bf16.mxu0 0
      %1688 = vmatpush1.bf16.msra.mxu0 %v1686
      %1689 = vmatprep.subr.bf16.mxu0 0
      %1690 = vmatpush1.bf16.msra.mxu0 0
      %1691 = vmatprep.subr.bf16.mxu0 0
      %1692 = vmatpush1.bf16.msra.mxu0 0
      %1693 = vmatprep.subr.bf16.mxu0 0
      %1694 = vmatpush1.bf16.msra.mxu0 0
      %1695 = vmatprep.subr.bf16.mxu0 0
      %1696 = vmatpush1.bf16.msra.mxu0 0
      %1697 = vmatprep.subr.bf16.mxu0 0
      %1698 = vmatpush1.bf16.msra.mxu0 0
      %1699 = vmatprep.subr.bf16.mxu0 0
      %1700 = vmatpush1.bf16.msra.mxu0 0
      %1701 = vmatprep.subr.bf16.mxu0 0
      %1702 = vmatpush1.bf16.msra.mxu0 0
      %1703 = vmatprep.subr.bf16.mxu0 0
      %1704 = vmatpush1.bf16.msra.mxu0 0
      %1705 = vmatprep.subr.bf16.mxu0 0
      %1706 = vmatpush1.bf16.msra.mxu0 0
      %1707 = vmatprep.subr.bf16.mxu0 0
      %1708 = vmatpush1.bf16.msra.mxu0 0
      %1709 = vmatprep.subr.bf16.mxu0 0
      %1710 = vmatpush1.bf16.msra.mxu0 0
      %1711 = vmatprep.subr.bf16.mxu0 0
      %1712 = vmatpush1.bf16.msra.mxu0 0
      %1713 = vmatprep.subr.bf16.mxu0 0
      %1714 = vmatpush1.bf16.msra.mxu0 0
      %1715 = vmatprep.subr.bf16.mxu0 0
      %1716 = vmatpush1.bf16.msra.mxu0 0
      %1717 = vmatprep.subr.bf16.mxu0 0
      %1718 = vmatpush1.bf16.msra.mxu0 0
      %1719 = vmatprep.mubr.bf16.mxu0 0
      %1720 = vmatmul.mubr.bf16.gmra.mrb[0].mxu0 %v973
      %v1721 = vpop.f32.mrb[0].mxu0
      %v1722 = vadd.f32 0.0, %v1721
      %v1723 = vpop.f32.mrb[0].mxu0
      %v1724 = vpop.f32.mrb[0].mxu0
      %v1725 = vadd.f32 0.0, %v1724
      %v1726 = vpop.f32.mrb[0].mxu0
      %1727 = vmatprep.mubr.bf16.mxu0 0
      %1728 = vmatmul.mubr.bf16.gmra.mrb[0].mxu0 %v976
      %v1729 = vpop.f32.mrb[0].mxu0
      %v1730 = vadd.f32 0.0, %v1729
      %v1731 = vpop.f32.mrb[0].mxu0
      %v1732 = vpop.f32.mrb[0].mxu0
      %v1733 = vadd.f32 0.0, %v1732
      %v1734 = vpop.f32.mrb[0].mxu0
      %1735 = vdwg.mxu0
      %v1736 = vmul.f32 %v1722, %v1722
      %v1737 = vmul.f32 %v1725, %v1725
      %v1738 = vmul.f32 %v1730, %v1730
      %v1739 = vmul.f32 %v1733, %v1733
      %v1740 = vsel %vm1031, %v1736, 0.0
      %1741 = vadd.xlane.f32.xlu0 %v1740
      %v1742 = vpop.xlane.xlu0 %1741
      %v1743 = vsel %vm1031, %v1737, 0.0
      %1744 = vadd.xlane.f32.xlu0 %v1743
      %v1745 = vpop.xlane.xlu0 %1744
      %v1746 = vsel %vm1031, %v1738, 0.0
      %1747 = vadd.xlane.f32.xlu0 %v1746
      %v1748 = vpop.xlane.xlu0 %1747
      %v1749 = vsel %vm1031, %v1739, 0.0
      %1750 = vadd.xlane.f32.xlu0 %v1749
      %v1751 = vpop.xlane.xlu0 %1750
      %v1752 = vrsqrt.pop %v1742
      %v1753 = vmul.f32 %v1742, %v1752
      %vm1754 = vcmp.eq.f32.partialorder %v1742, inf
      %v1755 = vsel %vm1754, %v1742, %v1753
      %vm1756 = vcmp.eq.f32.partialorder %v1742, 0.0
      %v1757 = vand.u32 %v1742, 2147483648
      %v1758 = vsel %vm1756, %v1757, %v1755
      %v1759 = vrsqrt.pop %v1745
      %v1760 = vmul.f32 %v1745, %v1759
      %vm1761 = vcmp.eq.f32.partialorder %v1745, inf
      %v1762 = vsel %vm1761, %v1745, %v1760
      %vm1763 = vcmp.eq.f32.partialorder %v1745, 0.0
      %v1764 = vand.u32 %v1745, 2147483648
      %v1765 = vsel %vm1763, %v1764, %v1762
      %v1766 = vrsqrt.pop %v1748
      %v1767 = vmul.f32 %v1748, %v1766
      %vm1768 = vcmp.eq.f32.partialorder %v1748, inf
      %v1769 = vsel %vm1768, %v1748, %v1767
      %vm1770 = vcmp.eq.f32.partialorder %v1748, 0.0
      %v1771 = vand.u32 %v1748, 2147483648
      %v1772 = vsel %vm1770, %v1771, %v1769
      %v1773 = vrsqrt.pop %v1751
      %v1774 = vmul.f32 %v1751, %v1773
      %vm1775 = vcmp.eq.f32.partialorder %v1751, inf
      %v1776 = vsel %vm1775, %v1751, %v1774
      %vm1777 = vcmp.eq.f32.partialorder %v1751, 0.0
      %v1778 = vand.u32 %v1751, 2147483648
      %v1779 = vsel %vm1777, %v1778, %v1776
      %s1780 = scalar_lea.vmem %s9, 1
      %v1781 = vld [vmem:[%s1780] sm:$0x1]
      %v1783 = vlaneseq
      %v1784 = vshrl.u32 %v1783, 7
      %v1785 = vsub.s32 0, %v1784
      %v1786 = vrot.slane %v1781, %v1785
      %v1788 = vmul.f32 %v1758, %v1786
      %v1789 = vmul.f32 %v1765, %v1786
      %v1790 = vmul.f32 %v1772, %v1786
      %v1791 = vmul.f32 %v1779, %v1786
      %v1793 = vsel %vm1096, %v1685, 0
      %1795 = vmatprep.subr.bf16.mxu0 0
      %1796 = vmatpush1.bf16.msra.mxu0 %v1683
      %1797 = vmatprep.subr.bf16.mxu0 0
      %1798 = vmatpush1.bf16.msra.mxu0 %v1684
      %1799 = vmatprep.subr.bf16.mxu0 0
      %1800 = vmatpush1.bf16.msra.mxu0 %v1793
      %1801 = vmatprep.subr.bf16.mxu0 0
      %1802 = vmatpush1.bf16.msra.mxu0 0
      %1803 = vmatprep.subr.bf16.mxu0 0
      %1804 = vmatpush1.bf16.msra.mxu0 0
      %1805 = vmatprep.subr.bf16.mxu0 0
      %1806 = vmatpush1.bf16.msra.mxu0 0
      %1807 = vmatprep.subr.bf16.mxu0 0
      %1808 = vmatpush1.bf16.msra.mxu0 0
      %1809 = vmatprep.subr.bf16.mxu0 0
      %1810 = vmatpush1.bf16.msra.mxu0 0
      %1811 = vmatprep.subr.bf16.mxu0 0
      %1812 = vmatpush1.bf16.msra.mxu0 0
      %1813 = vmatprep.subr.bf16.mxu0 0
      %1814 = vmatpush1.bf16.msra.mxu0 0
      %1815 = vmatprep.subr.bf16.mxu0 0
      %1816 = vmatpush1.bf16.msra.mxu0 0
      %1817 = vmatprep.subr.bf16.mxu0 0
      %1818 = vmatpush1.bf16.msra.mxu0 0
      %1819 = vmatprep.subr.bf16.mxu0 0
      %1820 = vmatpush1.bf16.msra.mxu0 0
      %1821 = vmatprep.subr.bf16.mxu0 0
      %1822 = vmatpush1.bf16.msra.mxu0 0
      %1823 = vmatprep.subr.bf16.mxu0 0
      %1824 = vmatpush1.bf16.msra.mxu0 0
      %1825 = vmatprep.subr.bf16.mxu0 0
      %1826 = vmatpush1.bf16.msra.mxu0 0
      %1827 = vmatprep.mubr.bf16.mxu0 0
      %1828 = vmatmul.mubr.bf16.gmra.mrb[0].mxu0 %v1091
      %v1829 = vpop.f32.mrb[0].mxu0
      %v1830 = vadd.f32 %v1788, %v1829
      %v1831 = vpop.f32.mrb[0].mxu0
      %v1832 = vpop.f32.mrb[0].mxu0
      %v1833 = vadd.f32 %v1789, %v1832
      %v1834 = vpop.f32.mrb[0].mxu0
      %1835 = vmatprep.mubr.bf16.mxu0 0
      %1836 = vmatmul.mubr.bf16.gmra.mrb[0].mxu0 %v1094
      %v1837 = vpop.f32.mrb[0].mxu0
      %v1838 = vadd.f32 %v1790, %v1837
      %v1839 = vpop.f32.mrb[0].mxu0
      %v1840 = vpop.f32.mrb[0].mxu0
      %v1841 = vadd.f32 %v1791, %v1840
      %v1842 = vpop.f32.mrb[0].mxu0
      %1843 = vdwg.mxu0
      %s1844 = scalar_lea.vmem %s10, 1
      %v1845 = vld [vmem:[%s1844] sm:$0x1]
      %v1847 = vlaneseq
      %v1848 = vshrl.u32 %v1847, 7
      %v1849 = vsub.s32 0, %v1848
      %v1850 = vrot.slane %v1845, %v1849
      %v1852 = vadd.f32 %v1830, %v1850
      %v1853 = vadd.f32 %v1833, %v1850
      %v1854 = vadd.f32 %v1838, %v1850
      %v1855 = vadd.f32 %v1841, %v1850
      %v1856 = vsub.f32 0.0, %v1852
      %v1857 = vsub.f32 0.0, %v1853
      %v1858 = vsub.f32 0.0, %v1854
      %v1859 = vsub.f32 0.0, %v1855
      %v1860 = vmul.f32 %v1856, 1.442695
      %v1861 = vpow.pop %v1860
      %v1862 = vmul.f32 %v1857, 1.442695
      %v1863 = vpow.pop %v1862
      %v1864 = vmul.f32 %v1858, 1.442695
      %v1865 = vpow.pop %v1864
      %v1866 = vmul.f32 %v1859, 1.442695
      %v1867 = vpow.pop %v1866
      %v1868 = vadd.f32 %v1861, 1.0
      %v1869 = vadd.f32 %v1863, 1.0
      %v1870 = vadd.f32 %v1865, 1.0
      %v1871 = vadd.f32 %v1867, 1.0
      %v1872 = vrcp.pop %v1868
      %v1873 = vrcp.pop %v1869
      %v1874 = vrcp.pop %v1870
      %v1875 = vrcp.pop %v1871
      %v1876 = vmul.f32 %v1852, %v1872
      %v1877 = vmul.f32 %v1853, %v1873
      %v1878 = vmul.f32 %v1854, %v1874
      %v1879 = vmul.f32 %v1855, %v1875
      %s1880 = scalar_lea.vmem %s11, 64
      %v1881 = vld [vmem:[%s1880] sm:$0xff]
      %v1882 = vld [vmem:[%s1880 + $0x8] sm:$0xff]
      %v1883 = vld [vmem:[%s1880 + $0x10] sm:$0xff]
      %v1884 = vld [vmem:[%s1880 + $0x18] sm:$0xff]
      %v1885 = vld [vmem:[%s1880 + $0x20] sm:$0xff]
      %v1886 = vld [vmem:[%s1880 + $0x28] sm:$0xff]
      %v1887 = vld [vmem:[%s1880 + $0x30] sm:$0xff]
      %v1888 = vld [vmem:[%s1880 + $0x38] sm:$0xff]
      %s1889 = scalar_lea.vmem %s12, 1
      %v1890 = vld [vmem:[%s1889] sm:$0x1]
      %v1892 = vlaneseq
      %v1893 = vshrl.u32 %v1892, 7
      %v1894 = vsub.s32 0, %v1893
      %v1895 = vrot.slane %v1890, %v1894
      %v1898 = vsel %vm1199, %v1876, 0
      %v1901 = vsel %vm1199, %v1877, 0
      %v1904 = vsel %vm1199, %v1878, 0
      %v1907 = vsel %vm1199, %v1879, 0
      %1909 = vmatprep.subr.mxu0 0.0
      %1910 = vmatpush1.msra.mxu0 %v1881
      %1911 = vmatprep.subr.mxu0 0.0
      %1912 = vmatpush1.msra.mxu0 %v1882
      %1913 = vmatprep.subr.mxu0 0.0
      %1914 = vmatpush1.msra.mxu0 %v1883
      %1915 = vmatprep.subr.mxu0 0.0
      %1916 = vmatpush1.msra.mxu0 %v1884
      %1917 = vmatprep.subr.mxu0 0.0
      %1918 = vmatpush1.msra.mxu0 %v1885
      %1919 = vmatprep.subr.mxu0 0.0
      %1920 = vmatpush1.msra.mxu0 %v1886
      %1921 = vmatprep.subr.mxu0 0.0
      %1922 = vmatpush1.msra.mxu0 %v1887
      %1923 = vmatprep.subr.mxu0 0.0
      %1924 = vmatpush1.msra.mxu0 %v1888
      %1925 = vmatprep.subr.mxu0 0.0
      %1926 = vmatpush1.msra.mxu0 0.0
      %1927 = vmatprep.subr.mxu0 0.0
      %1928 = vmatpush1.msra.mxu0 0.0
      %1929 = vmatprep.subr.mxu0 0.0
      %1930 = vmatpush1.msra.mxu0 0.0
      %1931 = vmatprep.subr.mxu0 0.0
      %1932 = vmatpush1.msra.mxu0 0.0
      %1933 = vmatprep.subr.mxu0 0.0
      %1934 = vmatpush1.msra.mxu0 0.0
      %1935 = vmatprep.subr.mxu0 0.0
      %1936 = vmatpush1.msra.mxu0 0.0
      %1937 = vmatprep.subr.mxu0 0.0
      %1938 = vmatpush1.msra.mxu0 0.0
      %1939 = vmatprep.subr.mxu0 0.0
      %1940 = vmatpush1.msra.mxu0 0.0
      %1941 = vmatprep.subr.mxu0 0.0
      %1942 = vmatpush1.msra.mxu0 0.0
      %1943 = vmatprep.subr.mxu0 0.0
      %1944 = vmatpush1.msra.mxu0 0.0
      %1945 = vmatprep.subr.mxu0 0.0
      %1946 = vmatpush1.msra.mxu0 0.0
      %1947 = vmatprep.subr.mxu0 0.0
      %1948 = vmatpush1.msra.mxu0 0.0
      %1949 = vmatprep.subr.mxu0 0.0
      %1950 = vmatpush1.msra.mxu0 0.0
      %1951 = vmatprep.subr.mxu0 0.0
      %1952 = vmatpush1.msra.mxu0 0.0
      %1953 = vmatprep.subr.mxu0 0.0
      %1954 = vmatpush1.msra.mxu0 0.0
      %1955 = vmatprep.subr.mxu0 0.0
      %1956 = vmatpush1.msra.mxu0 0.0
      %1957 = vmatprep.subr.mxu0 0.0
      %1958 = vmatpush1.msra.mxu0 0.0
      %1959 = vmatprep.subr.mxu0 0.0
      %1960 = vmatpush1.msra.mxu0 0.0
      %1961 = vmatprep.subr.mxu0 0.0
      %1962 = vmatpush1.msra.mxu0 0.0
      %1963 = vmatprep.subr.mxu0 0.0
      %1964 = vmatpush1.msra.mxu0 0.0
      %1965 = vmatprep.subr.mxu0 0.0
      %1966 = vmatpush1.msra.mxu0 0.0
      %1967 = vmatprep.subr.mxu0 0.0
      %1968 = vmatpush1.msra.mxu0 0.0
      %1969 = vmatprep.subr.mxu0 0.0
      %1970 = vmatpush1.msra.mxu0 0.0
      %1971 = vmatprep.subr.mxu0 0.0
      %1972 = vmatpush1.msra.mxu0 0.0
      %1973 = vmatprep.mubr.f32.mxu0 0.0
      %1974 = vmatmul.mubr.f32.gmra.mrb[0].mxu0 %v1898
      %v1975 = vpop.f32.mrb[0].mxu0
      %v1976 = vadd.f32 %v1895, %v1975
      %v1977 = vpop.f32.mrb[0].mxu0
      %1978 = vmatprep.mubr.f32.mxu0 0.0
      %1979 = vmatmul.mubr.f32.gmra.mrb[0].mxu0 %v1901
      %v1980 = vpop.f32.mrb[0].mxu0
      %v1981 = vadd.f32 %v1895, %v1980
      %v1982 = vpop.f32.mrb[0].mxu0
      %1983 = vmatprep.mubr.f32.mxu0 0.0
      %1984 = vmatmul.mubr.f32.gmra.mrb[0].mxu0 %v1904
      %v1985 = vpop.f32.mrb[0].mxu0
      %v1986 = vadd.f32 %v1895, %v1985
      %v1987 = vpop.f32.mrb[0].mxu0
      %1988 = vmatprep.mubr.f32.mxu0 0.0
      %1989 = vmatmul.mubr.f32.gmra.mrb[0].mxu0 %v1907
      %v1990 = vpop.f32.mrb[0].mxu0
      %v1991 = vadd.f32 %v1895, %v1990
      %v1992 = vpop.f32.mrb[0].mxu0
      %1993 = vdwg.mxu0
      %v1994 = vpack.c.bf16 %v1981, %v1976
      %v1995 = vpack.c.bf16 %v1991, %v1986
      %1996 = vmatprep.subr.bf16.mxu0 0
      %1997 = vmatpush1.bf16.msra.mxu0 %v1994
      %1998 = vmatprep.subr.bf16.mxu0 0
      %1999 = vmatpush1.bf16.msra.mxu0 %v1995
      %2000 = vmatprep.subr.bf16.mxu0 0
      %2001 = vmatpush1.bf16.msra.mxu0 0
      %2002 = vmatprep.subr.bf16.mxu0 0
      %2003 = vmatpush1.bf16.msra.mxu0 0
      %2004 = vmatprep.subr.bf16.mxu0 0
      %2005 = vmatpush1.bf16.msra.mxu0 0
      %2006 = vmatprep.subr.bf16.mxu0 0
      %2007 = vmatpush1.bf16.msra.mxu0 0
      %2008 = vmatprep.subr.bf16.mxu0 0
      %2009 = vmatpush1.bf16.msra.mxu0 0
      %2010 = vmatprep.subr.bf16.mxu0 0
      %2011 = vmatpush1.bf16.msra.mxu0 0
      %2012 = vmatprep.subr.bf16.mxu0 0
      %2013 = vmatpush1.bf16.msra.mxu0 0
      %2014 = vmatprep.subr.bf16.mxu0 0
      %2015 = vmatpush1.bf16.msra.mxu0 0
      %2016 = vmatprep.subr.bf16.mxu0 0
      %2017 = vmatpush1.bf16.msra.mxu0 0
      %2018 = vmatprep.subr.bf16.mxu0 0
      %2019 = vmatpush1.bf16.msra.mxu0 0
      %2020 = vmatprep.subr.bf16.mxu0 0
      %2021 = vmatpush1.bf16.msra.mxu0 0
      %2022 = vmatprep.subr.bf16.mxu0 0
      %2023 = vmatpush1.bf16.msra.mxu0 0
      %2024 = vmatprep.subr.bf16.mxu0 0
      %2025 = vmatpush1.bf16.msra.mxu0 0
      %2026 = vmatprep.subr.bf16.mxu0 0
      %2027 = vmatpush1.bf16.msra.mxu0 0
      %2028 = vmatprep.mubr.bf16.mxu0 0
      %2029 = vmatmul.mubr.bf16.gmra.mrb[0].mxu0 %v1318
      %v2030 = vpop.f32.mrb[0].mxu0
      %v2031 = vadd.f32 0.0, %v2030
      %v2032 = vpop.f32.mrb[0].mxu0
      %v2033 = vpop.f32.mrb[0].mxu0
      %v2034 = vadd.f32 0.0, %v2033
      %v2035 = vpop.f32.mrb[0].mxu0
      %2036 = vdwg.mxu0
      %v2037 = vmul.f32 %v2031, %v1364
      %v2038 = vmul.f32 %v2034, %v1369
      %v2039 = vadd.f32 %v1373, %v2037
      %v2040 = vadd.f32 %v1374, %v2038
      %s2041 = scalar_lea.vmem %s13, 32
      %v2042 = vld [vmem:[%s2041] sm:$0xff]
      %v2043 = vld [vmem:[%s2041 + $0x8] sm:$0xff]
      %v2044 = vld [vmem:[%s2041 + $0x10] sm:$0xff]
      %v2045 = vld [vmem:[%s2041 + $0x18] sm:$0xff]
      %s2046 = scalar_lea.vmem %s14, 1
      %v2047 = vld [vmem:[%s2046] sm:$0x1]
      %v2049 = vlaneseq
      %v2050 = vshrl.u32 %v2049, 7
      %v2051 = vsub.s32 0, %v2050
      %v2052 = vrot.slane %v2047, %v2051
      %v2055 = vsel %vm777, %v2037, 0
      %v2058 = vsel %vm777, %v2038, 0
      %2060 = vmatprep.subr.mxu0 0.0
      %2061 = vmatpush1.msra.mxu0 %v2042
      %2062 = vmatprep.subr.mxu0 0.0
      %2063 = vmatpush1.msra.mxu0 %v2043
      %2064 = vmatprep.subr.mxu0 0.0
      %2065 = vmatpush1.msra.mxu0 %v2044
      %2066 = vmatprep.subr.mxu0 0.0
      %2067 = vmatpush1.msra.mxu0 %v2045
      %2068 = vmatprep.subr.mxu0 0.0
      %2069 = vmatpush1.msra.mxu0 0.0
      %2070 = vmatprep.subr.mxu0 0.0
      %2071 = vmatpush1.msra.mxu0 0.0
      %2072 = vmatprep.subr.mxu0 0.0
      %2073 = vmatpush1.msra.mxu0 0.0
      %2074 = vmatprep.subr.mxu0 0.0
      %2075 = vmatpush1.msra.mxu0 0.0
      %2076 = vmatprep.subr.mxu0 0.0
      %2077 = vmatpush1.msra.mxu0 0.0
      %2078 = vmatprep.subr.mxu0 0.0
      %2079 = vmatpush1.msra.mxu0 0.0
      %2080 = vmatprep.subr.mxu0 0.0
      %2081 = vmatpush1.msra.mxu0 0.0
      %2082 = vmatprep.subr.mxu0 0.0
      %2083 = vmatpush1.msra.mxu0 0.0
      %2084 = vmatprep.subr.mxu0 0.0
      %2085 = vmatpush1.msra.mxu0 0.0
      %2086 = vmatprep.subr.mxu0 0.0
      %2087 = vmatpush1.msra.mxu0 0.0
      %2088 = vmatprep.subr.mxu0 0.0
      %2089 = vmatpush1.msra.mxu0 0.0
      %2090 = vmatprep.subr.mxu0 0.0
      %2091 = vmatpush1.msra.mxu0 0.0
      %2092 = vmatprep.subr.mxu0 0.0
      %2093 = vmatpush1.msra.mxu0 0.0
      %2094 = vmatprep.subr.mxu0 0.0
      %2095 = vmatpush1.msra.mxu0 0.0
      %2096 = vmatprep.subr.mxu0 0.0
      %2097 = vmatpush1.msra.mxu0 0.0
      %2098 = vmatprep.subr.mxu0 0.0
      %2099 = vmatpush1.msra.mxu0 0.0
      %2100 = vmatprep.subr.mxu0 0.0
      %2101 = vmatpush1.msra.mxu0 0.0
      %2102 = vmatprep.subr.mxu0 0.0
      %2103 = vmatpush1.msra.mxu0 0.0
      %2104 = vmatprep.subr.mxu0 0.0
      %2105 = vmatpush1.msra.mxu0 0.0
      %2106 = vmatprep.subr.mxu0 0.0
      %2107 = vmatpush1.msra.mxu0 0.0
      %2108 = vmatprep.subr.mxu0 0.0
      %2109 = vmatpush1.msra.mxu0 0.0
      %2110 = vmatprep.subr.mxu0 0.0
      %2111 = vmatpush1.msra.mxu0 0.0
      %2112 = vmatprep.subr.mxu0 0.0
      %2113 = vmatpush1.msra.mxu0 0.0
      %2114 = vmatprep.subr.mxu0 0.0
      %2115 = vmatpush1.msra.mxu0 0.0
      %2116 = vmatprep.subr.mxu0 0.0
      %2117 = vmatpush1.msra.mxu0 0.0
      %2118 = vmatprep.subr.mxu0 0.0
      %2119 = vmatpush1.msra.mxu0 0.0
      %2120 = vmatprep.subr.mxu0 0.0
      %2121 = vmatpush1.msra.mxu0 0.0
      %2122 = vmatprep.subr.mxu0 0.0
      %2123 = vmatpush1.msra.mxu0 0.0
      %2124 = vmatprep.mubr.f32.mxu0 0.0
      %2125 = vmatmul.mubr.f32.gmra.mrb[0].mxu0 %v2055
      %v2126 = vpop.f32.mrb[0].mxu0
      %v2127 = vadd.f32 %v2052, %v2126
      %v2128 = vpop.f32.mrb[0].mxu0
      %2129 = vmatprep.mubr.f32.mxu0 0.0
      %2130 = vmatmul.mubr.f32.gmra.mrb[0].mxu0 %v2058
      %v2131 = vpop.f32.mrb[0].mxu0
      %v2132 = vadd.f32 %v2052, %v2131
      %v2133 = vpop.f32.mrb[0].mxu0
      %2134 = vdwg.mxu0
      %v2135 = vsub.f32 0.0, %v2127
      %v2136 = vsub.f32 0.0, %v2132
      %v2137 = vmul.f32 %v2135, 1.442695
      %v2138 = vpow.pop %v2137
      %v2139 = vmul.f32 %v2136, 1.442695
      %v2140 = vpow.pop %v2139
      %v2141 = vadd.f32 %v2138, 1.0
      %v2142 = vadd.f32 %v2140, 1.0
      %v2143 = vrcp.pop %v2141
      %v2144 = vrcp.pop %v2142
      %v2145 = vmul.f32 %v2127, %v2143
      %v2146 = vmul.f32 %v2132, %v2144
      %s2147 = scalar_lea.vmem %s15, 32
      %v2148 = vld [vmem:[%s2147] sm:$0xff]
      %v2149 = vld [vmem:[%s2147 + $0x8] sm:$0xff]
      %v2150 = vld [vmem:[%s2147 + $0x10] sm:$0xff]
      %v2151 = vld [vmem:[%s2147 + $0x18] sm:$0xff]
      %s2152 = scalar_lea.vmem %s16, 1
      %v2153 = vld [vmem:[%s2152] sm:$0x1]
      %v2155 = vlaneseq
      %v2156 = vshrl.u32 %v2155, 7
      %v2157 = vsub.s32 0, %v2156
      %v2158 = vrot.slane %v2153, %v2157
      %v2161 = vsel %vm777, %v2145, 0
      %v2164 = vsel %vm777, %v2146, 0
      %2166 = vmatprep.subr.mxu0 0.0
      %2167 = vmatpush1.msra.mxu0 %v2148
      %2168 = vmatprep.subr.mxu0 0.0
      %2169 = vmatpush1.msra.mxu0 %v2149
      %2170 = vmatprep.subr.mxu0 0.0
      %2171 = vmatpush1.msra.mxu0 %v2150
      %2172 = vmatprep.subr.mxu0 0.0
      %2173 = vmatpush1.msra.mxu0 %v2151
      %2174 = vmatprep.subr.mxu0 0.0
      %2175 = vmatpush1.msra.mxu0 0.0
      %2176 = vmatprep.subr.mxu0 0.0
      %2177 = vmatpush1.msra.mxu0 0.0
      %2178 = vmatprep.subr.mxu0 0.0
      %2179 = vmatpush1.msra.mxu0 0.0
      %2180 = vmatprep.subr.mxu0 0.0
      %2181 = vmatpush1.msra.mxu0 0.0
      %2182 = vmatprep.subr.mxu0 0.0
      %2183 = vmatpush1.msra.mxu0 0.0
      %2184 = vmatprep.subr.mxu0 0.0
      %2185 = vmatpush1.msra.mxu0 0.0
      %2186 = vmatprep.subr.mxu0 0.0
      %2187 = vmatpush1.msra.mxu0 0.0
      %2188 = vmatprep.subr.mxu0 0.0
      %2189 = vmatpush1.msra.mxu0 0.0
      %2190 = vmatprep.subr.mxu0 0.0
      %2191 = vmatpush1.msra.mxu0 0.0
      %2192 = vmatprep.subr.mxu0 0.0
      %2193 = vmatpush1.msra.mxu0 0.0
      %2194 = vmatprep.subr.mxu0 0.0
      %2195 = vmatpush1.msra.mxu0 0.0
      %2196 = vmatprep.subr.mxu0 0.0
      %2197 = vmatpush1.msra.mxu0 0.0
      %2198 = vmatprep.subr.mxu0 0.0
      %2199 = vmatpush1.msra.mxu0 0.0
      %2200 = vmatprep.subr.mxu0 0.0
      %2201 = vmatpush1.msra.mxu0 0.0
      %2202 = vmatprep.subr.mxu0 0.0
      %2203 = vmatpush1.msra.mxu0 0.0
      %2204 = vmatprep.subr.mxu0 0.0
      %2205 = vmatpush1.msra.mxu0 0.0
      %2206 = vmatprep.subr.mxu0 0.0
      %2207 = vmatpush1.msra.mxu0 0.0
      %2208 = vmatprep.subr.mxu0 0.0
      %2209 = vmatpush1.msra.mxu0 0.0
      %2210 = vmatprep.subr.mxu0 0.0
      %2211 = vmatpush1.msra.mxu0 0.0
      %2212 = vmatprep.subr.mxu0 0.0
      %2213 = vmatpush1.msra.mxu0 0.0
      %2214 = vmatprep.subr.mxu0 0.0
      %2215 = vmatpush1.msra.mxu0 0.0
      %2216 = vmatprep.subr.mxu0 0.0
      %2217 = vmatpush1.msra.mxu0 0.0
      %2218 = vmatprep.subr.mxu0 0.0
      %2219 = vmatpush1.msra.mxu0 0.0
      %2220 = vmatprep.subr.mxu0 0.0
      %2221 = vmatpush1.msra.mxu0 0.0
      %2222 = vmatprep.subr.mxu0 0.0
      %2223 = vmatpush1.msra.mxu0 0.0
      %2224 = vmatprep.subr.mxu0 0.0
      %2225 = vmatpush1.msra.mxu0 0.0
      %2226 = vmatprep.subr.mxu0 0.0
      %2227 = vmatpush1.msra.mxu0 0.0
      %2228 = vmatprep.subr.mxu0 0.0
      %2229 = vmatpush1.msra.mxu0 0.0
      %2230 = vmatprep.mubr.f32.mxu0 0.0
      %2231 = vmatmul.mubr.f32.gmra.mrb[0].mxu0 %v2161
      %v2232 = vpop.f32.mrb[0].mxu0
      %v2233 = vadd.f32 %v2158, %v2232
      %v2234 = vpop.f32.mrb[0].mxu0
      %2235 = vmatprep.mubr.f32.mxu0 0.0
      %2236 = vmatmul.mubr.f32.gmra.mrb[0].mxu0 %v2164
      %v2237 = vpop.f32.mrb[0].mxu0
      %v2238 = vadd.f32 %v2158, %v2237
      %v2239 = vpop.f32.mrb[0].mxu0
      %2240 = vdwg.mxu0
      %s2241 = scalar_lea.vmem %s731, 16
      %v2242 = vld [vmem:[%s2241] sm:$0xff]
      %v2243 = vld [vmem:[%s2241 + $0x8] sm:$0xff]
      %2245 = vset.pattern.permute.xlu0 0
      %2246 = vperm.xlu0 %2245, %v2233
      %v2247 = vpop.permute.xlu0 %2246
      %2250 = vset.pattern.permute.xlu0 0
      %2251 = vperm.xlu0 %2250, %v2238
      %v2252 = vpop.permute.xlu0 %2251
      %v2254 = vmul.f32 %v2247, %v2242
      %v2255 = vmul.f32 %v2252, %v2243
      %v2256 = vadd.f32 %v1585, %v2254
      %v2257 = vadd.f32 %v1586, %v2255
      %s2258 = scalar_lea.vmem %s7, 64
      %v2259 = vld [vmem:[%s2258] sm:$0xff]
      %v2260 = vld [vmem:[%s2258 + $0x8] sm:$0xff]
      %v2261 = vld [vmem:[%s2258 + $0x10] sm:$0xff]
      %v2262 = vld [vmem:[%s2258 + $0x18] sm:$0xff]
      %v2264 = vsel %vm777, %v2039, 0
      %v2267 = vsel %vm777, %v2040, 0
      %2269 = vmatprep.subr.mxu0 0.0
      %2270 = vmatpush1.msra.mxu0 %v2259
      %2271 = vmatprep.subr.mxu0 0.0
      %2272 = vmatpush1.msra.mxu0 %v2260
      %2273 = vmatprep.subr.mxu0 0.0
      %2274 = vmatpush1.msra.mxu0 %v2261
      %2275 = vmatprep.subr.mxu0 0.0
      %2276 = vmatpush1.msra.mxu0 %v2262
      %2277 = vmatprep.subr.mxu0 0.0
      %2278 = vmatpush1.msra.mxu0 0.0
      %2279 = vmatprep.subr.mxu0 0.0
      %2280 = vmatpush1.msra.mxu0 0.0
      %2281 = vmatprep.subr.mxu0 0.0
      %2282 = vmatpush1.msra.mxu0 0.0
      %2283 = vmatprep.subr.mxu0 0.0
      %2284 = vmatpush1.msra.mxu0 0.0
      %2285 = vmatprep.subr.mxu0 0.0
      %2286 = vmatpush1.msra.mxu0 0.0
      %2287 = vmatprep.subr.mxu0 0.0
      %2288 = vmatpush1.msra.mxu0 0.0
      %2289 = vmatprep.subr.mxu0 0.0
      %2290 = vmatpush1.msra.mxu0 0.0
      %2291 = vmatprep.subr.mxu0 0.0
      %2292 = vmatpush1.msra.mxu0 0.0
      %2293 = vmatprep.subr.mxu0 0.0
      %2294 = vmatpush1.msra.mxu0 0.0
      %2295 = vmatprep.subr.mxu0 0.0
      %2296 = vmatpush1.msra.mxu0 0.0
      %2297 = vmatprep.subr.mxu0 0.0
      %2298 = vmatpush1.msra.mxu0 0.0
      %2299 = vmatprep.subr.mxu0 0.0
      %2300 = vmatpush1.msra.mxu0 0.0
      %2301 = vmatprep.subr.mxu0 0.0
      %2302 = vmatpush1.msra.mxu0 0.0
      %2303 = vmatprep.subr.mxu0 0.0
      %2304 = vmatpush1.msra.mxu0 0.0
      %2305 = vmatprep.subr.mxu0 0.0
      %2306 = vmatpush1.msra.mxu0 0.0
      %2307 = vmatprep.subr.mxu0 0.0
      %2308 = vmatpush1.msra.mxu0 0.0
      %2309 = vmatprep.subr.mxu0 0.0
      %2310 = vmatpush1.msra.mxu0 0.0
      %2311 = vmatprep.subr.mxu0 0.0
      %2312 = vmatpush1.msra.mxu0 0.0
      %2313 = vmatprep.subr.mxu0 0.0
      %2314 = vmatpush1.msra.mxu0 0.0
      %2315 = vmatprep.subr.mxu0 0.0
      %2316 = vmatpush1.msra.mxu0 0.0
      %2317 = vmatprep.subr.mxu0 0.0
      %2318 = vmatpush1.msra.mxu0 0.0
      %2319 = vmatprep.subr.mxu0 0.0
      %2320 = vmatpush1.msra.mxu0 0.0
      %2321 = vmatprep.subr.mxu0 0.0
      %2322 = vmatpush1.msra.mxu0 0.0
      %2323 = vmatprep.subr.mxu0 0.0
      %2324 = vmatpush1.msra.mxu0 0.0
      %2325 = vmatprep.subr.mxu0 0.0
      %2326 = vmatpush1.msra.mxu0 0.0
      %2327 = vmatprep.subr.mxu0 0.0
      %2328 = vmatpush1.msra.mxu0 0.0
      %2329 = vmatprep.subr.mxu0 0.0
      %2330 = vmatpush1.msra.mxu0 0.0
      %2331 = vmatprep.subr.mxu0 0.0
      %2332 = vmatpush1.msra.mxu0 0.0
      %2333 = vmatprep.mubr.f32.mxu0 0.0
      %2334 = vmatmul.mubr.f32.gmra.mrb[0].mxu0 %v2264
      %v2335 = vpop.f32.mrb[0].mxu0
      %v2336 = vadd.f32 0.0, %v2335
      %v2337 = vpop.f32.mrb[0].mxu0
      %2338 = vmatprep.mubr.f32.mxu0 0.0
      %2339 = vmatmul.mubr.f32.gmra.mrb[0].mxu0 %v2267
      %v2340 = vpop.f32.mrb[0].mxu0
      %v2341 = vadd.f32 0.0, %v2340
      %v2342 = vpop.f32.mrb[0].mxu0
      %2343 = vdwg.mxu0
      %s2344 = scalar_lea.vmem %s8, 8
      %v2345 = vld [vmem:[%s2344] sm:$0xf]
      %2348 = vrot.lane.b32.xlu0 %v2336, 64
      %v2349 = vpop.permute.xlu0 %2348
      %2350 = vrot.lane.b32.xlu0 %v2341, 64
      %v2351 = vpop.permute.xlu0 %2350
      %v2354 = vpack.c.bf16 %v2341, %v2336
      %v2355 = vpack.c.bf16 %v2351, %v2349
      %v2356 = vpack.c.bf16 %v2345, %v2345
      %v2357 = vpack.c.bf16 %v2257, %v2256
      %2358 = vmatprep.subr.bf16.mxu0 0
      %2359 = vmatpush1.bf16.msra.mxu0 %v2357
      %2360 = vmatprep.subr.bf16.mxu0 0
      %2361 = vmatpush1.bf16.msra.mxu0 0
      %2362 = vmatprep.subr.bf16.mxu0 0
      %2363 = vmatpush1.bf16.msra.mxu0 0
      %2364 = vmatprep.subr.bf16.mxu0 0
      %2365 = vmatpush1.bf16.msra.mxu0 0
      %2366 = vmatprep.subr.bf16.mxu0 0
      %2367 = vmatpush1.bf16.msra.mxu0 0
      %2368 = vmatprep.subr.bf16.mxu0 0
      %2369 = vmatpush1.bf16.msra.mxu0 0
      %2370 = vmatprep.subr.bf16.mxu0 0
      %2371 = vmatpush1.bf16.msra.mxu0 0
      %2372 = vmatprep.subr.bf16.mxu0 0
      %2373 = vmatpush1.bf16.msra.mxu0 0
      %2374 = vmatprep.subr.bf16.mxu0 0
      %2375 = vmatpush1.bf16.msra.mxu0 0
      %2376 = vmatprep.subr.bf16.mxu0 0
      %2377 = vmatpush1.bf16.msra.mxu0 0
      %2378 = vmatprep.subr.bf16.mxu0 0
      %2379 = vmatpush1.bf16.msra.mxu0 0
      %2380 = vmatprep.subr.bf16.mxu0 0
      %2381 = vmatpush1.bf16.msra.mxu0 0
      %2382 = vmatprep.subr.bf16.mxu0 0
      %2383 = vmatpush1.bf16.msra.mxu0 0
      %2384 = vmatprep.subr.bf16.mxu0 0
      %2385 = vmatpush1.bf16.msra.mxu0 0
      %2386 = vmatprep.subr.bf16.mxu0 0
      %2387 = vmatpush1.bf16.msra.mxu0 0
      %2388 = vmatprep.subr.bf16.mxu0 0
      %2389 = vmatpush1.bf16.msra.mxu0 0
      %2390 = vmatprep.mubr.bf16.mxu0 0
      %2391 = vmatmul.mubr.bf16.gmra.mrb[0].mxu0 %v973
      %v2392 = vpop.f32.mrb[0].mxu0
      %v2393 = vadd.f32 0.0, %v2392
      %v2394 = vpop.f32.mrb[0].mxu0
      %v2395 = vpop.f32.mrb[0].mxu0
      %v2396 = vadd.f32 0.0, %v2395
      %v2397 = vpop.f32.mrb[0].mxu0
      %2398 = vmatprep.mubr.bf16.mxu0 0
      %2399 = vmatmul.mubr.bf16.gmra.mrb[0].mxu0 %v976
      %v2400 = vpop.f32.mrb[0].mxu0
      %v2401 = vadd.f32 0.0, %v2400
      %v2402 = vpop.f32.mrb[0].mxu0
      %v2403 = vpop.f32.mrb[0].mxu0
      %v2404 = vadd.f32 0.0, %v2403
      %v2405 = vpop.f32.mrb[0].mxu0
      %2406 = vdwg.mxu0
      %v2407 = vmul.f32 %v2393, %v2393
      %v2408 = vmul.f32 %v2396, %v2396
      %v2409 = vmul.f32 %v2401, %v2401
      %v2410 = vmul.f32 %v2404, %v2404
      %v2411 = vsel %vm1031, %v2407, 0.0
      %2412 = vadd.xlane.f32.xlu0 %v2411
      %v2413 = vpop.xlane.xlu0 %2412
      %v2414 = vsel %vm1031, %v2408, 0.0
      %2415 = vadd.xlane.f32.xlu0 %v2414
      %v2416 = vpop.xlane.xlu0 %2415
      %v2417 = vsel %vm1031, %v2409, 0.0
      %2418 = vadd.xlane.f32.xlu0 %v2417
      %v2419 = vpop.xlane.xlu0 %2418
      %v2420 = vsel %vm1031, %v2410, 0.0
      %2421 = vadd.xlane.f32.xlu0 %v2420
      %v2422 = vpop.xlane.xlu0 %2421
      %v2423 = vrsqrt.pop %v2413
      %v2424 = vmul.f32 %v2413, %v2423
      %vm2425 = vcmp.eq.f32.partialorder %v2413, inf
      %v2426 = vsel %vm2425, %v2413, %v2424
      %vm2427 = vcmp.eq.f32.partialorder %v2413, 0.0
      %v2428 = vand.u32 %v2413, 2147483648
      %v2429 = vsel %vm2427, %v2428, %v2426
      %v2430 = vrsqrt.pop %v2416
      %v2431 = vmul.f32 %v2416, %v2430
      %vm2432 = vcmp.eq.f32.partialorder %v2416, inf
      %v2433 = vsel %vm2432, %v2416, %v2431
      %vm2434 = vcmp.eq.f32.partialorder %v2416, 0.0
      %v2435 = vand.u32 %v2416, 2147483648
      %v2436 = vsel %vm2434, %v2435, %v2433
      %v2437 = vrsqrt.pop %v2419
      %v2438 = vmul.f32 %v2419, %v2437
      %vm2439 = vcmp.eq.f32.partialorder %v2419, inf
      %v2440 = vsel %vm2439, %v2419, %v2438
      %vm2441 = vcmp.eq.f32.partialorder %v2419, 0.0
      %v2442 = vand.u32 %v2419, 2147483648
      %v2443 = vsel %vm2441, %v2442, %v2440
      %v2444 = vrsqrt.pop %v2422
      %v2445 = vmul.f32 %v2422, %v2444
      %vm2446 = vcmp.eq.f32.partialorder %v2422, inf
      %v2447 = vsel %vm2446, %v2422, %v2445
      %vm2448 = vcmp.eq.f32.partialorder %v2422, 0.0
      %v2449 = vand.u32 %v2422, 2147483648
      %v2450 = vsel %vm2448, %v2449, %v2447
      %s2451 = scalar_lea.vmem %s9, 2
      %v2452 = vld [vmem:[%s2451] sm:$0x1]
      %v2454 = vlaneseq
      %v2455 = vshrl.u32 %v2454, 7
      %v2456 = vsub.s32 0, %v2455
      %v2457 = vrot.slane %v2452, %v2456
      %v2459 = vmul.f32 %v2429, %v2457
      %v2460 = vmul.f32 %v2436, %v2457
      %v2461 = vmul.f32 %v2443, %v2457
      %v2462 = vmul.f32 %v2450, %v2457
      %v2464 = vsel %vm1096, %v2356, 0
      %2466 = vmatprep.subr.bf16.mxu0 0
      %2467 = vmatpush1.bf16.msra.mxu0 %v2354
      %2468 = vmatprep.subr.bf16.mxu0 0
      %2469 = vmatpush1.bf16.msra.mxu0 %v2355
      %2470 = vmatprep.subr.bf16.mxu0 0
      %2471 = vmatpush1.bf16.msra.mxu0 %v2464
      %2472 = vmatprep.subr.bf16.mxu0 0
      %2473 = vmatpush1.bf16.msra.mxu0 0
      %2474 = vmatprep.subr.bf16.mxu0 0
      %2475 = vmatpush1.bf16.msra.mxu0 0
      %2476 = vmatprep.subr.bf16.mxu0 0
      %2477 = vmatpush1.bf16.msra.mxu0 0
      %2478 = vmatprep.subr.bf16.mxu0 0
      %2479 = vmatpush1.bf16.msra.mxu0 0
      %2480 = vmatprep.subr.bf16.mxu0 0
      %2481 = vmatpush1.bf16.msra.mxu0 0
      %2482 = vmatprep.subr.bf16.mxu0 0
      %2483 = vmatpush1.bf16.msra.mxu0 0
      %2484 = vmatprep.subr.bf16.mxu0 0
      %2485 = vmatpush1.bf16.msra.mxu0 0
      %2486 = vmatprep.subr.bf16.mxu0 0
      %2487 = vmatpush1.bf16.msra.mxu0 0
      %2488 = vmatprep.subr.bf16.mxu0 0
      %2489 = vmatpush1.bf16.msra.mxu0 0
      %2490 = vmatprep.subr.bf16.mxu0 0
      %2491 = vmatpush1.bf16.msra.mxu0 0
      %2492 = vmatprep.subr.bf16.mxu0 0
      %2493 = vmatpush1.bf16.msra.mxu0 0
      %2494 = vmatprep.subr.bf16.mxu0 0
      %2495 = vmatpush1.bf16.msra.mxu0 0
      %2496 = vmatprep.subr.bf16.mxu0 0
      %2497 = vmatpush1.bf16.msra.mxu0 0
      %2498 = vmatprep.mubr.bf16.mxu0 0
      %2499 = vmatmul.mubr.bf16.gmra.mrb[0].mxu0 %v1091
      %v2500 = vpop.f32.mrb[0].mxu0
      %v2501 = vadd.f32 %v2459, %v2500
      %v2502 = vpop.f32.mrb[0].mxu0
      %v2503 = vpop.f32.mrb[0].mxu0
      %v2504 = vadd.f32 %v2460, %v2503
      %v2505 = vpop.f32.mrb[0].mxu0
      %2506 = vmatprep.mubr.bf16.mxu0 0
      %2507 = vmatmul.mubr.bf16.gmra.mrb[0].mxu0 %v1094
      %v2508 = vpop.f32.mrb[0].mxu0
      %v2509 = vadd.f32 %v2461, %v2508
      %v2510 = vpop.f32.mrb[0].mxu0
      %v2511 = vpop.f32.mrb[0].mxu0
      %v2512 = vadd.f32 %v2462, %v2511
      %v2513 = vpop.f32.mrb[0].mxu0
      %2514 = vdwg.mxu0
      %s2515 = scalar_lea.vmem %s10, 2
      %v2516 = vld [vmem:[%s2515] sm:$0x1]
      %v2518 = vlaneseq
      %v2519 = vshrl.u32 %v2518, 7
      %v2520 = vsub.s32 0, %v2519
      %v2521 = vrot.slane %v2516, %v2520
      %v2523 = vadd.f32 %v2501, %v2521
      %v2524 = vadd.f32 %v2504, %v2521
      %v2525 = vadd.f32 %v2509, %v2521
      %v2526 = vadd.f32 %v2512, %v2521
      %v2527 = vsub.f32 0.0, %v2523
      %v2528 = vsub.f32 0.0, %v2524
      %v2529 = vsub.f32 0.0, %v2525
      %v2530 = vsub.f32 0.0, %v2526
      %v2531 = vmul.f32 %v2527, 1.442695
      %v2532 = vpow.pop %v2531
      %v2533 = vmul.f32 %v2528, 1.442695
      %v2534 = vpow.pop %v2533
      %v2535 = vmul.f32 %v2529, 1.442695
      %v2536 = vpow.pop %v2535
      %v2537 = vmul.f32 %v2530, 1.442695
      %v2538 = vpow.pop %v2537
      %v2539 = vadd.f32 %v2532, 1.0
      %v2540 = vadd.f32 %v2534, 1.0
      %v2541 = vadd.f32 %v2536, 1.0
      %v2542 = vadd.f32 %v2538, 1.0
      %v2543 = vrcp.pop %v2539
      %v2544 = vrcp.pop %v2540
      %v2545 = vrcp.pop %v2541
      %v2546 = vrcp.pop %v2542
      %v2547 = vmul.f32 %v2523, %v2543
      %v2548 = vmul.f32 %v2524, %v2544
      %v2549 = vmul.f32 %v2525, %v2545
      %v2550 = vmul.f32 %v2526, %v2546
      %s2551 = scalar_lea.vmem %s11, 128
      %v2552 = vld [vmem:[%s2551] sm:$0xff]
      %v2553 = vld [vmem:[%s2551 + $0x8] sm:$0xff]
      %v2554 = vld [vmem:[%s2551 + $0x10] sm:$0xff]
      %v2555 = vld [vmem:[%s2551 + $0x18] sm:$0xff]
      %v2556 = vld [vmem:[%s2551 + $0x20] sm:$0xff]
      %v2557 = vld [vmem:[%s2551 + $0x28] sm:$0xff]
      %v2558 = vld [vmem:[%s2551 + $0x30] sm:$0xff]
      %v2559 = vld [vmem:[%s2551 + $0x38] sm:$0xff]
      %s2560 = scalar_lea.vmem %s12, 2
      %v2561 = vld [vmem:[%s2560] sm:$0x1]
      %v2563 = vlaneseq
      %v2564 = vshrl.u32 %v2563, 7
      %v2565 = vsub.s32 0, %v2564
      %v2566 = vrot.slane %v2561, %v2565
      %v2569 = vsel %vm1199, %v2547, 0
      %v2572 = vsel %vm1199, %v2548, 0
      %v2575 = vsel %vm1199, %v2549, 0
      %v2578 = vsel %vm1199, %v2550, 0
      %2580 = vmatprep.subr.mxu0 0.0
      %2581 = vmatpush1.msra.mxu0 %v2552
      %2582 = vmatprep.subr.mxu0 0.0
      %2583 = vmatpush1.msra.mxu0 %v2553
      %2584 = vmatprep.subr.mxu0 0.0
      %2585 = vmatpush1.msra.mxu0 %v2554
      %2586 = vmatprep.subr.mxu0 0.0
      %2587 = vmatpush1.msra.mxu0 %v2555
      %2588 = vmatprep.subr.mxu0 0.0
      %2589 = vmatpush1.msra.mxu0 %v2556
      %2590 = vmatprep.subr.mxu0 0.0
      %2591 = vmatpush1.msra.mxu0 %v2557
      %2592 = vmatprep.subr.mxu0 0.0
      %2593 = vmatpush1.msra.mxu0 %v2558
      %2594 = vmatprep.subr.mxu0 0.0
      %2595 = vmatpush1.msra.mxu0 %v2559
      %2596 = vmatprep.subr.mxu0 0.0
      %2597 = vmatpush1.msra.mxu0 0.0
      %2598 = vmatprep.subr.mxu0 0.0
      %2599 = vmatpush1.msra.mxu0 0.0
      %2600 = vmatprep.subr.mxu0 0.0
      %2601 = vmatpush1.msra.mxu0 0.0
      %2602 = vmatprep.subr.mxu0 0.0
      %2603 = vmatpush1.msra.mxu0 0.0
      %2604 = vmatprep.subr.mxu0 0.0
      %2605 = vmatpush1.msra.mxu0 0.0
      %2606 = vmatprep.subr.mxu0 0.0
      %2607 = vmatpush1.msra.mxu0 0.0
      %2608 = vmatprep.subr.mxu0 0.0
      %2609 = vmatpush1.msra.mxu0 0.0
      %2610 = vmatprep.subr.mxu0 0.0
      %2611 = vmatpush1.msra.mxu0 0.0
      %2612 = vmatprep.subr.mxu0 0.0
      %2613 = vmatpush1.msra.mxu0 0.0
      %2614 = vmatprep.subr.mxu0 0.0
      %2615 = vmatpush1.msra.mxu0 0.0
      %2616 = vmatprep.subr.mxu0 0.0
      %2617 = vmatpush1.msra.mxu0 0.0
      %2618 = vmatprep.subr.mxu0 0.0
      %2619 = vmatpush1.msra.mxu0 0.0
      %2620 = vmatprep.subr.mxu0 0.0
      %2621 = vmatpush1.msra.mxu0 0.0
      %2622 = vmatprep.subr.mxu0 0.0
      %2623 = vmatpush1.msra.mxu0 0.0
      %2624 = vmatprep.subr.mxu0 0.0
      %2625 = vmatpush1.msra.mxu0 0.0
      %2626 = vmatprep.subr.mxu0 0.0
      %2627 = vmatpush1.msra.mxu0 0.0
      %2628 = vmatprep.subr.mxu0 0.0
      %2629 = vmatpush1.msra.mxu0 0.0
      %2630 = vmatprep.subr.mxu0 0.0
      %2631 = vmatpush1.msra.mxu0 0.0
      %2632 = vmatprep.subr.mxu0 0.0
      %2633 = vmatpush1.msra.mxu0 0.0
      %2634 = vmatprep.subr.mxu0 0.0
      %2635 = vmatpush1.msra.mxu0 0.0
      %2636 = vmatprep.subr.mxu0 0.0
      %2637 = vmatpush1.msra.mxu0 0.0
      %2638 = vmatprep.subr.mxu0 0.0
      %2639 = vmatpush1.msra.mxu0 0.0
      %2640 = vmatprep.subr.mxu0 0.0
      %2641 = vmatpush1.msra.mxu0 0.0
      %2642 = vmatprep.subr.mxu0 0.0
      %2643 = vmatpush1.msra.mxu0 0.0
      %2644 = vmatprep.mubr.f32.mxu0 0.0
      %2645 = vmatmul.mubr.f32.gmra.mrb[0].mxu0 %v2569
      %v2646 = vpop.f32.mrb[0].mxu0
      %v2647 = vadd.f32 %v2566, %v2646
      %v2648 = vpop.f32.mrb[0].mxu0
      %2649 = vmatprep.mubr.f32.mxu0 0.0
      %2650 = vmatmul.mubr.f32.gmra.mrb[0].mxu0 %v2572
      %v2651 = vpop.f32.mrb[0].mxu0
      %v2652 = vadd.f32 %v2566, %v2651
      %v2653 = vpop.f32.mrb[0].mxu0
      %2654 = vmatprep.mubr.f32.mxu0 0.0
      %2655 = vmatmul.mubr.f32.gmra.mrb[0].mxu0 %v2575
      %v2656 = vpop.f32.mrb[0].mxu0
      %v2657 = vadd.f32 %v2566, %v2656
      %v2658 = vpop.f32.mrb[0].mxu0
      %2659 = vmatprep.mubr.f32.mxu0 0.0
      %2660 = vmatmul.mubr.f32.gmra.mrb[0].mxu0 %v2578
      %v2661 = vpop.f32.mrb[0].mxu0
      %v2662 = vadd.f32 %v2566, %v2661
      %v2663 = vpop.f32.mrb[0].mxu0
      %2664 = vdwg.mxu0
      %v2665 = vpack.c.bf16 %v2652, %v2647
      %v2666 = vpack.c.bf16 %v2662, %v2657
      %2667 = vmatprep.subr.bf16.mxu0 0
      %2668 = vmatpush1.bf16.msra.mxu0 %v2665
      %2669 = vmatprep.subr.bf16.mxu0 0
      %2670 = vmatpush1.bf16.msra.mxu0 %v2666
      %2671 = vmatprep.subr.bf16.mxu0 0
      %2672 = vmatpush1.bf16.msra.mxu0 0
      %2673 = vmatprep.subr.bf16.mxu0 0
      %2674 = vmatpush1.bf16.msra.mxu0 0
      %2675 = vmatprep.subr.bf16.mxu0 0
      %2676 = vmatpush1.bf16.msra.mxu0 0
      %2677 = vmatprep.subr.bf16.mxu0 0
      %2678 = vmatpush1.bf16.msra.mxu0 0
      %2679 = vmatprep.subr.bf16.mxu0 0
      %2680 = vmatpush1.bf16.msra.mxu0 0
      %2681 = vmatprep.subr.bf16.mxu0 0
      %2682 = vmatpush1.bf16.msra.mxu0 0
      %2683 = vmatprep.subr.bf16.mxu0 0
      %2684 = vmatpush1.bf16.msra.mxu0 0
      %2685 = vmatprep.subr.bf16.mxu0 0
      %2686 = vmatpush1.bf16.msra.mxu0 0
      %2687 = vmatprep.subr.bf16.mxu0 0
      %2688 = vmatpush1.bf16.msra.mxu0 0
      %2689 = vmatprep.subr.bf16.mxu0 0
      %2690 = vmatpush1.bf16.msra.mxu0 0
      %2691 = vmatprep.subr.bf16.mxu0 0
      %2692 = vmatpush1.bf16.msra.mxu0 0
      %2693 = vmatprep.subr.bf16.mxu0 0
      %2694 = vmatpush1.bf16.msra.mxu0 0
      %2695 = vmatprep.subr.bf16.mxu0 0
      %2696 = vmatpush1.bf16.msra.mxu0 0
      %2697 = vmatprep.subr.bf16.mxu0 0
      %2698 = vmatpush1.bf16.msra.mxu0 0
      %2699 = vmatprep.mubr.bf16.mxu0 0
      %2700 = vmatmul.mubr.bf16.gmra.mrb[0].mxu0 %v1318
      %v2701 = vpop.f32.mrb[0].mxu0
      %v2702 = vadd.f32 0.0, %v2701
      %v2703 = vpop.f32.mrb[0].mxu0
      %v2704 = vpop.f32.mrb[0].mxu0
      %v2705 = vadd.f32 0.0, %v2704
      %v2706 = vpop.f32.mrb[0].mxu0
      %2707 = vdwg.mxu0
      %v2708 = vmul.f32 %v2702, %v1364
      %v2709 = vmul.f32 %v2705, %v1369
      %v2710 = vadd.f32 %v2039, %v2708
      %v2711 = vadd.f32 %v2040, %v2709
      %s2712 = scalar_lea.vmem %s13, 64
      %v2713 = vld [vmem:[%s2712] sm:$0xff]
      %v2714 = vld [vmem:[%s2712 + $0x8] sm:$0xff]
      %v2715 = vld [vmem:[%s2712 + $0x10] sm:$0xff]
      %v2716 = vld [vmem:[%s2712 + $0x18] sm:$0xff]
      %s2717 = scalar_lea.vmem %s14, 2
      %v2718 = vld [vmem:[%s2717] sm:$0x1]
      %v2720 = vlaneseq
      %v2721 = vshrl.u32 %v2720, 7
      %v2722 = vsub.s32 0, %v2721
      %v2723 = vrot.slane %v2718, %v2722
      %v2726 = vsel %vm777, %v2708, 0
      %v2729 = vsel %vm777, %v2709, 0
      %2731 = vmatprep.subr.mxu0 0.0
      %2732 = vmatpush1.msra.mxu0 %v2713
      %2733 = vmatprep.subr.mxu0 0.0
      %2734 = vmatpush1.msra.mxu0 %v2714
      %2735 = vmatprep.subr.mxu0 0.0
      %2736 = vmatpush1.msra.mxu0 %v2715
      %2737 = vmatprep.subr.mxu0 0.0
      %2738 = vmatpush1.msra.mxu0 %v2716
      %2739 = vmatprep.subr.mxu0 0.0
      %2740 = vmatpush1.msra.mxu0 0.0
      %2741 = vmatprep.subr.mxu0 0.0
      %2742 = vmatpush1.msra.mxu0 0.0
      %2743 = vmatprep.subr.mxu0 0.0
      %2744 = vmatpush1.msra.mxu0 0.0
      %2745 = vmatprep.subr.mxu0 0.0
      %2746 = vmatpush1.msra.mxu0 0.0
      %2747 = vmatprep.subr.mxu0 0.0
      %2748 = vmatpush1.msra.mxu0 0.0
      %2749 = vmatprep.subr.mxu0 0.0
      %2750 = vmatpush1.msra.mxu0 0.0
      %2751 = vmatprep.subr.mxu0 0.0
      %2752 = vmatpush1.msra.mxu0 0.0
      %2753 = vmatprep.subr.mxu0 0.0
      %2754 = vmatpush1.msra.mxu0 0.0
      %2755 = vmatprep.subr.mxu0 0.0
      %2756 = vmatpush1.msra.mxu0 0.0
      %2757 = vmatprep.subr.mxu0 0.0
      %2758 = vmatpush1.msra.mxu0 0.0
      %2759 = vmatprep.subr.mxu0 0.0
      %2760 = vmatpush1.msra.mxu0 0.0
      %2761 = vmatprep.subr.mxu0 0.0
      %2762 = vmatpush1.msra.mxu0 0.0
      %2763 = vmatprep.subr.mxu0 0.0
      %2764 = vmatpush1.msra.mxu0 0.0
      %2765 = vmatprep.subr.mxu0 0.0
      %2766 = vmatpush1.msra.mxu0 0.0
      %2767 = vmatprep.subr.mxu0 0.0
      %2768 = vmatpush1.msra.mxu0 0.0
      %2769 = vmatprep.subr.mxu0 0.0
      %2770 = vmatpush1.msra.mxu0 0.0
      %2771 = vmatprep.subr.mxu0 0.0
      %2772 = vmatpush1.msra.mxu0 0.0
      %2773 = vmatprep.subr.mxu0 0.0
      %2774 = vmatpush1.msra.mxu0 0.0
      %2775 = vmatprep.subr.mxu0 0.0
      %2776 = vmatpush1.msra.mxu0 0.0
      %2777 = vmatprep.subr.mxu0 0.0
      %2778 = vmatpush1.msra.mxu0 0.0
      %2779 = vmatprep.subr.mxu0 0.0
      %2780 = vmatpush1.msra.mxu0 0.0
      %2781 = vmatprep.subr.mxu0 0.0
      %2782 = vmatpush1.msra.mxu0 0.0
      %2783 = vmatprep.subr.mxu0 0.0
      %2784 = vmatpush1.msra.mxu0 0.0
      %2785 = vmatprep.subr.mxu0 0.0
      %2786 = vmatpush1.msra.mxu0 0.0
      %2787 = vmatprep.subr.mxu0 0.0
      %2788 = vmatpush1.msra.mxu0 0.0
      %2789 = vmatprep.subr.mxu0 0.0
      %2790 = vmatpush1.msra.mxu0 0.0
      %2791 = vmatprep.subr.mxu0 0.0
      %2792 = vmatpush1.msra.mxu0 0.0
      %2793 = vmatprep.subr.mxu0 0.0
      %2794 = vmatpush1.msra.mxu0 0.0
      %2795 = vmatprep.mubr.f32.mxu0 0.0
      %2796 = vmatmul.mubr.f32.gmra.mrb[0].mxu0 %v2726
      %v2797 = vpop.f32.mrb[0].mxu0
      %v2798 = vadd.f32 %v2723, %v2797
      %v2799 = vpop.f32.mrb[0].mxu0
      %2800 = vmatprep.mubr.f32.mxu0 0.0
      %2801 = vmatmul.mubr.f32.gmra.mrb[0].mxu0 %v2729
      %v2802 = vpop.f32.mrb[0].mxu0
      %v2803 = vadd.f32 %v2723, %v2802
      %v2804 = vpop.f32.mrb[0].mxu0
      %2805 = vdwg.mxu0
      %v2806 = vsub.f32 0.0, %v2798
      %v2807 = vsub.f32 0.0, %v2803
      %v2808 = vmul.f32 %v2806, 1.442695
      %v2809 = vpow.pop %v2808
      %v2810 = vmul.f32 %v2807, 1.442695
      %v2811 = vpow.pop %v2810
      %v2812 = vadd.f32 %v2809, 1.0
      %v2813 = vadd.f32 %v2811, 1.0
      %v2814 = vrcp.pop %v2812
      %v2815 = vrcp.pop %v2813
      %v2816 = vmul.f32 %v2798, %v2814
      %v2817 = vmul.f32 %v2803, %v2815
      %s2818 = scalar_lea.vmem %s15, 64
      %v2819 = vld [vmem:[%s2818] sm:$0xff]
      %v2820 = vld [vmem:[%s2818 + $0x8] sm:$0xff]
      %v2821 = vld [vmem:[%s2818 + $0x10] sm:$0xff]
      %v2822 = vld [vmem:[%s2818 + $0x18] sm:$0xff]
      %s2823 = scalar_lea.vmem %s16, 2
      %v2824 = vld [vmem:[%s2823] sm:$0x1]
      %v2826 = vlaneseq
      %v2827 = vshrl.u32 %v2826, 7
      %v2828 = vsub.s32 0, %v2827
      %v2829 = vrot.slane %v2824, %v2828
      %v2832 = vsel %vm777, %v2816, 0
      %v2835 = vsel %vm777, %v2817, 0
      %2837 = vmatprep.subr.mxu0 0.0
      %2838 = vmatpush1.msra.mxu0 %v2819
      %2839 = vmatprep.subr.mxu0 0.0
      %2840 = vmatpush1.msra.mxu0 %v2820
      %2841 = vmatprep.subr.mxu0 0.0
      %2842 = vmatpush1.msra.mxu0 %v2821
      %2843 = vmatprep.subr.mxu0 0.0
      %2844 = vmatpush1.msra.mxu0 %v2822
      %2845 = vmatprep.subr.mxu0 0.0
      %2846 = vmatpush1.msra.mxu0 0.0
      %2847 = vmatprep.subr.mxu0 0.0
      %2848 = vmatpush1.msra.mxu0 0.0
      %2849 = vmatprep.subr.mxu0 0.0
      %2850 = vmatpush1.msra.mxu0 0.0
      %2851 = vmatprep.subr.mxu0 0.0
      %2852 = vmatpush1.msra.mxu0 0.0
      %2853 = vmatprep.subr.mxu0 0.0
      %2854 = vmatpush1.msra.mxu0 0.0
      %2855 = vmatprep.subr.mxu0 0.0
      %2856 = vmatpush1.msra.mxu0 0.0
      %2857 = vmatprep.subr.mxu0 0.0
      %2858 = vmatpush1.msra.mxu0 0.0
      %2859 = vmatprep.subr.mxu0 0.0
      %2860 = vmatpush1.msra.mxu0 0.0
      %2861 = vmatprep.subr.mxu0 0.0
      %2862 = vmatpush1.msra.mxu0 0.0
      %2863 = vmatprep.subr.mxu0 0.0
      %2864 = vmatpush1.msra.mxu0 0.0
      %2865 = vmatprep.subr.mxu0 0.0
      %2866 = vmatpush1.msra.mxu0 0.0
      %2867 = vmatprep.subr.mxu0 0.0
      %2868 = vmatpush1.msra.mxu0 0.0
      %2869 = vmatprep.subr.mxu0 0.0
      %2870 = vmatpush1.msra.mxu0 0.0
      %2871 = vmatprep.subr.mxu0 0.0
      %2872 = vmatpush1.msra.mxu0 0.0
      %2873 = vmatprep.subr.mxu0 0.0
      %2874 = vmatpush1.msra.mxu0 0.0
      %2875 = vmatprep.subr.mxu0 0.0
      %2876 = vmatpush1.msra.mxu0 0.0
      %2877 = vmatprep.subr.mxu0 0.0
      %2878 = vmatpush1.msra.mxu0 0.0
      %2879 = vmatprep.subr.mxu0 0.0
      %2880 = vmatpush1.msra.mxu0 0.0
      %2881 = vmatprep.subr.mxu0 0.0
      %2882 = vmatpush1.msra.mxu0 0.0
      %2883 = vmatprep.subr.mxu0 0.0
      %2884 = vmatpush1.msra.mxu0 0.0
      %2885 = vmatprep.subr.mxu0 0.0
      %2886 = vmatpush1.msra.mxu0 0.0
      %2887 = vmatprep.subr.mxu0 0.0
      %2888 = vmatpush1.msra.mxu0 0.0
      %2889 = vmatprep.subr.mxu0 0.0
      %2890 = vmatpush1.msra.mxu0 0.0
      %2891 = vmatprep.subr.mxu0 0.0
      %2892 = vmatpush1.msra.mxu0 0.0
      %2893 = vmatprep.subr.mxu0 0.0
      %2894 = vmatpush1.msra.mxu0 0.0
      %2895 = vmatprep.subr.mxu0 0.0
      %2896 = vmatpush1.msra.mxu0 0.0
      %2897 = vmatprep.subr.mxu0 0.0
      %2898 = vmatpush1.msra.mxu0 0.0
      %2899 = vmatprep.subr.mxu0 0.0
      %2900 = vmatpush1.msra.mxu0 0.0
      %2901 = vmatprep.mubr.f32.mxu0 0.0
      %2902 = vmatmul.mubr.f32.gmra.mrb[0].mxu0 %v2832
      %v2903 = vpop.f32.mrb[0].mxu0
      %v2904 = vadd.f32 %v2829, %v2903
      %v2905 = vpop.f32.mrb[0].mxu0
      %2906 = vmatprep.mubr.f32.mxu0 0.0
      %2907 = vmatmul.mubr.f32.gmra.mrb[0].mxu0 %v2835
      %v2908 = vpop.f32.mrb[0].mxu0
      %v2909 = vadd.f32 %v2829, %v2908
      %v2910 = vpop.f32.mrb[0].mxu0
      %2911 = vdwg.mxu0
      %s2912 = scalar_lea.vmem %s731, 32
      %v2913 = vld [vmem:[%s2912] sm:$0xff]
      %v2914 = vld [vmem:[%s2912 + $0x8] sm:$0xff]
      %2916 = vset.pattern.permute.xlu0 0
      %2917 = vperm.xlu0 %2916, %v2904
      %v2918 = vpop.permute.xlu0 %2917
      %2921 = vset.pattern.permute.xlu0 0
      %2922 = vperm.xlu0 %2921, %v2909
      %v2923 = vpop.permute.xlu0 %2922
      %v2925 = vmul.f32 %v2918, %v2913
      %v2926 = vmul.f32 %v2923, %v2914
      %v2927 = vadd.f32 %v2256, %v2925
      %v2928 = vadd.f32 %v2257, %v2926
      %s2929 = scalar_lea.vmem %s7, 96
      %v2930 = vld [vmem:[%s2929] sm:$0xff]
      %v2931 = vld [vmem:[%s2929 + $0x8] sm:$0xff]
      %v2932 = vld [vmem:[%s2929 + $0x10] sm:$0xff]
      %v2933 = vld [vmem:[%s2929 + $0x18] sm:$0xff]
      %v2935 = vsel %vm777, %v2710, 0
      %v2938 = vsel %vm777, %v2711, 0
      %2940 = vmatprep.subr.mxu0 0.0
      %2941 = vmatpush1.msra.mxu0 %v2930
      %2942 = vmatprep.subr.mxu0 0.0
      %2943 = vmatpush1.msra.mxu0 %v2931
      %2944 = vmatprep.subr.mxu0 0.0
      %2945 = vmatpush1.msra.mxu0 %v2932
      %2946 = vmatprep.subr.mxu0 0.0
      %2947 = vmatpush1.msra.mxu0 %v2933
      %2948 = vmatprep.subr.mxu0 0.0
      %2949 = vmatpush1.msra.mxu0 0.0
      %2950 = vmatprep.subr.mxu0 0.0
      %2951 = vmatpush1.msra.mxu0 0.0
      %2952 = vmatprep.subr.mxu0 0.0
      %2953 = vmatpush1.msra.mxu0 0.0
      %2954 = vmatprep.subr.mxu0 0.0
      %2955 = vmatpush1.msra.mxu0 0.0
      %2956 = vmatprep.subr.mxu0 0.0
      %2957 = vmatpush1.msra.mxu0 0.0
      %2958 = vmatprep.subr.mxu0 0.0
      %2959 = vmatpush1.msra.mxu0 0.0
      %2960 = vmatprep.subr.mxu0 0.0
      %2961 = vmatpush1.msra.mxu0 0.0
      %2962 = vmatprep.subr.mxu0 0.0
      %2963 = vmatpush1.msra.mxu0 0.0
      %2964 = vmatprep.subr.mxu0 0.0
      %2965 = vmatpush1.msra.mxu0 0.0
      %2966 = vmatprep.subr.mxu0 0.0
      %2967 = vmatpush1.msra.mxu0 0.0
      %2968 = vmatprep.subr.mxu0 0.0
      %2969 = vmatpush1.msra.mxu0 0.0
      %2970 = vmatprep.subr.mxu0 0.0
      %2971 = vmatpush1.msra.mxu0 0.0
      %2972 = vmatprep.subr.mxu0 0.0
      %2973 = vmatpush1.msra.mxu0 0.0
      %2974 = vmatprep.subr.mxu0 0.0
      %2975 = vmatpush1.msra.mxu0 0.0
      %2976 = vmatprep.subr.mxu0 0.0
      %2977 = vmatpush1.msra.mxu0 0.0
      %2978 = vmatprep.subr.mxu0 0.0
      %2979 = vmatpush1.msra.mxu0 0.0
      %2980 = vmatprep.subr.mxu0 0.0
      %2981 = vmatpush1.msra.mxu0 0.0
      %2982 = vmatprep.subr.mxu0 0.0
      %2983 = vmatpush1.msra.mxu0 0.0
      %2984 = vmatprep.subr.mxu0 0.0
      %2985 = vmatpush1.msra.mxu0 0.0
      %2986 = vmatprep.subr.mxu0 0.0
      %2987 = vmatpush1.msra.mxu0 0.0
      %2988 = vmatprep.subr.mxu0 0.0
      %2989 = vmatpush1.msra.mxu0 0.0
      %2990 = vmatprep.subr.mxu0 0.0
      %2991 = vmatpush1.msra.mxu0 0.0
      %2992 = vmatprep.subr.mxu0 0.0
      %2993 = vmatpush1.msra.mxu0 0.0
      %2994 = vmatprep.subr.mxu0 0.0
      %2995 = vmatpush1.msra.mxu0 0.0
      %2996 = vmatprep.subr.mxu0 0.0
      %2997 = vmatpush1.msra.mxu0 0.0
      %2998 = vmatprep.subr.mxu0 0.0
      %2999 = vmatpush1.msra.mxu0 0.0
      %3000 = vmatprep.subr.mxu0 0.0
      %3001 = vmatpush1.msra.mxu0 0.0
      %3002 = vmatprep.subr.mxu0 0.0
      %3003 = vmatpush1.msra.mxu0 0.0
      %3004 = vmatprep.mubr.f32.mxu0 0.0
      %3005 = vmatmul.mubr.f32.gmra.mrb[0].mxu0 %v2935
      %v3006 = vpop.f32.mrb[0].mxu0
      %v3007 = vadd.f32 0.0, %v3006
      %v3008 = vpop.f32.mrb[0].mxu0
      %3009 = vmatprep.mubr.f32.mxu0 0.0
      %3010 = vmatmul.mubr.f32.gmra.mrb[0].mxu0 %v2938
      %v3011 = vpop.f32.mrb[0].mxu0
      %v3012 = vadd.f32 0.0, %v3011
      %v3013 = vpop.f32.mrb[0].mxu0
      %3014 = vdwg.mxu0
      %s3015 = scalar_lea.vmem %s8, 12
      %v3016 = vld [vmem:[%s3015] sm:$0xf]
      %3019 = vrot.lane.b32.xlu0 %v3007, 64
      %v3020 = vpop.permute.xlu0 %3019
      %3021 = vrot.lane.b32.xlu0 %v3012, 64
      %v3022 = vpop.permute.xlu0 %3021
      %v3025 = vpack.c.bf16 %v3012, %v3007
      %v3026 = vpack.c.bf16 %v3022, %v3020
      %v3027 = vpack.c.bf16 %v3016, %v3016
      %v3028 = vpack.c.bf16 %v2928, %v2927
      %3029 = vmatprep.subr.bf16.mxu0 0
      %3030 = vmatpush1.bf16.msra.mxu0 %v3028
      %3031 = vmatprep.subr.bf16.mxu0 0
      %3032 = vmatpush1.bf16.msra.mxu0 0
      %3033 = vmatprep.subr.bf16.mxu0 0
      %3034 = vmatpush1.bf16.msra.mxu0 0
      %3035 = vmatprep.subr.bf16.mxu0 0
      %3036 = vmatpush1.bf16.msra.mxu0 0
      %3037 = vmatprep.subr.bf16.mxu0 0
      %3038 = vmatpush1.bf16.msra.mxu0 0
      %3039 = vmatprep.subr.bf16.mxu0 0
      %3040 = vmatpush1.bf16.msra.mxu0 0
      %3041 = vmatprep.subr.bf16.mxu0 0
      %3042 = vmatpush1.bf16.msra.mxu0 0
      %3043 = vmatprep.subr.bf16.mxu0 0
      %3044 = vmatpush1.bf16.msra.mxu0 0
      %3045 = vmatprep.subr.bf16.mxu0 0
      %3046 = vmatpush1.bf16.msra.mxu0 0
      %3047 = vmatprep.subr.bf16.mxu0 0
      %3048 = vmatpush1.bf16.msra.mxu0 0
      %3049 = vmatprep.subr.bf16.mxu0 0
      %3050 = vmatpush1.bf16.msra.mxu0 0
      %3051 = vmatprep.subr.bf16.mxu0 0
      %3052 = vmatpush1.bf16.msra.mxu0 0
      %3053 = vmatprep.subr.bf16.mxu0 0
      %3054 = vmatpush1.bf16.msra.mxu0 0
      %3055 = vmatprep.subr.bf16.mxu0 0
      %3056 = vmatpush1.bf16.msra.mxu0 0
      %3057 = vmatprep.subr.bf16.mxu0 0
      %3058 = vmatpush1.bf16.msra.mxu0 0
      %3059 = vmatprep.subr.bf16.mxu0 0
      %3060 = vmatpush1.bf16.msra.mxu0 0
      %3061 = vmatprep.mubr.bf16.mxu0 0
      %3062 = vmatmul.mubr.bf16.gmra.mrb[0].mxu0 %v973
      %v3063 = vpop.f32.mrb[0].mxu0
      %v3064 = vadd.f32 0.0, %v3063
      %v3065 = vpop.f32.mrb[0].mxu0
      %v3066 = vpop.f32.mrb[0].mxu0
      %v3067 = vadd.f32 0.0, %v3066
      %v3068 = vpop.f32.mrb[0].mxu0
      %3069 = vmatprep.mubr.bf16.mxu0 0
      %3070 = vmatmul.mubr.bf16.gmra.mrb[0].mxu0 %v976
      %v3071 = vpop.f32.mrb[0].mxu0
      %v3072 = vadd.f32 0.0, %v3071
      %v3073 = vpop.f32.mrb[0].mxu0
      %v3074 = vpop.f32.mrb[0].mxu0
      %v3075 = vadd.f32 0.0, %v3074
      %v3076 = vpop.f32.mrb[0].mxu0
      %3077 = vdwg.mxu0
      %v3078 = vmul.f32 %v3064, %v3064
      %v3079 = vmul.f32 %v3067, %v3067
      %v3080 = vmul.f32 %v3072, %v3072
      %v3081 = vmul.f32 %v3075, %v3075
      %v3082 = vsel %vm1031, %v3078, 0.0
      %3083 = vadd.xlane.f32.xlu0 %v3082
      %v3084 = vpop.xlane.xlu0 %3083
      %v3085 = vsel %vm1031, %v3079, 0.0
      %3086 = vadd.xlane.f32.xlu0 %v3085
      %v3087 = vpop.xlane.xlu0 %3086
      %v3088 = vsel %vm1031, %v3080, 0.0
      %3089 = vadd.xlane.f32.xlu0 %v3088
      %v3090 = vpop.xlane.xlu0 %3089
      %v3091 = vsel %vm1031, %v3081, 0.0
      %3092 = vadd.xlane.f32.xlu0 %v3091
      %v3093 = vpop.xlane.xlu0 %3092
      %v3094 = vrsqrt.pop %v3084
      %v3095 = vmul.f32 %v3084, %v3094
      %vm3096 = vcmp.eq.f32.partialorder %v3084, inf
      %v3097 = vsel %vm3096, %v3084, %v3095
      %vm3098 = vcmp.eq.f32.partialorder %v3084, 0.0
      %v3099 = vand.u32 %v3084, 2147483648
      %v3100 = vsel %vm3098, %v3099, %v3097
      %v3101 = vrsqrt.pop %v3087
      %v3102 = vmul.f32 %v3087, %v3101
      %vm3103 = vcmp.eq.f32.partialorder %v3087, inf
      %v3104 = vsel %vm3103, %v3087, %v3102
      %vm3105 = vcmp.eq.f32.partialorder %v3087, 0.0
      %v3106 = vand.u32 %v3087, 2147483648
      %v3107 = vsel %vm3105, %v3106, %v3104
      %v3108 = vrsqrt.pop %v3090
      %v3109 = vmul.f32 %v3090, %v3108
      %vm3110 = vcmp.eq.f32.partialorder %v3090, inf
      %v3111 = vsel %vm3110, %v3090, %v3109
      %vm3112 = vcmp.eq.f32.partialorder %v3090, 0.0
      %v3113 = vand.u32 %v3090, 2147483648
      %v3114 = vsel %vm3112, %v3113, %v3111
      %v3115 = vrsqrt.pop %v3093
      %v3116 = vmul.f32 %v3093, %v3115
      %vm3117 = vcmp.eq.f32.partialorder %v3093, inf
      %v3118 = vsel %vm3117, %v3093, %v3116
      %vm3119 = vcmp.eq.f32.partialorder %v3093, 0.0
      %v3120 = vand.u32 %v3093, 2147483648
      %v3121 = vsel %vm3119, %v3120, %v3118
      %s3122 = scalar_lea.vmem %s9, 3
      %v3123 = vld [vmem:[%s3122] sm:$0x1]
      %v3125 = vlaneseq
      %v3126 = vshrl.u32 %v3125, 7
      %v3127 = vsub.s32 0, %v3126
      %v3128 = vrot.slane %v3123, %v3127
      %v3130 = vmul.f32 %v3100, %v3128
      %v3131 = vmul.f32 %v3107, %v3128
      %v3132 = vmul.f32 %v3114, %v3128
      %v3133 = vmul.f32 %v3121, %v3128
      %v3135 = vsel %vm1096, %v3027, 0
      %3137 = vmatprep.subr.bf16.mxu0 0
      %3138 = vmatpush1.bf16.msra.mxu0 %v3025
      %3139 = vmatprep.subr.bf16.mxu0 0
      %3140 = vmatpush1.bf16.msra.mxu0 %v3026
      %3141 = vmatprep.subr.bf16.mxu0 0
      %3142 = vmatpush1.bf16.msra.mxu0 %v3135
      %3143 = vmatprep.subr.bf16.mxu0 0
      %3144 = vmatpush1.bf16.msra.mxu0 0
      %3145 = vmatprep.subr.bf16.mxu0 0
      %3146 = vmatpush1.bf16.msra.mxu0 0
      %3147 = vmatprep.subr.bf16.mxu0 0
      %3148 = vmatpush1.bf16.msra.mxu0 0
      %3149 = vmatprep.subr.bf16.mxu0 0
      %3150 = vmatpush1.bf16.msra.mxu0 0
      %3151 = vmatprep.subr.bf16.mxu0 0
      %3152 = vmatpush1.bf16.msra.mxu0 0
      %3153 = vmatprep.subr.bf16.mxu0 0
      %3154 = vmatpush1.bf16.msra.mxu0 0
      %3155 = vmatprep.subr.bf16.mxu0 0
      %3156 = vmatpush1.bf16.msra.mxu0 0
      %3157 = vmatprep.subr.bf16.mxu0 0
      %3158 = vmatpush1.bf16.msra.mxu0 0
      %3159 = vmatprep.subr.bf16.mxu0 0
      %3160 = vmatpush1.bf16.msra.mxu0 0
      %3161 = vmatprep.subr.bf16.mxu0 0
      %3162 = vmatpush1.bf16.msra.mxu0 0
      %3163 = vmatprep.subr.bf16.mxu0 0
      %3164 = vmatpush1.bf16.msra.mxu0 0
      %3165 = vmatprep.subr.bf16.mxu0 0
      %3166 = vmatpush1.bf16.msra.mxu0 0
      %3167 = vmatprep.subr.bf16.mxu0 0
      %3168 = vmatpush1.bf16.msra.mxu0 0
      %3169 = vmatprep.mubr.bf16.mxu0 0
      %3170 = vmatmul.mubr.bf16.gmra.mrb[0].mxu0 %v1091
      %v3171 = vpop.f32.mrb[0].mxu0
      %v3172 = vadd.f32 %v3130, %v3171
      %v3173 = vpop.f32.mrb[0].mxu0
      %v3174 = vpop.f32.mrb[0].mxu0
      %v3175 = vadd.f32 %v3131, %v3174
      %v3176 = vpop.f32.mrb[0].mxu0
      %3177 = vmatprep.mubr.bf16.mxu0 0
      %3178 = vmatmul.mubr.bf16.gmra.mrb[0].mxu0 %v1094
      %v3179 = vpop.f32.mrb[0].mxu0
      %v3180 = vadd.f32 %v3132, %v3179
      %v3181 = vpop.f32.mrb[0].mxu0
      %v3182 = vpop.f32.mrb[0].mxu0
      %v3183 = vadd.f32 %v3133, %v3182
      %v3184 = vpop.f32.mrb[0].mxu0
      %3185 = vdwg.mxu0
      %s3186 = scalar_lea.vmem %s10, 3
      %v3187 = vld [vmem:[%s3186] sm:$0x1]
      %v3189 = vlaneseq
      %v3190 = vshrl.u32 %v3189, 7
      %v3191 = vsub.s32 0, %v3190
      %v3192 = vrot.slane %v3187, %v3191
      %v3194 = vadd.f32 %v3172, %v3192
      %v3195 = vadd.f32 %v3175, %v3192
      %v3196 = vadd.f32 %v3180, %v3192
      %v3197 = vadd.f32 %v3183, %v3192
      %v3198 = vsub.f32 0.0, %v3194
      %v3199 = vsub.f32 0.0, %v3195
      %v3200 = vsub.f32 0.0, %v3196
      %v3201 = vsub.f32 0.0, %v3197
      %v3202 = vmul.f32 %v3198, 1.442695
      %v3203 = vpow.pop %v3202
      %v3204 = vmul.f32 %v3199, 1.442695
      %v3205 = vpow.pop %v3204
      %v3206 = vmul.f32 %v3200, 1.442695
      %v3207 = vpow.pop %v3206
      %v3208 = vmul.f32 %v3201, 1.442695
      %v3209 = vpow.pop %v3208
      %v3210 = vadd.f32 %v3203, 1.0
      %v3211 = vadd.f32 %v3205, 1.0
      %v3212 = vadd.f32 %v3207, 1.0
      %v3213 = vadd.f32 %v3209, 1.0
      %v3214 = vrcp.pop %v3210
      %v3215 = vrcp.pop %v3211
      %v3216 = vrcp.pop %v3212
      %v3217 = vrcp.pop %v3213
      %v3218 = vmul.f32 %v3194, %v3214
      %v3219 = vmul.f32 %v3195, %v3215
      %v3220 = vmul.f32 %v3196, %v3216
      %v3221 = vmul.f32 %v3197, %v3217
      %s3222 = scalar_lea.vmem %s11, 192
      %v3223 = vld [vmem:[%s3222] sm:$0xff]
      %v3224 = vld [vmem:[%s3222 + $0x8] sm:$0xff]
      %v3225 = vld [vmem:[%s3222 + $0x10] sm:$0xff]
      %v3226 = vld [vmem:[%s3222 + $0x18] sm:$0xff]
      %v3227 = vld [vmem:[%s3222 + $0x20] sm:$0xff]
      %v3228 = vld [vmem:[%s3222 + $0x28] sm:$0xff]
      %v3229 = vld [vmem:[%s3222 + $0x30] sm:$0xff]
      %v3230 = vld [vmem:[%s3222 + $0x38] sm:$0xff]
      %s3231 = scalar_lea.vmem %s12, 3
      %v3232 = vld [vmem:[%s3231] sm:$0x1]
      %v3234 = vlaneseq
      %v3235 = vshrl.u32 %v3234, 7
      %v3236 = vsub.s32 0, %v3235
      %v3237 = vrot.slane %v3232, %v3236
      %v3240 = vsel %vm1199, %v3218, 0
      %v3243 = vsel %vm1199, %v3219, 0
      %v3246 = vsel %vm1199, %v3220, 0
      %v3249 = vsel %vm1199, %v3221, 0
      %3251 = vmatprep.subr.mxu0 0.0
      %3252 = vmatpush1.msra.mxu0 %v3223
      %3253 = vmatprep.subr.mxu0 0.0
      %3254 = vmatpush1.msra.mxu0 %v3224
      %3255 = vmatprep.subr.mxu0 0.0
      %3256 = vmatpush1.msra.mxu0 %v3225
      %3257 = vmatprep.subr.mxu0 0.0
      %3258 = vmatpush1.msra.mxu0 %v3226
      %3259 = vmatprep.subr.mxu0 0.0
      %3260 = vmatpush1.msra.mxu0 %v3227
      %3261 = vmatprep.subr.mxu0 0.0
      %3262 = vmatpush1.msra.mxu0 %v3228
      %3263 = vmatprep.subr.mxu0 0.0
      %3264 = vmatpush1.msra.mxu0 %v3229
      %3265 = vmatprep.subr.mxu0 0.0
      %3266 = vmatpush1.msra.mxu0 %v3230
      %3267 = vmatprep.subr.mxu0 0.0
      %3268 = vmatpush1.msra.mxu0 0.0
      %3269 = vmatprep.subr.mxu0 0.0
      %3270 = vmatpush1.msra.mxu0 0.0
      %3271 = vmatprep.subr.mxu0 0.0
      %3272 = vmatpush1.msra.mxu0 0.0
      %3273 = vmatprep.subr.mxu0 0.0
      %3274 = vmatpush1.msra.mxu0 0.0
      %3275 = vmatprep.subr.mxu0 0.0
      %3276 = vmatpush1.msra.mxu0 0.0
      %3277 = vmatprep.subr.mxu0 0.0
      %3278 = vmatpush1.msra.mxu0 0.0
      %3279 = vmatprep.subr.mxu0 0.0
      %3280 = vmatpush1.msra.mxu0 0.0
      %3281 = vmatprep.subr.mxu0 0.0
      %3282 = vmatpush1.msra.mxu0 0.0
      %3283 = vmatprep.subr.mxu0 0.0
      %3284 = vmatpush1.msra.mxu0 0.0
      %3285 = vmatprep.subr.mxu0 0.0
      %3286 = vmatpush1.msra.mxu0 0.0
      %3287 = vmatprep.subr.mxu0 0.0
      %3288 = vmatpush1.msra.mxu0 0.0
      %3289 = vmatprep.subr.mxu0 0.0
      %3290 = vmatpush1.msra.mxu0 0.0
      %3291 = vmatprep.subr.mxu0 0.0
      %3292 = vmatpush1.msra.mxu0 0.0
      %3293 = vmatprep.subr.mxu0 0.0
      %3294 = vmatpush1.msra.mxu0 0.0
      %3295 = vmatprep.subr.mxu0 0.0
      %3296 = vmatpush1.msra.mxu0 0.0
      %3297 = vmatprep.subr.mxu0 0.0
      %3298 = vmatpush1.msra.mxu0 0.0
      %3299 = vmatprep.subr.mxu0 0.0
      %3300 = vmatpush1.msra.mxu0 0.0
      %3301 = vmatprep.subr.mxu0 0.0
      %3302 = vmatpush1.msra.mxu0 0.0
      %3303 = vmatprep.subr.mxu0 0.0
      %3304 = vmatpush1.msra.mxu0 0.0
      %3305 = vmatprep.subr.mxu0 0.0
      %3306 = vmatpush1.msra.mxu0 0.0
      %3307 = vmatprep.subr.mxu0 0.0
      %3308 = vmatpush1.msra.mxu0 0.0
      %3309 = vmatprep.subr.mxu0 0.0
      %3310 = vmatpush1.msra.mxu0 0.0
      %3311 = vmatprep.subr.mxu0 0.0
      %3312 = vmatpush1.msra.mxu0 0.0
      %3313 = vmatprep.subr.mxu0 0.0
      %3314 = vmatpush1.msra.mxu0 0.0
      %3315 = vmatprep.mubr.f32.mxu0 0.0
      %3316 = vmatmul.mubr.f32.gmra.mrb[0].mxu0 %v3240
      %v3317 = vpop.f32.mrb[0].mxu0
      %v3318 = vadd.f32 %v3237, %v3317
      %v3319 = vpop.f32.mrb[0].mxu0
      %3320 = vmatprep.mubr.f32.mxu0 0.0
      %3321 = vmatmul.mubr.f32.gmra.mrb[0].mxu0 %v3243
      %v3322 = vpop.f32.mrb[0].mxu0
      %v3323 = vadd.f32 %v3237, %v3322
      %v3324 = vpop.f32.mrb[0].mxu0
      %3325 = vmatprep.mubr.f32.mxu0 0.0
      %3326 = vmatmul.mubr.f32.gmra.mrb[0].mxu0 %v3246
      %v3327 = vpop.f32.mrb[0].mxu0
      %v3328 = vadd.f32 %v3237, %v3327
      %v3329 = vpop.f32.mrb[0].mxu0
      %3330 = vmatprep.mubr.f32.mxu0 0.0
      %3331 = vmatmul.mubr.f32.gmra.mrb[0].mxu0 %v3249
      %v3332 = vpop.f32.mrb[0].mxu0
      %v3333 = vadd.f32 %v3237, %v3332
      %v3334 = vpop.f32.mrb[0].mxu0
      %3335 = vdwg.mxu0
      %v3336 = vpack.c.bf16 %v3323, %v3318
      %v3337 = vpack.c.bf16 %v3333, %v3328
      %3338 = vmatprep.subr.bf16.mxu0 0
      %3339 = vmatpush1.bf16.msra.mxu0 %v3336
      %3340 = vmatprep.subr.bf16.mxu0 0
      %3341 = vmatpush1.bf16.msra.mxu0 %v3337
      %3342 = vmatprep.subr.bf16.mxu0 0
      %3343 = vmatpush1.bf16.msra.mxu0 0
      %3344 = vmatprep.subr.bf16.mxu0 0
      %3345 = vmatpush1.bf16.msra.mxu0 0
      %3346 = vmatprep.subr.bf16.mxu0 0
      %3347 = vmatpush1.bf16.msra.mxu0 0
      %3348 = vmatprep.subr.bf16.mxu0 0
      %3349 = vmatpush1.bf16.msra.mxu0 0
      %3350 = vmatprep.subr.bf16.mxu0 0
      %3351 = vmatpush1.bf16.msra.mxu0 0
      %3352 = vmatprep.subr.bf16.mxu0 0
      %3353 = vmatpush1.bf16.msra.mxu0 0
      %3354 = vmatprep.subr.bf16.mxu0 0
      %3355 = vmatpush1.bf16.msra.mxu0 0
      %3356 = vmatprep.subr.bf16.mxu0 0
      %3357 = vmatpush1.bf16.msra.mxu0 0
      %3358 = vmatprep.subr.bf16.mxu0 0
      %3359 = vmatpush1.bf16.msra.mxu0 0
      %3360 = vmatprep.subr.bf16.mxu0 0
      %3361 = vmatpush1.bf16.msra.mxu0 0
      %3362 = vmatprep.subr.bf16.mxu0 0
      %3363 = vmatpush1.bf16.msra.mxu0 0
      %3364 = vmatprep.subr.bf16.mxu0 0
      %3365 = vmatpush1.bf16.msra.mxu0 0
      %3366 = vmatprep.subr.bf16.mxu0 0
      %3367 = vmatpush1.bf16.msra.mxu0 0
      %3368 = vmatprep.subr.bf16.mxu0 0
      %3369 = vmatpush1.bf16.msra.mxu0 0
      %3370 = vmatprep.mubr.bf16.mxu0 0
      %3371 = vmatmul.mubr.bf16.gmra.mrb[0].mxu0 %v1318
      %v3372 = vpop.f32.mrb[0].mxu0
      %v3373 = vadd.f32 0.0, %v3372
      %v3374 = vpop.f32.mrb[0].mxu0
      %v3375 = vpop.f32.mrb[0].mxu0
      %v3376 = vadd.f32 0.0, %v3375
      %v3377 = vpop.f32.mrb[0].mxu0
      %3378 = vdwg.mxu0
      %v3379 = vmul.f32 %v3373, %v1364
      %v3380 = vmul.f32 %v3376, %v1369
      %v3381 = vadd.f32 %v2710, %v3379
      %v3382 = vadd.f32 %v2711, %v3380
      %v3383 = vsel %vm777, %v3381, 0.0
      %v3384 = vsel %vm777, %v3382, 0.0
      %v3385 = vadd.f32 %v3383, %v3384
      %v3386 = vrot.slane %v3385, 4
      %v3387 = vadd.f32 %v3385, %v3386
      %v3388 = vrot.slane %v3387, 2
      %v3389 = vadd.f32 %v3387, %v3388
      %v3390 = vrot.slane %v3389, 1
      %v3391 = vadd.f32 %v3389, %v3390
      %v3392 = vrcp.pop 16.0
      %v3393 = vmul.f32 %v3391, %v3392
      %v3394 = vld [vmem:[%s17] sm:$0xff]
      %v3395 = vld [vmem:[%s17 + $0x8] sm:$0xff]
      %v3396 = vld [vmem:[%s17 + $0x10] sm:$0xff]
      %v3397 = vld [vmem:[%s17 + $0x18] sm:$0xff]
      %v3398 = vld [vmem:[%s18] sm:$0x1]
      %v3400 = vsel %vm777, %v3393, 0
      %3402 = vmatprep.subr.mxu0 0.0
      %3403 = vmatpush1.msra.mxu0 %v3394
      %3404 = vmatprep.subr.mxu0 0.0
      %3405 = vmatpush1.msra.mxu0 %v3395
      %3406 = vmatprep.subr.mxu0 0.0
      %3407 = vmatpush1.msra.mxu0 %v3396
      %3408 = vmatprep.subr.mxu0 0.0
      %3409 = vmatpush1.msra.mxu0 %v3397
      %3410 = vmatprep.subr.mxu0 0.0
      %3411 = vmatpush1.msra.mxu0 0.0
      %3412 = vmatprep.subr.mxu0 0.0
      %3413 = vmatpush1.msra.mxu0 0.0
      %3414 = vmatprep.subr.mxu0 0.0
      %3415 = vmatpush1.msra.mxu0 0.0
      %3416 = vmatprep.subr.mxu0 0.0
      %3417 = vmatpush1.msra.mxu0 0.0
      %3418 = vmatprep.subr.mxu0 0.0
      %3419 = vmatpush1.msra.mxu0 0.0
      %3420 = vmatprep.subr.mxu0 0.0
      %3421 = vmatpush1.msra.mxu0 0.0
      %3422 = vmatprep.subr.mxu0 0.0
      %3423 = vmatpush1.msra.mxu0 0.0
      %3424 = vmatprep.subr.mxu0 0.0
      %3425 = vmatpush1.msra.mxu0 0.0
      %3426 = vmatprep.subr.mxu0 0.0
      %3427 = vmatpush1.msra.mxu0 0.0
      %3428 = vmatprep.subr.mxu0 0.0
      %3429 = vmatpush1.msra.mxu0 0.0
      %3430 = vmatprep.subr.mxu0 0.0
      %3431 = vmatpush1.msra.mxu0 0.0
      %3432 = vmatprep.subr.mxu0 0.0
      %3433 = vmatpush1.msra.mxu0 0.0
      %3434 = vmatprep.subr.mxu0 0.0
      %3435 = vmatpush1.msra.mxu0 0.0
      %3436 = vmatprep.subr.mxu0 0.0
      %3437 = vmatpush1.msra.mxu0 0.0
      %3438 = vmatprep.subr.mxu0 0.0
      %3439 = vmatpush1.msra.mxu0 0.0
      %3440 = vmatprep.subr.mxu0 0.0
      %3441 = vmatpush1.msra.mxu0 0.0
      %3442 = vmatprep.subr.mxu0 0.0
      %3443 = vmatpush1.msra.mxu0 0.0
      %3444 = vmatprep.subr.mxu0 0.0
      %3445 = vmatpush1.msra.mxu0 0.0
      %3446 = vmatprep.subr.mxu0 0.0
      %3447 = vmatpush1.msra.mxu0 0.0
      %3448 = vmatprep.subr.mxu0 0.0
      %3449 = vmatpush1.msra.mxu0 0.0
      %3450 = vmatprep.subr.mxu0 0.0
      %3451 = vmatpush1.msra.mxu0 0.0
      %3452 = vmatprep.subr.mxu0 0.0
      %3453 = vmatpush1.msra.mxu0 0.0
      %3454 = vmatprep.subr.mxu0 0.0
      %3455 = vmatpush1.msra.mxu0 0.0
      %3456 = vmatprep.subr.mxu0 0.0
      %3457 = vmatpush1.msra.mxu0 0.0
      %3458 = vmatprep.subr.mxu0 0.0
      %3459 = vmatpush1.msra.mxu0 0.0
      %3460 = vmatprep.subr.mxu0 0.0
      %3461 = vmatpush1.msra.mxu0 0.0
      %3462 = vmatprep.subr.mxu0 0.0
      %3463 = vmatpush1.msra.mxu0 0.0
      %3464 = vmatprep.subr.mxu0 0.0
      %3465 = vmatpush1.msra.mxu0 0.0
      %3466 = vmatprep.mubr.f32.mxu0 0.0
      %3467 = vmatmul.mubr.f32.gmra.mrb[0].mxu0 %v3400
      %v3468 = vpop.f32.mrb[0].mxu0
      %v3469 = vadd.f32 %v3398, %v3468
      %v3470 = vpop.f32.mrb[0].mxu0
      %3471 = vdwg.mxu0
      %v3472 = vsub.f32 0.0, %v3469
      %v3473 = vmul.f32 %v3472, 1.442695
      %v3474 = vpow.pop %v3473
      %v3475 = vadd.f32 %v3474, 1.0
      %v3476 = vrcp.pop %v3475
      %v3477 = vmul.f32 %v3469, %v3476
      %v3478 = vld [vmem:[%s19] sm:$0xff]
      %v3479 = vld [vmem:[%s19 + $0x8] sm:$0xff]
      %v3480 = vld [vmem:[#allocation2] sm:$0x1]
      %v3482 = vsel %vm971, %v3477, 0
      %3484 = vmatprep.subr.mxu0 0.0
      %3485 = vmatpush1.msra.mxu0 %v3478
      %3486 = vmatprep.subr.mxu0 0.0
      %3487 = vmatpush1.msra.mxu0 %v3479
      %3488 = vmatprep.subr.mxu0 0.0
      %3489 = vmatpush1.msra.mxu0 0.0
      %3490 = vmatprep.subr.mxu0 0.0
      %3491 = vmatpush1.msra.mxu0 0.0
      %3492 = vmatprep.subr.mxu0 0.0
      %3493 = vmatpush1.msra.mxu0 0.0
      %3494 = vmatprep.subr.mxu0 0.0
      %3495 = vmatpush1.msra.mxu0 0.0
      %3496 = vmatprep.subr.mxu0 0.0
      %3497 = vmatpush1.msra.mxu0 0.0
      %3498 = vmatprep.subr.mxu0 0.0
      %3499 = vmatpush1.msra.mxu0 0.0
      %3500 = vmatprep.subr.mxu0 0.0
      %3501 = vmatpush1.msra.mxu0 0.0
      %3502 = vmatprep.subr.mxu0 0.0
      %3503 = vmatpush1.msra.mxu0 0.0
      %3504 = vmatprep.subr.mxu0 0.0
      %3505 = vmatpush1.msra.mxu0 0.0
      %3506 = vmatprep.subr.mxu0 0.0
      %3507 = vmatpush1.msra.mxu0 0.0
      %3508 = vmatprep.subr.mxu0 0.0
      %3509 = vmatpush1.msra.mxu0 0.0
      %3510 = vmatprep.subr.mxu0 0.0
      %3511 = vmatpush1.msra.mxu0 0.0
      %3512 = vmatprep.subr.mxu0 0.0
      %3513 = vmatpush1.msra.mxu0 0.0
      %3514 = vmatprep.subr.mxu0 0.0
      %3515 = vmatpush1.msra.mxu0 0.0
      %3516 = vmatprep.subr.mxu0 0.0
      %3517 = vmatpush1.msra.mxu0 0.0
      %3518 = vmatprep.subr.mxu0 0.0
      %3519 = vmatpush1.msra.mxu0 0.0
      %3520 = vmatprep.subr.mxu0 0.0
      %3521 = vmatpush1.msra.mxu0 0.0
      %3522 = vmatprep.subr.mxu0 0.0
      %3523 = vmatpush1.msra.mxu0 0.0
      %3524 = vmatprep.subr.mxu0 0.0
      %3525 = vmatpush1.msra.mxu0 0.0
      %3526 = vmatprep.subr.mxu0 0.0
      %3527 = vmatpush1.msra.mxu0 0.0
      %3528 = vmatprep.subr.mxu0 0.0
      %3529 = vmatpush1.msra.mxu0 0.0
      %3530 = vmatprep.subr.mxu0 0.0
      %3531 = vmatpush1.msra.mxu0 0.0
      %3532 = vmatprep.subr.mxu0 0.0
      %3533 = vmatpush1.msra.mxu0 0.0
      %3534 = vmatprep.subr.mxu0 0.0
      %3535 = vmatpush1.msra.mxu0 0.0
      %3536 = vmatprep.subr.mxu0 0.0
      %3537 = vmatpush1.msra.mxu0 0.0
      %3538 = vmatprep.subr.mxu0 0.0
      %3539 = vmatpush1.msra.mxu0 0.0
      %3540 = vmatprep.subr.mxu0 0.0
      %3541 = vmatpush1.msra.mxu0 0.0
      %3542 = vmatprep.subr.mxu0 0.0
      %3543 = vmatpush1.msra.mxu0 0.0
      %3544 = vmatprep.subr.mxu0 0.0
      %3545 = vmatpush1.msra.mxu0 0.0
      %3546 = vmatprep.subr.mxu0 0.0
      %3547 = vmatpush1.msra.mxu0 0.0
      %3548 = vmatprep.mubr.f32.mxu0 0.0
      %3549 = vmatmul.mubr.f32.gmra.mrb[0].mxu0 %v3482
      %v3550 = vpop.f32.mrb[0].mxu0
      %v3551 = vadd.f32 %v3480, %v3550
      %v3552 = vpop.f32.mrb[0].mxu0
      %3553 = vdwg.mxu0
      %vm3554 = vcmask 0
      %3555 = vst.msk [vmem:[%s734] sm:$0x1] %vm3554, %v3551
      %p3556 = scmp.lt.s32.totalorder %s34, 1
      %s3557 = scalar_select %p3556, %s34, 1
      %s3558 = scalar_lea.vmem %s21, %s3557
      // Predicated region
      $region105: #{tpu_custom_call.1} parent=103 // pred_check
        %p3559 = pneg %p518
      $region106: #{tpu_custom_call.1} parent=103 // pred_check_branch
        %3561 = sbr.rel (%p3559) target = $region108
      $region107: #{tpu_custom_call.1} parent=103 // pred_region
        _
      $region108: #{tpu_custom_call.1} parent=103 // pred_fallthru
        _
    $region104: #{tpu_custom_call.1} parent=5 // pred_fallthru
      _
    %p3562 = scmp.le.s32.totalorder 2, %s29
    // Predicated region
    $region109: #{tpu_custom_call.1} parent=5 // pred_check
      %p3563 = pneg %p3562
    $region110: #{tpu_custom_call.1} parent=5 // pred_check_branch
      %3565 = sbr.rel (%p3563) target = $region112
    $region111: #{tpu_custom_call.1} parent=5 // pred_region
      %s3566 = ssub.s32 %s29, 2
      // Predicated region
      $region113: #{tpu_custom_call.1} parent=111 // pred_check
        %p3567 = pneg %p524
      $region114: #{tpu_custom_call.1} parent=111 // pred_check_branch
        %3569 = sbr.rel (%p3567) target = $region116
      $region115: #{tpu_custom_call.1} parent=111 // pred_region
        %p3570 = scmp.lt.s32.totalorder %s35, 1
        %s3571 = scalar_select %p3570, %s35, 1
        %s3572 = scalar_lea.vmem %s21, %s3571
      $region116: #{tpu_custom_call.1} parent=111 // pred_fallthru
        _
    $region112: #{tpu_custom_call.1} parent=5 // pred_fallthru
      _
  $region6: #{tpu_custom_call.1} parent=0 // loop_footer
    %s33 = sadd.s32 1, %s29
  $region7: #{tpu_custom_call.1} parent=0 // loop_footer_branch
    %28 = sbr.rel target = $region3
  $region8: #{tpu_custom_call.1} parent=0 // loop_exit
    _

</llo_original>
